<compile_context>
chip_gen: v5e
topology: v5e:2x2
jax: 0.10.0
libtpu: 0.0.40
codegen_flags: <defaults>
</compile_context>

<pallas_src>
import functools
import math

import jax
import jax.numpy as jnp
from jax.experimental import pallas as pl
from jax.experimental.pallas import tpu as pltpu


_VMEM = pl.BlockSpec(memory_space=pltpu.MemorySpace.VMEM)


# ----------------------------- in-kernel cell math -----------------------------

def _lstm_cell(x, h, c, w_ih, w_hh, b, hidden):
    """One LSTM cell update.  x:(B,In) h,c:(B,H) w_ih:(In,4H) w_hh:(H,4H) b:(1,4H).
    PyTorch gate order [i, f, g, o]; b = b_ih + b_hh pre-summed."""
    gates = (jnp.dot(x, w_ih, preferred_element_type=jnp.float32)
             + jnp.dot(h, w_hh, preferred_element_type=jnp.float32)
             + b)
    # Full-width nonlinearities (EUP slot), then per-gate lane slices.
    sig = jax.nn.sigmoid(gates)
    tan = jnp.tanh(gates)
    i_g = sig[:, 0 * hidden:1 * hidden]
    f_g = sig[:, 1 * hidden:2 * hidden]
    g_g = tan[:, 2 * hidden:3 * hidden]
    o_g = sig[:, 3 * hidden:4 * hidden]
    c_new = f_g * c + i_g * g_g
    h_new = o_g * jnp.tanh(c_new)
    return h_new, c_new


# ------------------------------- fused kernels ---------------------------------

def _make_encoder_kernel(num_layers, hidden, seq_len):
    """Whole encoder (S time steps x L layers) in one kernel.  The (L,B,H) output
    refs double as the VMEM-resident running state."""
    def kernel(*refs):
        x_ref = refs[0]                                    # (S, B, F)
        wih = refs[1:1 + num_layers]                       # (In_l, 4H) each
        whh = refs[1 + num_layers:1 + 2 * num_layers]      # (H, 4H) each
        bias = refs[1 + 2 * num_layers:1 + 3 * num_layers] # (1, 4H) each
        h_ref = refs[1 + 3 * num_layers]                   # (L, B, H) out
        c_ref = refs[2 + 3 * num_layers]                   # (L, B, H) out

        # nn.LSTM default zero initial state.
        h_ref[...] = jnp.zeros_like(h_ref)
        c_ref[...] = jnp.zeros_like(c_ref)

        for t in range(seq_len):            # static unroll: all ref indices static
            inp = x_ref[t]                  # (B, F)
            for l in range(num_layers):
                h_new, c_new = _lstm_cell(inp, h_ref[l], c_ref[l],
                                          wih[l][...], whh[l][...], bias[l][...],
                                          hidden)
                h_ref[l] = h_new
                c_ref[l] = c_new
                inp = h_new
    return kernel


def _make_decoder_kernel(num_layers, hidden, pred_len):
    """Whole decoder rollout (PRED_LEN steps x L layers + FC head + teacher-forcing
    blend) in one kernel.  h/c live in VMEM scratch; per-step outputs accumulate in
    the VMEM output ref and flush to HBM once at kernel end."""
    def kernel(*refs):
        tf_ref = refs[0]                                    # (pred_len, 1, 1) in {0,1}
        inp_ref = refs[1]                                   # (B, 1)
        h0_ref = refs[2]                                    # (L, B, H)
        c0_ref = refs[3]                                    # (L, B, H)
        y_ref = refs[4]                                     # (pred_len, B, 1)
        wih = refs[5:5 + num_layers]
        whh = refs[5 + num_layers:5 + 2 * num_layers]
        bias = refs[5 + 2 * num_layers:5 + 3 * num_layers]
        fcw_ref = refs[5 + 3 * num_layers]                  # (H, OUT)
        fcb_ref = refs[6 + 3 * num_layers]                  # (1, OUT)
        out_ref = refs[7 + 3 * num_layers]                  # (pred_len, B, OUT)
        h_s = refs[8 + 3 * num_layers]                      # scratch (L, B, H)
        c_s = refs[9 + 3 * num_layers]                      # scratch (L, B, H)

        h_s[...] = h0_ref[...]
        c_s[...] = c0_ref[...]

        inp = inp_ref[...]                                  # (B, 1)
        for t in range(pred_len):                           # static unroll
            cur = inp
            for l in range(num_layers):
                h_new, c_new = _lstm_cell(cur, h_s[l], c_s[l],
                                          wih[l][...], whh[l][...], bias[l][...],
                                          hidden)
                h_s[l] = h_new
                c_s[l] = c_new
                cur = h_new
            o1 = (jnp.dot(cur, fcw_ref[...], preferred_element_type=jnp.float32)
                  + fcb_ref[...])                           # (B, OUT)
            out_ref[t] = o1
            if t < pred_len - 1:
                # Exact select: tf flag is exactly 0.0 or 1.0 (no host sync).
                tf_t = tf_ref[t]                            # (1, 1)
                inp = tf_t * y_ref[t + 1] + (1.0 - tf_t) * o1
            # last step: inp is never used again
    return kernel


# ------------------------------ pallas_call wrappers ----------------------------

def _encoder_call(x_sbf, enc_params, num_layers, hidden):
    S, B, _ = x_sbf.shape
    wih, whh, bias = enc_params
    kernel = _make_encoder_kernel(num_layers, hidden, S)
    h, c = pl.pallas_call(
        kernel,
        out_shape=(jax.ShapeDtypeStruct((num_layers, B, hidden), jnp.float32),
                   jax.ShapeDtypeStruct((num_layers, B, hidden), jnp.float32)),
        in_specs=[_VMEM] * (1 + 3 * num_layers),
        out_specs=(_VMEM, _VMEM),
    )(x_sbf, *wih, *whh, *bias)
    return h, c


def _decoder_call(tf_flags, inp0, h0, c0, y_seq, dec_params, fc_w, fc_b,
                  num_layers, hidden, pred_len, out_size):
    B = inp0.shape[0]
    wih, whh, bias = dec_params
    kernel = _make_decoder_kernel(num_layers, hidden, pred_len)
    out = pl.pallas_call(
        kernel,
        out_shape=jax.ShapeDtypeStruct((pred_len, B, out_size), jnp.float32),
        in_specs=[_VMEM] * (7 + 3 * num_layers),
        out_specs=_VMEM,
        scratch_shapes=[pltpu.VMEM((num_layers, B, hidden), jnp.float32),
                        pltpu.VMEM((num_layers, B, hidden), jnp.float32)],
    )(tf_flags, inp0, h0, c0, y_seq, *wih, *whh, *bias, fc_w, fc_b)
    return out


# --------------------------------- forward glue ---------------------------------

def _teacher_flags(tf_key, pred_len, tfr, use_y):
    """Deterministic stand-in for torch.rand(1) per decoder step.  Returns {0,1}
    floats so the in-kernel blend tf*y + (1-tf)*out is an exact select."""
    if not use_y:
        return jnp.zeros((pred_len,), jnp.float32)
    draws = jax.random.uniform(tf_key, (pred_len,))
    step = jnp.arange(pred_len)
    return ((draws < tfr) & (step < pred_len - 1)).astype(jnp.float32)


def desc_seq2seq_forward(X_encode, X_decode, y, params, tf_key, *,
                         num_layers, hidden, pred_len, out_size,
                         teacher_forcing_ratio):
    assert out_size == 1  # module writes output into final_out[:, t, :] of width 1
    B = X_encode.shape[0]

    # Encoder: final hidden/cell state (encoder outputs themselves are unused).
    x_sbf = jnp.transpose(X_encode, (1, 0, 2)).astype(jnp.float32)   # (S, B, F)
    h0, c0 = _encoder_call(x_sbf, params["enc"], num_layers, hidden)

    # Decoder initial input = sum over (seq, feature) of X_decode -> (B, 1).
    inp0 = jnp.sum(X_decode, axis=(1, 2))[:, None].astype(jnp.float32)

    use_y = y is not None
    flags = _teacher_flags(tf_key, pred_len, teacher_forcing_ratio, use_y)
    if use_y:
        y_seq = jnp.transpose(y[:, :pred_len, :], (1, 0, 2)).astype(jnp.float32)
    else:
        y_seq = jnp.zeros((pred_len, B, 1), jnp.float32)

    out = _decoder_call(flags.reshape(pred_len, 1, 1), inp0, h0, c0, y_seq,
                        params["dec"], params["fc_w"], params["fc_b"],
                        num_layers, hidden, pred_len, out_size)
    return jnp.transpose(out, (1, 0, 2))                   # (B, pred_len, out_size)


# -------------------------------- parameter init --------------------------------

def init_lstm_params(key, input_size, hidden_size, num_layers):
    """PyTorch-style U(-1/sqrt(H), 1/sqrt(H)) init.  Weights stored transposed:
       w_ih:(in,4H), w_hh:(H,4H); the two PyTorch biases pre-summed to one (1,4H)."""
    bound = 1.0 / math.sqrt(hidden_size)
    wih, whh, bias = [], [], []
    for l in range(num_layers):
        in_sz = input_size if l == 0 else hidden_size
        key, k1, k2, k3, k4 = jax.random.split(key, 5)
        wih.append(jax.random.uniform(k1, (in_sz, 4 * hidden_size), jnp.float32,
                                      -bound, bound))
        whh.append(jax.random.uniform(k2, (hidden_size, 4 * hidden_size), jnp.float32,
                                      -bound, bound))
        b_ih = jax.random.uniform(k3, (1, 4 * hidden_size), jnp.float32, -bound, bound)
        b_hh = jax.random.uniform(k4, (1, 4 * hidden_size), jnp.float32, -bound, bound)
        bias.append(b_ih + b_hh)
    return (tuple(wih), tuple(whh), tuple(bias)), key


# ---------------------------- pure-JAX reference check --------------------------

def _reference_forward(X_encode, X_decode, y, params, tf_key, *,
                       num_layers, hidden, pred_len, out_size,
                       teacher_forcing_ratio):
    wih_e, whh_e, b_e = params["enc"]
    wih_d, whh_d, b_d = params["dec"]
    B, S, _ = X_encode.shape

    def cell(x, h, c, wih, whh, b):
        g = x @ wih + h @ whh + b
        i = jax.nn.sigmoid(g[:, :hidden])
        f = jax.nn.sigmoid(g[:, hidden:2 * hidden])
        gg = jnp.tanh(g[:, 2 * hidden:3 * hidden])
        o = jax.nn.sigmoid(g[:, 3 * hidden:])
        c_new = f * c + i * gg
        return o * jnp.tanh(c_new), c_new

    h = [jnp.zeros((B, hidden), jnp.float32) for _ in range(num_layers)]
    c = [jnp.zeros((B, hidden), jnp.float32) for _ in range(num_layers)]
    for t in range(S):
        inp = X_encode[:, t, :]
        for l in range(num_layers):
            h[l], c[l] = cell(inp, h[l], c[l], wih_e[l], whh_e[l], b_e[l])
            inp = h[l]

    inp = jnp.sum(X_decode, axis=(1, 2))[:, None]
    flags = _teacher_flags(tf_key, pred_len, teacher_forcing_ratio, y is not None)
    outs = []
    for t in range(pred_len):
        cur = inp
        for l in range(num_layers):
            h[l], c[l] = cell(cur, h[l], c[l], wih_d[l], whh_d[l], b_d[l])
            cur = h[l]
        o1 = cur @ params["fc_w"] + params["fc_b"]
        outs.append(o1)
        if t < pred_len - 1:
            f = flags[t]
            inp = f * y[:, t + 1, :] + (1.0 - f) * o1
        else:
            inp = o1
    return jnp.stack(outs, axis=1)


# ------------------------------------- main -------------------------------------

if __name__ == "__main__":
    B, S, F_ENC = 2, 8, 4            # batch, encoder seq len, encoder features
    H, L = 32, 2                     # neural_size, hidden_layer (shared enc/dec)
    OUT, PRED_LEN, TFR = 1, 4, 0.5   # output_size, pred_len, teacher forcing ratio

    key = jax.random.PRNGKey(0)
    key, kxe, kxd, ky, ktf = jax.random.split(key, 5)
    X_encode = jax.random.normal(kxe, (B, S, F_ENC), jnp.float32)
    X_decode = jax.random.normal(kxd, (B, S, F_ENC), jnp.float32)
    y = jax.random.normal(ky, (B, PRED_LEN, 1), jnp.float32)

    enc_params, key = init_lstm_params(key, F_ENC, H, L)
    dec_params, key = init_lstm_params(key, 1, H, L)       # decoder input_size = 1
    key, kfw, kfb = jax.random.split(key, 3)
    fb = 1.0 / math.sqrt(H)
    fc_w = jax.random.uniform(kfw, (H, OUT), jnp.float32, -fb, fb)
    fc_b = jax.random.uniform(kfb, (1, OUT), jnp.float32, -fb, fb)
    params = {"enc": enc_params, "dec": dec_params, "fc_w": fc_w, "fc_b": fc_b}

    # Whole forward = one jitted program containing exactly two pallas_calls.
    fwd = jax.jit(functools.partial(
        desc_seq2seq_forward, num_layers=L, hidden=H, pred_len=PRED_LEN,
        out_size=OUT, teacher_forcing_ratio=TFR))

    out = jax.block_until_ready(fwd(X_encode, X_decode, y, params, ktf))
    assert out.shape == (B, PRED_LEN, 1)
    assert bool(jnp.all(jnp.isfinite(out)))

    # Correctness check against a pure-JAX reference of the same forward.
    ref = _reference_forward(X_encode, X_decode, y, params, ktf,
                             num_layers=L, hidden=H, pred_len=PRED_LEN,
                             out_size=OUT, teacher_forcing_ratio=TFR)
    assert float(jnp.max(jnp.abs(out - ref))) < 1e-3, "kernel/reference mismatch"

    print("KERNEL_OK")
</pallas_src>

<mosaic_0001>
module attributes {stable_mosaic.version = 11 : i64} {
  func.func @kernel(%arg0: memref<4x1x1xf32, #tpu.memory_space<vmem>>, %arg1: memref<2x1xf32, #tpu.memory_space<vmem>>, %arg2: memref<2x2x32xf32, #tpu.memory_space<vmem>>, %arg3: memref<2x2x32xf32, #tpu.memory_space<vmem>>, %arg4: memref<4x2x1xf32, #tpu.memory_space<vmem>>, %arg5: memref<1x128xf32, #tpu.memory_space<vmem>>, %arg6: memref<32x128xf32, #tpu.memory_space<vmem>>, %arg7: memref<32x128xf32, #tpu.memory_space<vmem>>, %arg8: memref<32x128xf32, #tpu.memory_space<vmem>>, %arg9: memref<1x128xf32, #tpu.memory_space<vmem>>, %arg10: memref<1x128xf32, #tpu.memory_space<vmem>>, %arg11: memref<32x1xf32, #tpu.memory_space<vmem>>, %arg12: memref<1x1xf32, #tpu.memory_space<vmem>>, %arg13: memref<4x2x1xf32, #tpu.memory_space<vmem>>, %arg14: memref<2x2x32xf32, #tpu.memory_space<vmem>>, %arg15: memref<2x2x32xf32, #tpu.memory_space<vmem>>) attributes {dimension_semantics = [], scalar_prefetch = 0 : i64, scratch_operands = 2 : i64, tpu.core_type = #tpu.core_type<tc>} {
    %c0 = arith.constant 0 : index
    %c0_0 = arith.constant 0 : index
    %c0_1 = arith.constant 0 : index
    %0 = vector.load %arg2[%c0, %c0_0, %c0_1] : memref<2x2x32xf32, #tpu.memory_space<vmem>>, vector<2x2x32xf32>
    %c0_2 = arith.constant 0 : index
    %c0_3 = arith.constant 0 : index
    %c0_4 = arith.constant 0 : index
    %1 = vector.load %arg14[%c0_2, %c0_3, %c0_4] : memref<2x2x32xf32, #tpu.memory_space<vmem>>, vector<2x2x32xf32>
    tpu.vector_store %arg14[%c0_2, %c0_3, %c0_4], %0 {strides = array<i32>} : memref<2x2x32xf32, #tpu.memory_space<vmem>>, vector<2x2x32xf32>,
    %c0_5 = arith.constant 0 : index
    %c0_6 = arith.constant 0 : index
    %c0_7 = arith.constant 0 : index
    %2 = vector.load %arg3[%c0_5, %c0_6, %c0_7] : memref<2x2x32xf32, #tpu.memory_space<vmem>>, vector<2x2x32xf32>
    %c0_8 = arith.constant 0 : index
    %c0_9 = arith.constant 0 : index
    %c0_10 = arith.constant 0 : index
    %3 = vector.load %arg15[%c0_8, %c0_9, %c0_10] : memref<2x2x32xf32, #tpu.memory_space<vmem>>, vector<2x2x32xf32>
    tpu.vector_store %arg15[%c0_8, %c0_9, %c0_10], %2 {strides = array<i32>} : memref<2x2x32xf32, #tpu.memory_space<vmem>>, vector<2x2x32xf32>,
    %c0_11 = arith.constant 0 : index
    %c0_12 = arith.constant 0 : index
    %4 = vector.load %arg1[%c0_11, %c0_12] : memref<2x1xf32, #tpu.memory_space<vmem>>, vector<2x1xf32>
    %c0_13 = arith.constant 0 : index
    %c0_14 = arith.constant 0 : index
    %c0_15 = arith.constant 0 : index
    %5 = vector.load %arg14[%c0_13, %c0_14, %c0_15] : memref<2x2x32xf32, #tpu.memory_space<vmem>>, vector<1x2x32xf32>
    %6 = vector.shape_cast %5 : vector<1x2x32xf32> to vector<2x32xf32>
    %c0_16 = arith.constant 0 : index
    %c0_17 = arith.constant 0 : index
    %c0_18 = arith.constant 0 : index
    %7 = vector.load %arg15[%c0_16, %c0_17, %c0_18] : memref<2x2x32xf32, #tpu.memory_space<vmem>>, vector<1x2x32xf32>
    %8 = vector.shape_cast %7 : vector<1x2x32xf32> to vector<2x32xf32>
    %c0_19 = arith.constant 0 : index
    %c0_20 = arith.constant 0 : index
    %9 = vector.load %arg5[%c0_19, %c0_20] : memref<1x128xf32, #tpu.memory_space<vmem>>, vector<1x128xf32>
    %c0_21 = arith.constant 0 : index
    %c0_22 = arith.constant 0 : index
    %10 = vector.load %arg7[%c0_21, %c0_22] : memref<32x128xf32, #tpu.memory_space<vmem>>, vector<32x128xf32>
    %c0_23 = arith.constant 0 : index
    %c0_24 = arith.constant 0 : index
    %11 = vector.load %arg9[%c0_23, %c0_24] : memref<1x128xf32, #tpu.memory_space<vmem>>, vector<1x128xf32>
    %cst = arith.constant dense<0.000000e+00> : vector<2x128xf32>
    %12 = tpu.matmul %4, %9, %cst {dimension_numbers = #tpu.dot_dimension_numbers<[1], [0], [0], [1], [0, 0, 1, 1], [], []>} : vector<2x1xf32>, vector<1x128xf32>, vector<2x128xf32> -> vector<2x128xf32>
    %cst_25 = arith.constant dense<0.000000e+00> : vector<2x128xf32>
    %13 = tpu.matmul %6, %10, %cst_25 {dimension_numbers = #tpu.dot_dimension_numbers<[1], [0], [0], [1], [0, 0, 1, 1], [], []>} : vector<2x32xf32>, vector<32x128xf32>, vector<2x128xf32> -> vector<2x128xf32>
    %14 = arith.addf %12, %13 : vector<2x128xf32>
    %15 = vector.broadcast %11 : vector<1x128xf32> to vector<2x128xf32>
    %16 = arith.addf %14, %15 : vector<2x128xf32>
    %17 = arith.negf %16 : vector<2x128xf32>
    %18 = math.exp %17 : vector<2x128xf32>
    %cst_26 = arith.constant 1.000000e+00 : f32
    %19 = vector.broadcast %cst_26 : f32 to vector<2x128xf32>
    %20 = arith.addf %19, %18 : vector<2x128xf32>
    %21 = arith.divf %19, %20 : vector<2x128xf32>
    %22 = math.tanh %16 : vector<2x128xf32>
    %23 = vector.extract_strided_slice %21 {offsets = [0, 0], sizes = [2, 32], strides = [1, 1]} : vector<2x128xf32> to vector<2x32xf32>
    %24 = vector.extract_strided_slice %21 {offsets = [0, 32], sizes = [2, 32], strides = [1, 1]} : vector<2x128xf32> to vector<2x32xf32>
    %25 = vector.extract_strided_slice %22 {offsets = [0, 64], sizes = [2, 32], strides = [1, 1]} : vector<2x128xf32> to vector<2x32xf32>
    %26 = vector.extract_strided_slice %21 {offsets = [0, 96], sizes = [2, 32], strides = [1, 1]} : vector<2x128xf32> to vector<2x32xf32>
    %27 = arith.mulf %24, %8 : vector<2x32xf32>
    %28 = arith.mulf %23, %25 : vector<2x32xf32>
    %29 = arith.addf %27, %28 : vector<2x32xf32>
    %30 = math.tanh %29 : vector<2x32xf32>
    %31 = arith.mulf %26, %30 : vector<2x32xf32>
    %c0_27 = arith.constant 0 : index
    %c0_28 = arith.constant 0 : index
    %c0_29 = arith.constant 0 : index
    %32 = vector.load %arg14[%c0_27, %c0_28, %c0_29] : memref<2x2x32xf32, #tpu.memory_space<vmem>>, vector<1x2x32xf32>
    %33 = vector.shape_cast %32 : vector<1x2x32xf32> to vector<2x32xf32>
    %34 = vector.shape_cast %31 : vector<2x32xf32> to vector<1x2x32xf32>
    tpu.vector_store %arg14[%c0_27, %c0_28, %c0_29], %34 {strides = array<i32>} : memref<2x2x32xf32, #tpu.memory_space<vmem>>, vector<1x2x32xf32>,
    %c0_30 = arith.constant 0 : index
    %c0_31 = arith.constant 0 : index
    %c0_32 = arith.constant 0 : index
    %35 = vector.load %arg15[%c0_30, %c0_31, %c0_32] : memref<2x2x32xf32, #tpu.memory_space<vmem>>, vector<1x2x32xf32>
    %36 = vector.shape_cast %35 : vector<1x2x32xf32> to vector<2x32xf32>
    %37 = vector.shape_cast %29 : vector<2x32xf32> to vector<1x2x32xf32>
    tpu.vector_store %arg15[%c0_30, %c0_31, %c0_32], %37 {strides = array<i32>} : memref<2x2x32xf32, #tpu.memory_space<vmem>>, vector<1x2x32xf32>,
    %c1 = arith.constant 1 : index
    %c0_33 = arith.constant 0 : index
    %c0_34 = arith.constant 0 : index
    %38 = vector.load %arg14[%c1, %c0_33, %c0_34] : memref<2x2x32xf32, #tpu.memory_space<vmem>>, vector<1x2x32xf32>
    %39 = vector.shape_cast %38 : vector<1x2x32xf32> to vector<2x32xf32>
    %c1_35 = arith.constant 1 : index
    %c0_36 = arith.constant 0 : index
    %c0_37 = arith.constant 0 : index
    %40 = vector.load %arg15[%c1_35, %c0_36, %c0_37] : memref<2x2x32xf32, #tpu.memory_space<vmem>>, vector<1x2x32xf32>
    %41 = vector.shape_cast %40 : vector<1x2x32xf32> to vector<2x32xf32>
    %c0_38 = arith.constant 0 : index
    %c0_39 = arith.constant 0 : index
    %42 = vector.load %arg6[%c0_38, %c0_39] : memref<32x128xf32, #tpu.memory_space<vmem>>, vector<32x128xf32>
    %c0_40 = arith.constant 0 : index
    %c0_41 = arith.constant 0 : index
    %43 = vector.load %arg8[%c0_40, %c0_41] : memref<32x128xf32, #tpu.memory_space<vmem>>, vector<32x128xf32>
    %c0_42 = arith.constant 0 : index
    %c0_43 = arith.constant 0 : index
    %44 = vector.load %arg10[%c0_42, %c0_43] : memref<1x128xf32, #tpu.memory_space<vmem>>, vector<1x128xf32>
    %cst_44 = arith.constant dense<0.000000e+00> : vector<2x128xf32>
    %45 = tpu.matmul %31, %42, %cst_44 {dimension_numbers = #tpu.dot_dimension_numbers<[1], [0], [0], [1], [0, 0, 1, 1], [], []>} : vector<2x32xf32>, vector<32x128xf32>, vector<2x128xf32> -> vector<2x128xf32>
    %cst_45 = arith.constant dense<0.000000e+00> : vector<2x128xf32>
    %46 = tpu.matmul %39, %43, %cst_45 {dimension_numbers = #tpu.dot_dimension_numbers<[1], [0], [0], [1], [0, 0, 1, 1], [], []>} : vector<2x32xf32>, vector<32x128xf32>, vector<2x128xf32> -> vector<2x128xf32>
    %47 = arith.addf %45, %46 : vector<2x128xf32>
    %48 = vector.broadcast %44 : vector<1x128xf32> to vector<2x128xf32>
    %49 = arith.addf %47, %48 : vector<2x128xf32>
    %50 = arith.negf %49 : vector<2x128xf32>
    %51 = math.exp %50 : vector<2x128xf32>
    %cst_46 = arith.constant 1.000000e+00 : f32
    %52 = vector.broadcast %cst_46 : f32 to vector<2x128xf32>
    %53 = arith.addf %52, %51 : vector<2x128xf32>
    %54 = arith.divf %52, %53 : vector<2x128xf32>
    %55 = math.tanh %49 : vector<2x128xf32>
    %56 = vector.extract_strided_slice %54 {offsets = [0, 0], sizes = [2, 32], strides = [1, 1]} : vector<2x128xf32> to vector<2x32xf32>
    %57 = vector.extract_strided_slice %54 {offsets = [0, 32], sizes = [2, 32], strides = [1, 1]} : vector<2x128xf32> to vector<2x32xf32>
    %58 = vector.extract_strided_slice %55 {offsets = [0, 64], sizes = [2, 32], strides = [1, 1]} : vector<2x128xf32> to vector<2x32xf32>
    %59 = vector.extract_strided_slice %54 {offsets = [0, 96], sizes = [2, 32], strides = [1, 1]} : vector<2x128xf32> to vector<2x32xf32>
    %60 = arith.mulf %57, %41 : vector<2x32xf32>
    %61 = arith.mulf %56, %58 : vector<2x32xf32>
    %62 = arith.addf %60, %61 : vector<2x32xf32>
    %63 = math.tanh %62 : vector<2x32xf32>
    %64 = arith.mulf %59, %63 : vector<2x32xf32>
    %c1_47 = arith.constant 1 : index
    %c0_48 = arith.constant 0 : index
    %c0_49 = arith.constant 0 : index
    %65 = vector.load %arg14[%c1_47, %c0_48, %c0_49] : memref<2x2x32xf32, #tpu.memory_space<vmem>>, vector<1x2x32xf32>
    %66 = vector.shape_cast %65 : vector<1x2x32xf32> to vector<2x32xf32>
    %67 = vector.shape_cast %64 : vector<2x32xf32> to vector<1x2x32xf32>
    tpu.vector_store %arg14[%c1_47, %c0_48, %c0_49], %67 {strides = array<i32>} : memref<2x2x32xf32, #tpu.memory_space<vmem>>, vector<1x2x32xf32>,
    %c1_50 = arith.constant 1 : index
    %c0_51 = arith.constant 0 : index
    %c0_52 = arith.constant 0 : index
    %68 = vector.load %arg15[%c1_50, %c0_51, %c0_52] : memref<2x2x32xf32, #tpu.memory_space<vmem>>, vector<1x2x32xf32>
    %69 = vector.shape_cast %68 : vector<1x2x32xf32> to vector<2x32xf32>
    %70 = vector.shape_cast %62 : vector<2x32xf32> to vector<1x2x32xf32>
    tpu.vector_store %arg15[%c1_50, %c0_51, %c0_52], %70 {strides = array<i32>} : memref<2x2x32xf32, #tpu.memory_space<vmem>>, vector<1x2x32xf32>,
    %c0_53 = arith.constant 0 : index
    %c0_54 = arith.constant 0 : index
    %71 = vector.load %arg11[%c0_53, %c0_54] : memref<32x1xf32, #tpu.memory_space<vmem>>, vector<32x1xf32>
    %cst_55 = arith.constant dense<0.000000e+00> : vector<2x1xf32>
    %72 = tpu.matmul %64, %71, %cst_55 {dimension_numbers = #tpu.dot_dimension_numbers<[1], [0], [0], [1], [0, 0, 1, 1], [], []>} : vector<2x32xf32>, vector<32x1xf32>, vector<2x1xf32> -> vector<2x1xf32>
    %c0_56 = arith.constant 0 : index
    %c0_57 = arith.constant 0 : index
    %73 = vector.load %arg12[%c0_56, %c0_57] : memref<1x1xf32, #tpu.memory_space<vmem>>, vector<1x1xf32>
    %74 = vector.broadcast %73 : vector<1x1xf32> to vector<2x1xf32>
    %75 = arith.addf %72, %74 : vector<2x1xf32>
    %c0_58 = arith.constant 0 : index
    %c0_59 = arith.constant 0 : index
    %c0_60 = arith.constant 0 : index
    %76 = vector.load %arg13[%c0_58, %c0_59, %c0_60] : memref<4x2x1xf32, #tpu.memory_space<vmem>>, vector<1x2x1xf32>
    %77 = vector.shape_cast %76 : vector<1x2x1xf32> to vector<2x1xf32>
    %78 = vector.shape_cast %75 : vector<2x1xf32> to vector<1x2x1xf32>
    tpu.vector_store %arg13[%c0_58, %c0_59, %c0_60], %78 {strides = array<i32>} : memref<4x2x1xf32, #tpu.memory_space<vmem>>, vector<1x2x1xf32>,
    %c0_61 = arith.constant 0 : index
    %c0_62 = arith.constant 0 : index
    %c0_63 = arith.constant 0 : index
    %79 = vector.load %arg0[%c0_61, %c0_62, %c0_63] : memref<4x1x1xf32, #tpu.memory_space<vmem>>, vector<1x1x1xf32>
    %80 = vector.shape_cast %79 : vector<1x1x1xf32> to vector<1x1xf32>
    %c1_64 = arith.constant 1 : index
    %c0_65 = arith.constant 0 : index
    %c0_66 = arith.constant 0 : index
    %81 = vector.load %arg4[%c1_64, %c0_65, %c0_66] : memref<4x2x1xf32, #tpu.memory_space<vmem>>, vector<1x2x1xf32>
    %82 = vector.shape_cast %81 : vector<1x2x1xf32> to vector<2x1xf32>
    %83 = vector.broadcast %80 : vector<1x1xf32> to vector<2x1xf32>
    %84 = arith.mulf %83, %82 : vector<2x1xf32>
    %cst_67 = arith.constant 1.000000e+00 : f32
    %85 = vector.broadcast %cst_67 : f32 to vector<1x1xf32>
    %86 = arith.subf %85, %80 : vector<1x1xf32>
    %87 = vector.broadcast %86 : vector<1x1xf32> to vector<2x1xf32>
    %88 = arith.mulf %87, %75 : vector<2x1xf32>
    %89 = arith.addf %84, %88 : vector<2x1xf32>
    %c0_68 = arith.constant 0 : index
    %c0_69 = arith.constant 0 : index
    %c0_70 = arith.constant 0 : index
    %90 = vector.load %arg14[%c0_68, %c0_69, %c0_70] : memref<2x2x32xf32, #tpu.memory_space<vmem>>, vector<1x2x32xf32>
    %91 = vector.shape_cast %90 : vector<1x2x32xf32> to vector<2x32xf32>
    %c0_71 = arith.constant 0 : index
    %c0_72 = arith.constant 0 : index
    %c0_73 = arith.constant 0 : index
    %92 = vector.load %arg15[%c0_71, %c0_72, %c0_73] : memref<2x2x32xf32, #tpu.memory_space<vmem>>, vector<1x2x32xf32>
    %93 = vector.shape_cast %92 : vector<1x2x32xf32> to vector<2x32xf32>
    %c0_74 = arith.constant 0 : index
    %c0_75 = arith.constant 0 : index
    %94 = vector.load %arg5[%c0_74, %c0_75] : memref<1x128xf32, #tpu.memory_space<vmem>>, vector<1x128xf32>
    %c0_76 = arith.constant 0 : index
    %c0_77 = arith.constant 0 : index
    %95 = vector.load %arg7[%c0_76, %c0_77] : memref<32x128xf32, #tpu.memory_space<vmem>>, vector<32x128xf32>
    %c0_78 = arith.constant 0 : index
    %c0_79 = arith.constant 0 : index
    %96 = vector.load %arg9[%c0_78, %c0_79] : memref<1x128xf32, #tpu.memory_space<vmem>>, vector<1x128xf32>
    %cst_80 = arith.constant dense<0.000000e+00> : vector<2x128xf32>
    %97 = tpu.matmul %89, %94, %cst_80 {dimension_numbers = #tpu.dot_dimension_numbers<[1], [0], [0], [1], [0, 0, 1, 1], [], []>} : vector<2x1xf32>, vector<1x128xf32>, vector<2x128xf32> -> vector<2x128xf32>
    %cst_81 = arith.constant dense<0.000000e+00> : vector<2x128xf32>
    %98 = tpu.matmul %91, %95, %cst_81 {dimension_numbers = #tpu.dot_dimension_numbers<[1], [0], [0], [1], [0, 0, 1, 1], [], []>} : vector<2x32xf32>, vector<32x128xf32>, vector<2x128xf32> -> vector<2x128xf32>
    %99 = arith.addf %97, %98 : vector<2x128xf32>
    %100 = vector.broadcast %96 : vector<1x128xf32> to vector<2x128xf32>
    %101 = arith.addf %99, %100 : vector<2x128xf32>
    %102 = arith.negf %101 : vector<2x128xf32>
    %103 = math.exp %102 : vector<2x128xf32>
    %cst_82 = arith.constant 1.000000e+00 : f32
    %104 = vector.broadcast %cst_82 : f32 to vector<2x128xf32>
    %105 = arith.addf %104, %103 : vector<2x128xf32>
    %106 = arith.divf %104, %105 : vector<2x128xf32>
    %107 = math.tanh %101 : vector<2x128xf32>
    %108 = vector.extract_strided_slice %106 {offsets = [0, 0], sizes = [2, 32], strides = [1, 1]} : vector<2x128xf32> to vector<2x32xf32>
    %109 = vector.extract_strided_slice %106 {offsets = [0, 32], sizes = [2, 32], strides = [1, 1]} : vector<2x128xf32> to vector<2x32xf32>
    %110 = vector.extract_strided_slice %107 {offsets = [0, 64], sizes = [2, 32], strides = [1, 1]} : vector<2x128xf32> to vector<2x32xf32>
    %111 = vector.extract_strided_slice %106 {offsets = [0, 96], sizes = [2, 32], strides = [1, 1]} : vector<2x128xf32> to vector<2x32xf32>
    %112 = arith.mulf %109, %93 : vector<2x32xf32>
    %113 = arith.mulf %108, %110 : vector<2x32xf32>
    %114 = arith.addf %112, %113 : vector<2x32xf32>
    %115 = math.tanh %114 : vector<2x32xf32>
    %116 = arith.mulf %111, %115 : vector<2x32xf32>
    %c0_83 = arith.constant 0 : index
    %c0_84 = arith.constant 0 : index
    %c0_85 = arith.constant 0 : index
    %117 = vector.load %arg14[%c0_83, %c0_84, %c0_85] : memref<2x2x32xf32, #tpu.memory_space<vmem>>, vector<1x2x32xf32>
    %118 = vector.shape_cast %117 : vector<1x2x32xf32> to vector<2x32xf32>
    %119 = vector.shape_cast %116 : vector<2x32xf32> to vector<1x2x32xf32>
    tpu.vector_store %arg14[%c0_83, %c0_84, %c0_85], %119 {strides = array<i32>} : memref<2x2x32xf32, #tpu.memory_space<vmem>>, vector<1x2x32xf32>,
    %c0_86 = arith.constant 0 : index
    %c0_87 = arith.constant 0 : index
    %c0_88 = arith.constant 0 : index
    %120 = vector.load %arg15[%c0_86, %c0_87, %c0_88] : memref<2x2x32xf32, #tpu.memory_space<vmem>>, vector<1x2x32xf32>
    %121 = vector.shape_cast %120 : vector<1x2x32xf32> to vector<2x32xf32>
    %122 = vector.shape_cast %114 : vector<2x32xf32> to vector<1x2x32xf32>
    tpu.vector_store %arg15[%c0_86, %c0_87, %c0_88], %122 {strides = array<i32>} : memref<2x2x32xf32, #tpu.memory_space<vmem>>, vector<1x2x32xf32>,
    %c1_89 = arith.constant 1 : index
    %c0_90 = arith.constant 0 : index
    %c0_91 = arith.constant 0 : index
    %123 = vector.load %arg14[%c1_89, %c0_90, %c0_91] : memref<2x2x32xf32, #tpu.memory_space<vmem>>, vector<1x2x32xf32>
    %124 = vector.shape_cast %123 : vector<1x2x32xf32> to vector<2x32xf32>
    %c1_92 = arith.constant 1 : index
    %c0_93 = arith.constant 0 : index
    %c0_94 = arith.constant 0 : index
    %125 = vector.load %arg15[%c1_92, %c0_93, %c0_94] : memref<2x2x32xf32, #tpu.memory_space<vmem>>, vector<1x2x32xf32>
    %126 = vector.shape_cast %125 : vector<1x2x32xf32> to vector<2x32xf32>
    %c0_95 = arith.constant 0 : index
    %c0_96 = arith.constant 0 : index
    %127 = vector.load %arg6[%c0_95, %c0_96] : memref<32x128xf32, #tpu.memory_space<vmem>>, vector<32x128xf32>
    %c0_97 = arith.constant 0 : index
    %c0_98 = arith.constant 0 : index
    %128 = vector.load %arg8[%c0_97, %c0_98] : memref<32x128xf32, #tpu.memory_space<vmem>>, vector<32x128xf32>
    %c0_99 = arith.constant 0 : index
    %c0_100 = arith.constant 0 : index
    %129 = vector.load %arg10[%c0_99, %c0_100] : memref<1x128xf32, #tpu.memory_space<vmem>>, vector<1x128xf32>
    %cst_101 = arith.constant dense<0.000000e+00> : vector<2x128xf32>
    %130 = tpu.matmul %116, %127, %cst_101 {dimension_numbers = #tpu.dot_dimension_numbers<[1], [0], [0], [1], [0, 0, 1, 1], [], []>} : vector<2x32xf32>, vector<32x128xf32>, vector<2x128xf32> -> vector<2x128xf32>
    %cst_102 = arith.constant dense<0.000000e+00> : vector<2x128xf32>
    %131 = tpu.matmul %124, %128, %cst_102 {dimension_numbers = #tpu.dot_dimension_numbers<[1], [0], [0], [1], [0, 0, 1, 1], [], []>} : vector<2x32xf32>, vector<32x128xf32>, vector<2x128xf32> -> vector<2x128xf32>
    %132 = arith.addf %130, %131 : vector<2x128xf32>
    %133 = vector.broadcast %129 : vector<1x128xf32> to vector<2x128xf32>
    %134 = arith.addf %132, %133 : vector<2x128xf32>
    %135 = arith.negf %134 : vector<2x128xf32>
    %136 = math.exp %135 : vector<2x128xf32>
    %cst_103 = arith.constant 1.000000e+00 : f32
    %137 = vector.broadcast %cst_103 : f32 to vector<2x128xf32>
    %138 = arith.addf %137, %136 : vector<2x128xf32>
    %139 = arith.divf %137, %138 : vector<2x128xf32>
    %140 = math.tanh %134 : vector<2x128xf32>
    %141 = vector.extract_strided_slice %139 {offsets = [0, 0], sizes = [2, 32], strides = [1, 1]} : vector<2x128xf32> to vector<2x32xf32>
    %142 = vector.extract_strided_slice %139 {offsets = [0, 32], sizes = [2, 32], strides = [1, 1]} : vector<2x128xf32> to vector<2x32xf32>
    %143 = vector.extract_strided_slice %140 {offsets = [0, 64], sizes = [2, 32], strides = [1, 1]} : vector<2x128xf32> to vector<2x32xf32>
    %144 = vector.extract_strided_slice %139 {offsets = [0, 96], sizes = [2, 32], strides = [1, 1]} : vector<2x128xf32> to vector<2x32xf32>
    %145 = arith.mulf %142, %126 : vector<2x32xf32>
    %146 = arith.mulf %141, %143 : vector<2x32xf32>
    %147 = arith.addf %145, %146 : vector<2x32xf32>
    %148 = math.tanh %147 : vector<2x32xf32>
    %149 = arith.mulf %144, %148 : vector<2x32xf32>
    %c1_104 = arith.constant 1 : index
    %c0_105 = arith.constant 0 : index
    %c0_106 = arith.constant 0 : index
    %150 = vector.load %arg14[%c1_104, %c0_105, %c0_106] : memref<2x2x32xf32, #tpu.memory_space<vmem>>, vector<1x2x32xf32>
    %151 = vector.shape_cast %150 : vector<1x2x32xf32> to vector<2x32xf32>
    %152 = vector.shape_cast %149 : vector<2x32xf32> to vector<1x2x32xf32>
    tpu.vector_store %arg14[%c1_104, %c0_105, %c0_106], %152 {strides = array<i32>} : memref<2x2x32xf32, #tpu.memory_space<vmem>>, vector<1x2x32xf32>,
    %c1_107 = arith.constant 1 : index
    %c0_108 = arith.constant 0 : index
    %c0_109 = arith.constant 0 : index
    %153 = vector.load %arg15[%c1_107, %c0_108, %c0_109] : memref<2x2x32xf32, #tpu.memory_space<vmem>>, vector<1x2x32xf32>
    %154 = vector.shape_cast %153 : vector<1x2x32xf32> to vector<2x32xf32>
    %155 = vector.shape_cast %147 : vector<2x32xf32> to vector<1x2x32xf32>
    tpu.vector_store %arg15[%c1_107, %c0_108, %c0_109], %155 {strides = array<i32>} : memref<2x2x32xf32, #tpu.memory_space<vmem>>, vector<1x2x32xf32>,
    %c0_110 = arith.constant 0 : index
    %c0_111 = arith.constant 0 : index
    %156 = vector.load %arg11[%c0_110, %c0_111] : memref<32x1xf32, #tpu.memory_space<vmem>>, vector<32x1xf32>
    %cst_112 = arith.constant dense<0.000000e+00> : vector<2x1xf32>
    %157 = tpu.matmul %149, %156, %cst_112 {dimension_numbers = #tpu.dot_dimension_numbers<[1], [0], [0], [1], [0, 0, 1, 1], [], []>} : vector<2x32xf32>, vector<32x1xf32>, vector<2x1xf32> -> vector<2x1xf32>
    %c0_113 = arith.constant 0 : index
    %c0_114 = arith.constant 0 : index
    %158 = vector.load %arg12[%c0_113, %c0_114] : memref<1x1xf32, #tpu.memory_space<vmem>>, vector<1x1xf32>
    %159 = vector.broadcast %158 : vector<1x1xf32> to vector<2x1xf32>
    %160 = arith.addf %157, %159 : vector<2x1xf32>
    %c1_115 = arith.constant 1 : index
    %c0_116 = arith.constant 0 : index
    %c0_117 = arith.constant 0 : index
    %161 = vector.load %arg13[%c1_115, %c0_116, %c0_117] : memref<4x2x1xf32, #tpu.memory_space<vmem>>, vector<1x2x1xf32>
    %162 = vector.shape_cast %161 : vector<1x2x1xf32> to vector<2x1xf32>
    %163 = vector.shape_cast %160 : vector<2x1xf32> to vector<1x2x1xf32>
    tpu.vector_store %arg13[%c1_115, %c0_116, %c0_117], %163 {strides = array<i32>} : memref<4x2x1xf32, #tpu.memory_space<vmem>>, vector<1x2x1xf32>,
    %c1_118 = arith.constant 1 : index
    %c0_119 = arith.constant 0 : index
    %c0_120 = arith.constant 0 : index
    %164 = vector.load %arg0[%c1_118, %c0_119, %c0_120] : memref<4x1x1xf32, #tpu.memory_space<vmem>>, vector<1x1x1xf32>
    %165 = vector.shape_cast %164 : vector<1x1x1xf32> to vector<1x1xf32>
    %c2 = arith.constant 2 : index
    %c0_121 = arith.constant 0 : index
    %c0_122 = arith.constant 0 : index
    %166 = vector.load %arg4[%c2, %c0_121, %c0_122] : memref<4x2x1xf32, #tpu.memory_space<vmem>>, vector<1x2x1xf32>
    %167 = vector.shape_cast %166 : vector<1x2x1xf32> to vector<2x1xf32>
    %168 = vector.broadcast %165 : vector<1x1xf32> to vector<2x1xf32>
    %169 = arith.mulf %168, %167 : vector<2x1xf32>
    %cst_123 = arith.constant 1.000000e+00 : f32
    %170 = vector.broadcast %cst_123 : f32 to vector<1x1xf32>
    %171 = arith.subf %170, %165 : vector<1x1xf32>
    %172 = vector.broadcast %171 : vector<1x1xf32> to vector<2x1xf32>
    %173 = arith.mulf %172, %160 : vector<2x1xf32>
    %174 = arith.addf %169, %173 : vector<2x1xf32>
    %c0_124 = arith.constant 0 : index
    %c0_125 = arith.constant 0 : index
    %c0_126 = arith.constant 0 : index
    %175 = vector.load %arg14[%c0_124, %c0_125, %c0_126] : memref<2x2x32xf32, #tpu.memory_space<vmem>>, vector<1x2x32xf32>
    %176 = vector.shape_cast %175 : vector<1x2x32xf32> to vector<2x32xf32>
    %c0_127 = arith.constant 0 : index
    %c0_128 = arith.constant 0 : index
    %c0_129 = arith.constant 0 : index
    %177 = vector.load %arg15[%c0_127, %c0_128, %c0_129] : memref<2x2x32xf32, #tpu.memory_space<vmem>>, vector<1x2x32xf32>
    %178 = vector.shape_cast %177 : vector<1x2x32xf32> to vector<2x32xf32>
    %c0_130 = arith.constant 0 : index
    %c0_131 = arith.constant 0 : index
    %179 = vector.load %arg5[%c0_130, %c0_131] : memref<1x128xf32, #tpu.memory_space<vmem>>, vector<1x128xf32>
    %c0_132 = arith.constant 0 : index
    %c0_133 = arith.constant 0 : index
    %180 = vector.load %arg7[%c0_132, %c0_133] : memref<32x128xf32, #tpu.memory_space<vmem>>, vector<32x128xf32>
    %c0_134 = arith.constant 0 : index
    %c0_135 = arith.constant 0 : index
    %181 = vector.load %arg9[%c0_134, %c0_135] : memref<1x128xf32, #tpu.memory_space<vmem>>, vector<1x128xf32>
    %cst_136 = arith.constant dense<0.000000e+00> : vector<2x128xf32>
    %182 = tpu.matmul %174, %179, %cst_136 {dimension_numbers = #tpu.dot_dimension_numbers<[1], [0], [0], [1], [0, 0, 1, 1], [], []>} : vector<2x1xf32>, vector<1x128xf32>, vector<2x128xf32> -> vector<2x128xf32>
    %cst_137 = arith.constant dense<0.000000e+00> : vector<2x128xf32>
    %183 = tpu.matmul %176, %180, %cst_137 {dimension_numbers = #tpu.dot_dimension_numbers<[1], [0], [0], [1], [0, 0, 1, 1], [], []>} : vector<2x32xf32>, vector<32x128xf32>, vector<2x128xf32> -> vector<2x128xf32>
    %184 = arith.addf %182, %183 : vector<2x128xf32>
    %185 = vector.broadcast %181 : vector<1x128xf32> to vector<2x128xf32>
    %186 = arith.addf %184, %185 : vector<2x128xf32>
    %187 = arith.negf %186 : vector<2x128xf32>
    %188 = math.exp %187 : vector<2x128xf32>
    %cst_138 = arith.constant 1.000000e+00 : f32
    %189 = vector.broadcast %cst_138 : f32 to vector<2x128xf32>
    %190 = arith.addf %189, %188 : vector<2x128xf32>
    %191 = arith.divf %189, %190 : vector<2x128xf32>
    %192 = math.tanh %186 : vector<2x128xf32>
    %193 = vector.extract_strided_slice %191 {offsets = [0, 0], sizes = [2, 32], strides = [1, 1]} : vector<2x128xf32> to vector<2x32xf32>
    %194 = vector.extract_strided_slice %191 {offsets = [0, 32], sizes = [2, 32], strides = [1, 1]} : vector<2x128xf32> to vector<2x32xf32>
    %195 = vector.extract_strided_slice %192 {offsets = [0, 64], sizes = [2, 32], strides = [1, 1]} : vector<2x128xf32> to vector<2x32xf32>
    %196 = vector.extract_strided_slice %191 {offsets = [0, 96], sizes = [2, 32], strides = [1, 1]} : vector<2x128xf32> to vector<2x32xf32>
    %197 = arith.mulf %194, %178 : vector<2x32xf32>
    %198 = arith.mulf %193, %195 : vector<2x32xf32>
    %199 = arith.addf %197, %198 : vector<2x32xf32>
    %200 = math.tanh %199 : vector<2x32xf32>
    %201 = arith.mulf %196, %200 : vector<2x32xf32>
    %c0_139 = arith.constant 0 : index
    %c0_140 = arith.constant 0 : index
    %c0_141 = arith.constant 0 : index
    %202 = vector.load %arg14[%c0_139, %c0_140, %c0_141] : memref<2x2x32xf32, #tpu.memory_space<vmem>>, vector<1x2x32xf32>
    %203 = vector.shape_cast %202 : vector<1x2x32xf32> to vector<2x32xf32>
    %204 = vector.shape_cast %201 : vector<2x32xf32> to vector<1x2x32xf32>
    tpu.vector_store %arg14[%c0_139, %c0_140, %c0_141], %204 {strides = array<i32>} : memref<2x2x32xf32, #tpu.memory_space<vmem>>, vector<1x2x32xf32>,
    %c0_142 = arith.constant 0 : index
    %c0_143 = arith.constant 0 : index
    %c0_144 = arith.constant 0 : index
    %205 = vector.load %arg15[%c0_142, %c0_143, %c0_144] : memref<2x2x32xf32, #tpu.memory_space<vmem>>, vector<1x2x32xf32>
    %206 = vector.shape_cast %205 : vector<1x2x32xf32> to vector<2x32xf32>
    %207 = vector.shape_cast %199 : vector<2x32xf32> to vector<1x2x32xf32>
    tpu.vector_store %arg15[%c0_142, %c0_143, %c0_144], %207 {strides = array<i32>} : memref<2x2x32xf32, #tpu.memory_space<vmem>>, vector<1x2x32xf32>,
    %c1_145 = arith.constant 1 : index
    %c0_146 = arith.constant 0 : index
    %c0_147 = arith.constant 0 : index
    %208 = vector.load %arg14[%c1_145, %c0_146, %c0_147] : memref<2x2x32xf32, #tpu.memory_space<vmem>>, vector<1x2x32xf32>
    %209 = vector.shape_cast %208 : vector<1x2x32xf32> to vector<2x32xf32>
    %c1_148 = arith.constant 1 : index
    %c0_149 = arith.constant 0 : index
    %c0_150 = arith.constant 0 : index
    %210 = vector.load %arg15[%c1_148, %c0_149, %c0_150] : memref<2x2x32xf32, #tpu.memory_space<vmem>>, vector<1x2x32xf32>
    %211 = vector.shape_cast %210 : vector<1x2x32xf32> to vector<2x32xf32>
    %c0_151 = arith.constant 0 : index
    %c0_152 = arith.constant 0 : index
    %212 = vector.load %arg6[%c0_151, %c0_152] : memref<32x128xf32, #tpu.memory_space<vmem>>, vector<32x128xf32>
    %c0_153 = arith.constant 0 : index
    %c0_154 = arith.constant 0 : index
    %213 = vector.load %arg8[%c0_153, %c0_154] : memref<32x128xf32, #tpu.memory_space<vmem>>, vector<32x128xf32>
    %c0_155 = arith.constant 0 : index
    %c0_156 = arith.constant 0 : index
    %214 = vector.load %arg10[%c0_155, %c0_156] : memref<1x128xf32, #tpu.memory_space<vmem>>, vector<1x128xf32>
    %cst_157 = arith.constant dense<0.000000e+00> : vector<2x128xf32>
    %215 = tpu.matmul %201, %212, %cst_157 {dimension_numbers = #tpu.dot_dimension_numbers<[1], [0], [0], [1], [0, 0, 1, 1], [], []>} : vector<2x32xf32>, vector<32x128xf32>, vector<2x128xf32> -> vector<2x128xf32>
    %cst_158 = arith.constant dense<0.000000e+00> : vector<2x128xf32>
    %216 = tpu.matmul %209, %213, %cst_158 {dimension_numbers = #tpu.dot_dimension_numbers<[1], [0], [0], [1], [0, 0, 1, 1], [], []>} : vector<2x32xf32>, vector<32x128xf32>, vector<2x128xf32> -> vector<2x128xf32>
    %217 = arith.addf %215, %216 : vector<2x128xf32>
    %218 = vector.broadcast %214 : vector<1x128xf32> to vector<2x128xf32>
    %219 = arith.addf %217, %218 : vector<2x128xf32>
    %220 = arith.negf %219 : vector<2x128xf32>
    %221 = math.exp %220 : vector<2x128xf32>
    %cst_159 = arith.constant 1.000000e+00 : f32
    %222 = vector.broadcast %cst_159 : f32 to vector<2x128xf32>
    %223 = arith.addf %222, %221 : vector<2x128xf32>
    %224 = arith.divf %222, %223 : vector<2x128xf32>
    %225 = math.tanh %219 : vector<2x128xf32>
    %226 = vector.extract_strided_slice %224 {offsets = [0, 0], sizes = [2, 32], strides = [1, 1]} : vector<2x128xf32> to vector<2x32xf32>
    %227 = vector.extract_strided_slice %224 {offsets = [0, 32], sizes = [2, 32], strides = [1, 1]} : vector<2x128xf32> to vector<2x32xf32>
    %228 = vector.extract_strided_slice %225 {offsets = [0, 64], sizes = [2, 32], strides = [1, 1]} : vector<2x128xf32> to vector<2x32xf32>
    %229 = vector.extract_strided_slice %224 {offsets = [0, 96], sizes = [2, 32], strides = [1, 1]} : vector<2x128xf32> to vector<2x32xf32>
    %230 = arith.mulf %227, %211 : vector<2x32xf32>
    %231 = arith.mulf %226, %228 : vector<2x32xf32>
    %232 = arith.addf %230, %231 : vector<2x32xf32>
    %233 = math.tanh %232 : vector<2x32xf32>
    %234 = arith.mulf %229, %233 : vector<2x32xf32>
    %c1_160 = arith.constant 1 : index
    %c0_161 = arith.constant 0 : index
    %c0_162 = arith.constant 0 : index
    %235 = vector.load %arg14[%c1_160, %c0_161, %c0_162] : memref<2x2x32xf32, #tpu.memory_space<vmem>>, vector<1x2x32xf32>
    %236 = vector.shape_cast %235 : vector<1x2x32xf32> to vector<2x32xf32>
    %237 = vector.shape_cast %234 : vector<2x32xf32> to vector<1x2x32xf32>
    tpu.vector_store %arg14[%c1_160, %c0_161, %c0_162], %237 {strides = array<i32>} : memref<2x2x32xf32, #tpu.memory_space<vmem>>, vector<1x2x32xf32>,
    %c1_163 = arith.constant 1 : index
    %c0_164 = arith.constant 0 : index
    %c0_165 = arith.constant 0 : index
    %238 = vector.load %arg15[%c1_163, %c0_164, %c0_165] : memref<2x2x32xf32, #tpu.memory_space<vmem>>, vector<1x2x32xf32>
    %239 = vector.shape_cast %238 : vector<1x2x32xf32> to vector<2x32xf32>
    %240 = vector.shape_cast %232 : vector<2x32xf32> to vector<1x2x32xf32>
    tpu.vector_store %arg15[%c1_163, %c0_164, %c0_165], %240 {strides = array<i32>} : memref<2x2x32xf32, #tpu.memory_space<vmem>>, vector<1x2x32xf32>,
    %c0_166 = arith.constant 0 : index
    %c0_167 = arith.constant 0 : index
    %241 = vector.load %arg11[%c0_166, %c0_167] : memref<32x1xf32, #tpu.memory_space<vmem>>, vector<32x1xf32>
    %cst_168 = arith.constant dense<0.000000e+00> : vector<2x1xf32>
    %242 = tpu.matmul %234, %241, %cst_168 {dimension_numbers = #tpu.dot_dimension_numbers<[1], [0], [0], [1], [0, 0, 1, 1], [], []>} : vector<2x32xf32>, vector<32x1xf32>, vector<2x1xf32> -> vector<2x1xf32>
    %c0_169 = arith.constant 0 : index
    %c0_170 = arith.constant 0 : index
    %243 = vector.load %arg12[%c0_169, %c0_170] : memref<1x1xf32, #tpu.memory_space<vmem>>, vector<1x1xf32>
    %244 = vector.broadcast %243 : vector<1x1xf32> to vector<2x1xf32>
    %245 = arith.addf %242, %244 : vector<2x1xf32>
    %c2_171 = arith.constant 2 : index
    %c0_172 = arith.constant 0 : index
    %c0_173 = arith.constant 0 : index
    %246 = vector.load %arg13[%c2_171, %c0_172, %c0_173] : memref<4x2x1xf32, #tpu.memory_space<vmem>>, vector<1x2x1xf32>
    %247 = vector.shape_cast %246 : vector<1x2x1xf32> to vector<2x1xf32>
    %248 = vector.shape_cast %245 : vector<2x1xf32> to vector<1x2x1xf32>
    tpu.vector_store %arg13[%c2_171, %c0_172, %c0_173], %248 {strides = array<i32>} : memref<4x2x1xf32, #tpu.memory_space<vmem>>, vector<1x2x1xf32>,
    %c2_174 = arith.constant 2 : index
    %c0_175 = arith.constant 0 : index
    %c0_176 = arith.constant 0 : index
    %249 = vector.load %arg0[%c2_174, %c0_175, %c0_176] : memref<4x1x1xf32, #tpu.memory_space<vmem>>, vector<1x1x1xf32>
    %250 = vector.shape_cast %249 : vector<1x1x1xf32> to vector<1x1xf32>
    %c3 = arith.constant 3 : index
    %c0_177 = arith.constant 0 : index
    %c0_178 = arith.constant 0 : index
    %251 = vector.load %arg4[%c3, %c0_177, %c0_178] : memref<4x2x1xf32, #tpu.memory_space<vmem>>, vector<1x2x1xf32>
    %252 = vector.shape_cast %251 : vector<1x2x1xf32> to vector<2x1xf32>
    %253 = vector.broadcast %250 : vector<1x1xf32> to vector<2x1xf32>
    %254 = arith.mulf %253, %252 : vector<2x1xf32>
    %cst_179 = arith.constant 1.000000e+00 : f32
    %255 = vector.broadcast %cst_179 : f32 to vector<1x1xf32>
    %256 = arith.subf %255, %250 : vector<1x1xf32>
    %257 = vector.broadcast %256 : vector<1x1xf32> to vector<2x1xf32>
    %258 = arith.mulf %257, %245 : vector<2x1xf32>
    %259 = arith.addf %254, %258 : vector<2x1xf32>
    %c0_180 = arith.constant 0 : index
    %c0_181 = arith.constant 0 : index
    %c0_182 = arith.constant 0 : index
    %260 = vector.load %arg14[%c0_180, %c0_181, %c0_182] : memref<2x2x32xf32, #tpu.memory_space<vmem>>, vector<1x2x32xf32>
    %261 = vector.shape_cast %260 : vector<1x2x32xf32> to vector<2x32xf32>
    %c0_183 = arith.constant 0 : index
    %c0_184 = arith.constant 0 : index
    %c0_185 = arith.constant 0 : index
    %262 = vector.load %arg15[%c0_183, %c0_184, %c0_185] : memref<2x2x32xf32, #tpu.memory_space<vmem>>, vector<1x2x32xf32>
    %263 = vector.shape_cast %262 : vector<1x2x32xf32> to vector<2x32xf32>
    %c0_186 = arith.constant 0 : index
    %c0_187 = arith.constant 0 : index
    %264 = vector.load %arg5[%c0_186, %c0_187] : memref<1x128xf32, #tpu.memory_space<vmem>>, vector<1x128xf32>
    %c0_188 = arith.constant 0 : index
    %c0_189 = arith.constant 0 : index
    %265 = vector.load %arg7[%c0_188, %c0_189] : memref<32x128xf32, #tpu.memory_space<vmem>>, vector<32x128xf32>
    %c0_190 = arith.constant 0 : index
    %c0_191 = arith.constant 0 : index
    %266 = vector.load %arg9[%c0_190, %c0_191] : memref<1x128xf32, #tpu.memory_space<vmem>>, vector<1x128xf32>
    %cst_192 = arith.constant dense<0.000000e+00> : vector<2x128xf32>
    %267 = tpu.matmul %259, %264, %cst_192 {dimension_numbers = #tpu.dot_dimension_numbers<[1], [0], [0], [1], [0, 0, 1, 1], [], []>} : vector<2x1xf32>, vector<1x128xf32>, vector<2x128xf32> -> vector<2x128xf32>
    %cst_193 = arith.constant dense<0.000000e+00> : vector<2x128xf32>
    %268 = tpu.matmul %261, %265, %cst_193 {dimension_numbers = #tpu.dot_dimension_numbers<[1], [0], [0], [1], [0, 0, 1, 1], [], []>} : vector<2x32xf32>, vector<32x128xf32>, vector<2x128xf32> -> vector<2x128xf32>
    %269 = arith.addf %267, %268 : vector<2x128xf32>
    %270 = vector.broadcast %266 : vector<1x128xf32> to vector<2x128xf32>
    %271 = arith.addf %269, %270 : vector<2x128xf32>
    %272 = arith.negf %271 : vector<2x128xf32>
    %273 = math.exp %272 : vector<2x128xf32>
    %cst_194 = arith.constant 1.000000e+00 : f32
    %274 = vector.broadcast %cst_194 : f32 to vector<2x128xf32>
    %275 = arith.addf %274, %273 : vector<2x128xf32>
    %276 = arith.divf %274, %275 : vector<2x128xf32>
    %277 = math.tanh %271 : vector<2x128xf32>
    %278 = vector.extract_strided_slice %276 {offsets = [0, 0], sizes = [2, 32], strides = [1, 1]} : vector<2x128xf32> to vector<2x32xf32>
    %279 = vector.extract_strided_slice %276 {offsets = [0, 32], sizes = [2, 32], strides = [1, 1]} : vector<2x128xf32> to vector<2x32xf32>
    %280 = vector.extract_strided_slice %277 {offsets = [0, 64], sizes = [2, 32], strides = [1, 1]} : vector<2x128xf32> to vector<2x32xf32>
    %281 = vector.extract_strided_slice %276 {offsets = [0, 96], sizes = [2, 32], strides = [1, 1]} : vector<2x128xf32> to vector<2x32xf32>
    %282 = arith.mulf %279, %263 : vector<2x32xf32>
    %283 = arith.mulf %278, %280 : vector<2x32xf32>
    %284 = arith.addf %282, %283 : vector<2x32xf32>
    %285 = math.tanh %284 : vector<2x32xf32>
    %286 = arith.mulf %281, %285 : vector<2x32xf32>
    %c0_195 = arith.constant 0 : index
    %c0_196 = arith.constant 0 : index
    %c0_197 = arith.constant 0 : index
    %287 = vector.load %arg14[%c0_195, %c0_196, %c0_197] : memref<2x2x32xf32, #tpu.memory_space<vmem>>, vector<1x2x32xf32>
    %288 = vector.shape_cast %287 : vector<1x2x32xf32> to vector<2x32xf32>
    %289 = vector.shape_cast %286 : vector<2x32xf32> to vector<1x2x32xf32>
    tpu.vector_store %arg14[%c0_195, %c0_196, %c0_197], %289 {strides = array<i32>} : memref<2x2x32xf32, #tpu.memory_space<vmem>>, vector<1x2x32xf32>,
    %c0_198 = arith.constant 0 : index
    %c0_199 = arith.constant 0 : index
    %c0_200 = arith.constant 0 : index
    %290 = vector.load %arg15[%c0_198, %c0_199, %c0_200] : memref<2x2x32xf32, #tpu.memory_space<vmem>>, vector<1x2x32xf32>
    %291 = vector.shape_cast %290 : vector<1x2x32xf32> to vector<2x32xf32>
    %292 = vector.shape_cast %284 : vector<2x32xf32> to vector<1x2x32xf32>
    tpu.vector_store %arg15[%c0_198, %c0_199, %c0_200], %292 {strides = array<i32>} : memref<2x2x32xf32, #tpu.memory_space<vmem>>, vector<1x2x32xf32>,
    %c1_201 = arith.constant 1 : index
    %c0_202 = arith.constant 0 : index
    %c0_203 = arith.constant 0 : index
    %293 = vector.load %arg14[%c1_201, %c0_202, %c0_203] : memref<2x2x32xf32, #tpu.memory_space<vmem>>, vector<1x2x32xf32>
    %294 = vector.shape_cast %293 : vector<1x2x32xf32> to vector<2x32xf32>
    %c1_204 = arith.constant 1 : index
    %c0_205 = arith.constant 0 : index
    %c0_206 = arith.constant 0 : index
    %295 = vector.load %arg15[%c1_204, %c0_205, %c0_206] : memref<2x2x32xf32, #tpu.memory_space<vmem>>, vector<1x2x32xf32>
    %296 = vector.shape_cast %295 : vector<1x2x32xf32> to vector<2x32xf32>
    %c0_207 = arith.constant 0 : index
    %c0_208 = arith.constant 0 : index
    %297 = vector.load %arg6[%c0_207, %c0_208] : memref<32x128xf32, #tpu.memory_space<vmem>>, vector<32x128xf32>
    %c0_209 = arith.constant 0 : index
    %c0_210 = arith.constant 0 : index
    %298 = vector.load %arg8[%c0_209, %c0_210] : memref<32x128xf32, #tpu.memory_space<vmem>>, vector<32x128xf32>
    %c0_211 = arith.constant 0 : index
    %c0_212 = arith.constant 0 : index
    %299 = vector.load %arg10[%c0_211, %c0_212] : memref<1x128xf32, #tpu.memory_space<vmem>>, vector<1x128xf32>
    %cst_213 = arith.constant dense<0.000000e+00> : vector<2x128xf32>
    %300 = tpu.matmul %286, %297, %cst_213 {dimension_numbers = #tpu.dot_dimension_numbers<[1], [0], [0], [1], [0, 0, 1, 1], [], []>} : vector<2x32xf32>, vector<32x128xf32>, vector<2x128xf32> -> vector<2x128xf32>
    %cst_214 = arith.constant dense<0.000000e+00> : vector<2x128xf32>
    %301 = tpu.matmul %294, %298, %cst_214 {dimension_numbers = #tpu.dot_dimension_numbers<[1], [0], [0], [1], [0, 0, 1, 1], [], []>} : vector<2x32xf32>, vector<32x128xf32>, vector<2x128xf32> -> vector<2x128xf32>
    %302 = arith.addf %300, %301 : vector<2x128xf32>
    %303 = vector.broadcast %299 : vector<1x128xf32> to vector<2x128xf32>
    %304 = arith.addf %302, %303 : vector<2x128xf32>
    %305 = arith.negf %304 : vector<2x128xf32>
    %306 = math.exp %305 : vector<2x128xf32>
    %cst_215 = arith.constant 1.000000e+00 : f32
    %307 = vector.broadcast %cst_215 : f32 to vector<2x128xf32>
    %308 = arith.addf %307, %306 : vector<2x128xf32>
    %309 = arith.divf %307, %308 : vector<2x128xf32>
    %310 = math.tanh %304 : vector<2x128xf32>
    %311 = vector.extract_strided_slice %309 {offsets = [0, 0], sizes = [2, 32], strides = [1, 1]} : vector<2x128xf32> to vector<2x32xf32>
    %312 = vector.extract_strided_slice %309 {offsets = [0, 32], sizes = [2, 32], strides = [1, 1]} : vector<2x128xf32> to vector<2x32xf32>
    %313 = vector.extract_strided_slice %310 {offsets = [0, 64], sizes = [2, 32], strides = [1, 1]} : vector<2x128xf32> to vector<2x32xf32>
    %314 = vector.extract_strided_slice %309 {offsets = [0, 96], sizes = [2, 32], strides = [1, 1]} : vector<2x128xf32> to vector<2x32xf32>
    %315 = arith.mulf %312, %296 : vector<2x32xf32>
    %316 = arith.mulf %311, %313 : vector<2x32xf32>
    %317 = arith.addf %315, %316 : vector<2x32xf32>
    %318 = math.tanh %317 : vector<2x32xf32>
    %319 = arith.mulf %314, %318 : vector<2x32xf32>
    %c1_216 = arith.constant 1 : index
    %c0_217 = arith.constant 0 : index
    %c0_218 = arith.constant 0 : index
    %320 = vector.load %arg14[%c1_216, %c0_217, %c0_218] : memref<2x2x32xf32, #tpu.memory_space<vmem>>, vector<1x2x32xf32>
    %321 = vector.shape_cast %320 : vector<1x2x32xf32> to vector<2x32xf32>
    %322 = vector.shape_cast %319 : vector<2x32xf32> to vector<1x2x32xf32>
    tpu.vector_store %arg14[%c1_216, %c0_217, %c0_218], %322 {strides = array<i32>} : memref<2x2x32xf32, #tpu.memory_space<vmem>>, vector<1x2x32xf32>,
    %c1_219 = arith.constant 1 : index
    %c0_220 = arith.constant 0 : index
    %c0_221 = arith.constant 0 : index
    %323 = vector.load %arg15[%c1_219, %c0_220, %c0_221] : memref<2x2x32xf32, #tpu.memory_space<vmem>>, vector<1x2x32xf32>
    %324 = vector.shape_cast %323 : vector<1x2x32xf32> to vector<2x32xf32>
    %325 = vector.shape_cast %317 : vector<2x32xf32> to vector<1x2x32xf32>
    tpu.vector_store %arg15[%c1_219, %c0_220, %c0_221], %325 {strides = array<i32>} : memref<2x2x32xf32, #tpu.memory_space<vmem>>, vector<1x2x32xf32>,
    %c0_222 = arith.constant 0 : index
    %c0_223 = arith.constant 0 : index
    %326 = vector.load %arg11[%c0_222, %c0_223] : memref<32x1xf32, #tpu.memory_space<vmem>>, vector<32x1xf32>
    %cst_224 = arith.constant dense<0.000000e+00> : vector<2x1xf32>
    %327 = tpu.matmul %319, %326, %cst_224 {dimension_numbers = #tpu.dot_dimension_numbers<[1], [0], [0], [1], [0, 0, 1, 1], [], []>} : vector<2x32xf32>, vector<32x1xf32>, vector<2x1xf32> -> vector<2x1xf32>
    %c0_225 = arith.constant 0 : index
    %c0_226 = arith.constant 0 : index
    %328 = vector.load %arg12[%c0_225, %c0_226] : memref<1x1xf32, #tpu.memory_space<vmem>>, vector<1x1xf32>
    %329 = vector.broadcast %328 : vector<1x1xf32> to vector<2x1xf32>
    %330 = arith.addf %327, %329 : vector<2x1xf32>
    %c3_227 = arith.constant 3 : index
    %c0_228 = arith.constant 0 : index
    %c0_229 = arith.constant 0 : index
    %331 = vector.load %arg13[%c3_227, %c0_228, %c0_229] : memref<4x2x1xf32, #tpu.memory_space<vmem>>, vector<1x2x1xf32>
    %332 = vector.shape_cast %331 : vector<1x2x1xf32> to vector<2x1xf32>
    %333 = vector.shape_cast %330 : vector<2x1xf32> to vector<1x2x1xf32>
    tpu.vector_store %arg13[%c3_227, %c0_228, %c0_229], %333 {strides = array<i32>} : memref<4x2x1xf32, #tpu.memory_space<vmem>>, vector<1x2x1xf32>,
    return
  }
}

module attributes {stable_mosaic.version = 11 : i64} {
  func.func @kernel(%arg0: memref<8x2x4xf32, #tpu.memory_space<vmem>>, %arg1: memref<4x128xf32, #tpu.memory_space<vmem>>, %arg2: memref<32x128xf32, #tpu.memory_space<vmem>>, %arg3: memref<32x128xf32, #tpu.memory_space<vmem>>, %arg4: memref<32x128xf32, #tpu.memory_space<vmem>>, %arg5: memref<1x128xf32, #tpu.memory_space<vmem>>, %arg6: memref<1x128xf32, #tpu.memory_space<vmem>>, %arg7: memref<2x2x32xf32, #tpu.memory_space<vmem>>, %arg8: memref<2x2x32xf32, #tpu.memory_space<vmem>>) attributes {dimension_semantics = [], scalar_prefetch = 0 : i64, scratch_operands = 0 : i64, tpu.core_type = #tpu.core_type<tc>} {
    %cst = arith.constant 0.000000e+00 : f32
    %0 = vector.broadcast %cst : f32 to vector<2x2x32xf32>
    %c0 = arith.constant 0 : index
    %c0_0 = arith.constant 0 : index
    %c0_1 = arith.constant 0 : index
    %1 = vector.load %arg7[%c0, %c0_0, %c0_1] : memref<2x2x32xf32, #tpu.memory_space<vmem>>, vector<2x2x32xf32>
    tpu.vector_store %arg7[%c0, %c0_0, %c0_1], %0 {strides = array<i32>} : memref<2x2x32xf32, #tpu.memory_space<vmem>>, vector<2x2x32xf32>,
    %cst_2 = arith.constant 0.000000e+00 : f32
    %2 = vector.broadcast %cst_2 : f32 to vector<2x2x32xf32>
    %c0_3 = arith.constant 0 : index
    %c0_4 = arith.constant 0 : index
    %c0_5 = arith.constant 0 : index
    %3 = vector.load %arg8[%c0_3, %c0_4, %c0_5] : memref<2x2x32xf32, #tpu.memory_space<vmem>>, vector<2x2x32xf32>
    tpu.vector_store %arg8[%c0_3, %c0_4, %c0_5], %2 {strides = array<i32>} : memref<2x2x32xf32, #tpu.memory_space<vmem>>, vector<2x2x32xf32>,
    %c0_6 = arith.constant 0 : index
    %c0_7 = arith.constant 0 : index
    %c0_8 = arith.constant 0 : index
    %4 = vector.load %arg0[%c0_6, %c0_7, %c0_8] : memref<8x2x4xf32, #tpu.memory_space<vmem>>, vector<1x2x4xf32>
    %5 = vector.shape_cast %4 : vector<1x2x4xf32> to vector<2x4xf32>
    %c0_9 = arith.constant 0 : index
    %c0_10 = arith.constant 0 : index
    %c0_11 = arith.constant 0 : index
    %6 = vector.load %arg7[%c0_9, %c0_10, %c0_11] : memref<2x2x32xf32, #tpu.memory_space<vmem>>, vector<1x2x32xf32>
    %7 = vector.shape_cast %6 : vector<1x2x32xf32> to vector<2x32xf32>
    %c0_12 = arith.constant 0 : index
    %c0_13 = arith.constant 0 : index
    %c0_14 = arith.constant 0 : index
    %8 = vector.load %arg8[%c0_12, %c0_13, %c0_14] : memref<2x2x32xf32, #tpu.memory_space<vmem>>, vector<1x2x32xf32>
    %9 = vector.shape_cast %8 : vector<1x2x32xf32> to vector<2x32xf32>
    %c0_15 = arith.constant 0 : index
    %c0_16 = arith.constant 0 : index
    %10 = vector.load %arg1[%c0_15, %c0_16] : memref<4x128xf32, #tpu.memory_space<vmem>>, vector<4x128xf32>
    %c0_17 = arith.constant 0 : index
    %c0_18 = arith.constant 0 : index
    %11 = vector.load %arg3[%c0_17, %c0_18] : memref<32x128xf32, #tpu.memory_space<vmem>>, vector<32x128xf32>
    %c0_19 = arith.constant 0 : index
    %c0_20 = arith.constant 0 : index
    %12 = vector.load %arg5[%c0_19, %c0_20] : memref<1x128xf32, #tpu.memory_space<vmem>>, vector<1x128xf32>
    %cst_21 = arith.constant dense<0.000000e+00> : vector<2x128xf32>
    %13 = tpu.matmul %5, %10, %cst_21 {dimension_numbers = #tpu.dot_dimension_numbers<[1], [0], [0], [1], [0, 0, 1, 1], [], []>} : vector<2x4xf32>, vector<4x128xf32>, vector<2x128xf32> -> vector<2x128xf32>
    %cst_22 = arith.constant dense<0.000000e+00> : vector<2x128xf32>
    %14 = tpu.matmul %7, %11, %cst_22 {dimension_numbers = #tpu.dot_dimension_numbers<[1], [0], [0], [1], [0, 0, 1, 1], [], []>} : vector<2x32xf32>, vector<32x128xf32>, vector<2x128xf32> -> vector<2x128xf32>
    %15 = arith.addf %13, %14 : vector<2x128xf32>
    %16 = vector.broadcast %12 : vector<1x128xf32> to vector<2x128xf32>
    %17 = arith.addf %15, %16 : vector<2x128xf32>
    %18 = arith.negf %17 : vector<2x128xf32>
    %19 = math.exp %18 : vector<2x128xf32>
    %cst_23 = arith.constant 1.000000e+00 : f32
    %20 = vector.broadcast %cst_23 : f32 to vector<2x128xf32>
    %21 = arith.addf %20, %19 : vector<2x128xf32>
    %22 = arith.divf %20, %21 : vector<2x128xf32>
    %23 = math.tanh %17 : vector<2x128xf32>
    %24 = vector.extract_strided_slice %22 {offsets = [0, 0], sizes = [2, 32], strides = [1, 1]} : vector<2x128xf32> to vector<2x32xf32>
    %25 = vector.extract_strided_slice %22 {offsets = [0, 32], sizes = [2, 32], strides = [1, 1]} : vector<2x128xf32> to vector<2x32xf32>
    %26 = vector.extract_strided_slice %23 {offsets = [0, 64], sizes = [2, 32], strides = [1, 1]} : vector<2x128xf32> to vector<2x32xf32>
    %27 = vector.extract_strided_slice %22 {offsets = [0, 96], sizes = [2, 32], strides = [1, 1]} : vector<2x128xf32> to vector<2x32xf32>
    %28 = arith.mulf %25, %9 : vector<2x32xf32>
    %29 = arith.mulf %24, %26 : vector<2x32xf32>
    %30 = arith.addf %28, %29 : vector<2x32xf32>
    %31 = math.tanh %30 : vector<2x32xf32>
    %32 = arith.mulf %27, %31 : vector<2x32xf32>
    %c0_24 = arith.constant 0 : index
    %c0_25 = arith.constant 0 : index
    %c0_26 = arith.constant 0 : index
    %33 = vector.load %arg7[%c0_24, %c0_25, %c0_26] : memref<2x2x32xf32, #tpu.memory_space<vmem>>, vector<1x2x32xf32>
    %34 = vector.shape_cast %33 : vector<1x2x32xf32> to vector<2x32xf32>
    %35 = vector.shape_cast %32 : vector<2x32xf32> to vector<1x2x32xf32>
    tpu.vector_store %arg7[%c0_24, %c0_25, %c0_26], %35 {strides = array<i32>} : memref<2x2x32xf32, #tpu.memory_space<vmem>>, vector<1x2x32xf32>,
    %c0_27 = arith.constant 0 : index
    %c0_28 = arith.constant 0 : index
    %c0_29 = arith.constant 0 : index
    %36 = vector.load %arg8[%c0_27, %c0_28, %c0_29] : memref<2x2x32xf32, #tpu.memory_space<vmem>>, vector<1x2x32xf32>
    %37 = vector.shape_cast %36 : vector<1x2x32xf32> to vector<2x32xf32>
    %38 = vector.shape_cast %30 : vector<2x32xf32> to vector<1x2x32xf32>
    tpu.vector_store %arg8[%c0_27, %c0_28, %c0_29], %38 {strides = array<i32>} : memref<2x2x32xf32, #tpu.memory_space<vmem>>, vector<1x2x32xf32>,
    %c1 = arith.constant 1 : index
    %c0_30 = arith.constant 0 : index
    %c0_31 = arith.constant 0 : index
    %39 = vector.load %arg7[%c1, %c0_30, %c0_31] : memref<2x2x32xf32, #tpu.memory_space<vmem>>, vector<1x2x32xf32>
    %40 = vector.shape_cast %39 : vector<1x2x32xf32> to vector<2x32xf32>
    %c1_32 = arith.constant 1 : index
    %c0_33 = arith.constant 0 : index
    %c0_34 = arith.constant 0 : index
    %41 = vector.load %arg8[%c1_32, %c0_33, %c0_34] : memref<2x2x32xf32, #tpu.memory_space<vmem>>, vector<1x2x32xf32>
    %42 = vector.shape_cast %41 : vector<1x2x32xf32> to vector<2x32xf32>
    %c0_35 = arith.constant 0 : index
    %c0_36 = arith.constant 0 : index
    %43 = vector.load %arg2[%c0_35, %c0_36] : memref<32x128xf32, #tpu.memory_space<vmem>>, vector<32x128xf32>
    %c0_37 = arith.constant 0 : index
    %c0_38 = arith.constant 0 : index
    %44 = vector.load %arg4[%c0_37, %c0_38] : memref<32x128xf32, #tpu.memory_space<vmem>>, vector<32x128xf32>
    %c0_39 = arith.constant 0 : index
    %c0_40 = arith.constant 0 : index
    %45 = vector.load %arg6[%c0_39, %c0_40] : memref<1x128xf32, #tpu.memory_space<vmem>>, vector<1x128xf32>
    %cst_41 = arith.constant dense<0.000000e+00> : vector<2x128xf32>
    %46 = tpu.matmul %32, %43, %cst_41 {dimension_numbers = #tpu.dot_dimension_numbers<[1], [0], [0], [1], [0, 0, 1, 1], [], []>} : vector<2x32xf32>, vector<32x128xf32>, vector<2x128xf32> -> vector<2x128xf32>
    %cst_42 = arith.constant dense<0.000000e+00> : vector<2x128xf32>
    %47 = tpu.matmul %40, %44, %cst_42 {dimension_numbers = #tpu.dot_dimension_numbers<[1], [0], [0], [1], [0, 0, 1, 1], [], []>} : vector<2x32xf32>, vector<32x128xf32>, vector<2x128xf32> -> vector<2x128xf32>
    %48 = arith.addf %46, %47 : vector<2x128xf32>
    %49 = vector.broadcast %45 : vector<1x128xf32> to vector<2x128xf32>
    %50 = arith.addf %48, %49 : vector<2x128xf32>
    %51 = arith.negf %50 : vector<2x128xf32>
    %52 = math.exp %51 : vector<2x128xf32>
    %cst_43 = arith.constant 1.000000e+00 : f32
    %53 = vector.broadcast %cst_43 : f32 to vector<2x128xf32>
    %54 = arith.addf %53, %52 : vector<2x128xf32>
    %55 = arith.divf %53, %54 : vector<2x128xf32>
    %56 = math.tanh %50 : vector<2x128xf32>
    %57 = vector.extract_strided_slice %55 {offsets = [0, 0], sizes = [2, 32], strides = [1, 1]} : vector<2x128xf32> to vector<2x32xf32>
    %58 = vector.extract_strided_slice %55 {offsets = [0, 32], sizes = [2, 32], strides = [1, 1]} : vector<2x128xf32> to vector<2x32xf32>
    %59 = vector.extract_strided_slice %56 {offsets = [0, 64], sizes = [2, 32], strides = [1, 1]} : vector<2x128xf32> to vector<2x32xf32>
    %60 = vector.extract_strided_slice %55 {offsets = [0, 96], sizes = [2, 32], strides = [1, 1]} : vector<2x128xf32> to vector<2x32xf32>
    %61 = arith.mulf %58, %42 : vector<2x32xf32>
    %62 = arith.mulf %57, %59 : vector<2x32xf32>
    %63 = arith.addf %61, %62 : vector<2x32xf32>
    %64 = math.tanh %63 : vector<2x32xf32>
    %65 = arith.mulf %60, %64 : vector<2x32xf32>
    %c1_44 = arith.constant 1 : index
    %c0_45 = arith.constant 0 : index
    %c0_46 = arith.constant 0 : index
    %66 = vector.load %arg7[%c1_44, %c0_45, %c0_46] : memref<2x2x32xf32, #tpu.memory_space<vmem>>, vector<1x2x32xf32>
    %67 = vector.shape_cast %66 : vector<1x2x32xf32> to vector<2x32xf32>
    %68 = vector.shape_cast %65 : vector<2x32xf32> to vector<1x2x32xf32>
    tpu.vector_store %arg7[%c1_44, %c0_45, %c0_46], %68 {strides = array<i32>} : memref<2x2x32xf32, #tpu.memory_space<vmem>>, vector<1x2x32xf32>,
    %c1_47 = arith.constant 1 : index
    %c0_48 = arith.constant 0 : index
    %c0_49 = arith.constant 0 : index
    %69 = vector.load %arg8[%c1_47, %c0_48, %c0_49] : memref<2x2x32xf32, #tpu.memory_space<vmem>>, vector<1x2x32xf32>
    %70 = vector.shape_cast %69 : vector<1x2x32xf32> to vector<2x32xf32>
    %71 = vector.shape_cast %63 : vector<2x32xf32> to vector<1x2x32xf32>
    tpu.vector_store %arg8[%c1_47, %c0_48, %c0_49], %71 {strides = array<i32>} : memref<2x2x32xf32, #tpu.memory_space<vmem>>, vector<1x2x32xf32>,
    %c1_50 = arith.constant 1 : index
    %c0_51 = arith.constant 0 : index
    %c0_52 = arith.constant 0 : index
    %72 = vector.load %arg0[%c1_50, %c0_51, %c0_52] : memref<8x2x4xf32, #tpu.memory_space<vmem>>, vector<1x2x4xf32>
    %73 = vector.shape_cast %72 : vector<1x2x4xf32> to vector<2x4xf32>
    %c0_53 = arith.constant 0 : index
    %c0_54 = arith.constant 0 : index
    %c0_55 = arith.constant 0 : index
    %74 = vector.load %arg7[%c0_53, %c0_54, %c0_55] : memref<2x2x32xf32, #tpu.memory_space<vmem>>, vector<1x2x32xf32>
    %75 = vector.shape_cast %74 : vector<1x2x32xf32> to vector<2x32xf32>
    %c0_56 = arith.constant 0 : index
    %c0_57 = arith.constant 0 : index
    %c0_58 = arith.constant 0 : index
    %76 = vector.load %arg8[%c0_56, %c0_57, %c0_58] : memref<2x2x32xf32, #tpu.memory_space<vmem>>, vector<1x2x32xf32>
    %77 = vector.shape_cast %76 : vector<1x2x32xf32> to vector<2x32xf32>
    %c0_59 = arith.constant 0 : index
    %c0_60 = arith.constant 0 : index
    %78 = vector.load %arg1[%c0_59, %c0_60] : memref<4x128xf32, #tpu.memory_space<vmem>>, vector<4x128xf32>
    %c0_61 = arith.constant 0 : index
    %c0_62 = arith.constant 0 : index
    %79 = vector.load %arg3[%c0_61, %c0_62] : memref<32x128xf32, #tpu.memory_space<vmem>>, vector<32x128xf32>
    %c0_63 = arith.constant 0 : index
    %c0_64 = arith.constant 0 : index
    %80 = vector.load %arg5[%c0_63, %c0_64] : memref<1x128xf32, #tpu.memory_space<vmem>>, vector<1x128xf32>
    %cst_65 = arith.constant dense<0.000000e+00> : vector<2x128xf32>
    %81 = tpu.matmul %73, %78, %cst_65 {dimension_numbers = #tpu.dot_dimension_numbers<[1], [0], [0], [1], [0, 0, 1, 1], [], []>} : vector<2x4xf32>, vector<4x128xf32>, vector<2x128xf32> -> vector<2x128xf32>
    %cst_66 = arith.constant dense<0.000000e+00> : vector<2x128xf32>
    %82 = tpu.matmul %75, %79, %cst_66 {dimension_numbers = #tpu.dot_dimension_numbers<[1], [0], [0], [1], [0, 0, 1, 1], [], []>} : vector<2x32xf32>, vector<32x128xf32>, vector<2x128xf32> -> vector<2x128xf32>
    %83 = arith.addf %81, %82 : vector<2x128xf32>
    %84 = vector.broadcast %80 : vector<1x128xf32> to vector<2x128xf32>
    %85 = arith.addf %83, %84 : vector<2x128xf32>
    %86 = arith.negf %85 : vector<2x128xf32>
    %87 = math.exp %86 : vector<2x128xf32>
    %cst_67 = arith.constant 1.000000e+00 : f32
    %88 = vector.broadcast %cst_67 : f32 to vector<2x128xf32>
    %89 = arith.addf %88, %87 : vector<2x128xf32>
    %90 = arith.divf %88, %89 : vector<2x128xf32>
    %91 = math.tanh %85 : vector<2x128xf32>
    %92 = vector.extract_strided_slice %90 {offsets = [0, 0], sizes = [2, 32], strides = [1, 1]} : vector<2x128xf32> to vector<2x32xf32>
    %93 = vector.extract_strided_slice %90 {offsets = [0, 32], sizes = [2, 32], strides = [1, 1]} : vector<2x128xf32> to vector<2x32xf32>
    %94 = vector.extract_strided_slice %91 {offsets = [0, 64], sizes = [2, 32], strides = [1, 1]} : vector<2x128xf32> to vector<2x32xf32>
    %95 = vector.extract_strided_slice %90 {offsets = [0, 96], sizes = [2, 32], strides = [1, 1]} : vector<2x128xf32> to vector<2x32xf32>
    %96 = arith.mulf %93, %77 : vector<2x32xf32>
    %97 = arith.mulf %92, %94 : vector<2x32xf32>
    %98 = arith.addf %96, %97 : vector<2x32xf32>
    %99 = math.tanh %98 : vector<2x32xf32>
    %100 = arith.mulf %95, %99 : vector<2x32xf32>
    %c0_68 = arith.constant 0 : index
    %c0_69 = arith.constant 0 : index
    %c0_70 = arith.constant 0 : index
    %101 = vector.load %arg7[%c0_68, %c0_69, %c0_70] : memref<2x2x32xf32, #tpu.memory_space<vmem>>, vector<1x2x32xf32>
    %102 = vector.shape_cast %101 : vector<1x2x32xf32> to vector<2x32xf32>
    %103 = vector.shape_cast %100 : vector<2x32xf32> to vector<1x2x32xf32>
    tpu.vector_store %arg7[%c0_68, %c0_69, %c0_70], %103 {strides = array<i32>} : memref<2x2x32xf32, #tpu.memory_space<vmem>>, vector<1x2x32xf32>,
    %c0_71 = arith.constant 0 : index
    %c0_72 = arith.constant 0 : index
    %c0_73 = arith.constant 0 : index
    %104 = vector.load %arg8[%c0_71, %c0_72, %c0_73] : memref<2x2x32xf32, #tpu.memory_space<vmem>>, vector<1x2x32xf32>
    %105 = vector.shape_cast %104 : vector<1x2x32xf32> to vector<2x32xf32>
    %106 = vector.shape_cast %98 : vector<2x32xf32> to vector<1x2x32xf32>
    tpu.vector_store %arg8[%c0_71, %c0_72, %c0_73], %106 {strides = array<i32>} : memref<2x2x32xf32, #tpu.memory_space<vmem>>, vector<1x2x32xf32>,
    %c1_74 = arith.constant 1 : index
    %c0_75 = arith.constant 0 : index
    %c0_76 = arith.constant 0 : index
    %107 = vector.load %arg7[%c1_74, %c0_75, %c0_76] : memref<2x2x32xf32, #tpu.memory_space<vmem>>, vector<1x2x32xf32>
    %108 = vector.shape_cast %107 : vector<1x2x32xf32> to vector<2x32xf32>
    %c1_77 = arith.constant 1 : index
    %c0_78 = arith.constant 0 : index
    %c0_79 = arith.constant 0 : index
    %109 = vector.load %arg8[%c1_77, %c0_78, %c0_79] : memref<2x2x32xf32, #tpu.memory_space<vmem>>, vector<1x2x32xf32>
    %110 = vector.shape_cast %109 : vector<1x2x32xf32> to vector<2x32xf32>
    %c0_80 = arith.constant 0 : index
    %c0_81 = arith.constant 0 : index
    %111 = vector.load %arg2[%c0_80, %c0_81] : memref<32x128xf32, #tpu.memory_space<vmem>>, vector<32x128xf32>
    %c0_82 = arith.constant 0 : index
    %c0_83 = arith.constant 0 : index
    %112 = vector.load %arg4[%c0_82, %c0_83] : memref<32x128xf32, #tpu.memory_space<vmem>>, vector<32x128xf32>
    %c0_84 = arith.constant 0 : index
    %c0_85 = arith.constant 0 : index
    %113 = vector.load %arg6[%c0_84, %c0_85] : memref<1x128xf32, #tpu.memory_space<vmem>>, vector<1x128xf32>
    %cst_86 = arith.constant dense<0.000000e+00> : vector<2x128xf32>
    %114 = tpu.matmul %100, %111, %cst_86 {dimension_numbers = #tpu.dot_dimension_numbers<[1], [0], [0], [1], [0, 0, 1, 1], [], []>} : vector<2x32xf32>, vector<32x128xf32>, vector<2x128xf32> -> vector<2x128xf32>
    %cst_87 = arith.constant dense<0.000000e+00> : vector<2x128xf32>
    %115 = tpu.matmul %108, %112, %cst_87 {dimension_numbers = #tpu.dot_dimension_numbers<[1], [0], [0], [1], [0, 0, 1, 1], [], []>} : vector<2x32xf32>, vector<32x128xf32>, vector<2x128xf32> -> vector<2x128xf32>
    %116 = arith.addf %114, %115 : vector<2x128xf32>
    %117 = vector.broadcast %113 : vector<1x128xf32> to vector<2x128xf32>
    %118 = arith.addf %116, %117 : vector<2x128xf32>
    %119 = arith.negf %118 : vector<2x128xf32>
    %120 = math.exp %119 : vector<2x128xf32>
    %cst_88 = arith.constant 1.000000e+00 : f32
    %121 = vector.broadcast %cst_88 : f32 to vector<2x128xf32>
    %122 = arith.addf %121, %120 : vector<2x128xf32>
    %123 = arith.divf %121, %122 : vector<2x128xf32>
    %124 = math.tanh %118 : vector<2x128xf32>
    %125 = vector.extract_strided_slice %123 {offsets = [0, 0], sizes = [2, 32], strides = [1, 1]} : vector<2x128xf32> to vector<2x32xf32>
    %126 = vector.extract_strided_slice %123 {offsets = [0, 32], sizes = [2, 32], strides = [1, 1]} : vector<2x128xf32> to vector<2x32xf32>
    %127 = vector.extract_strided_slice %124 {offsets = [0, 64], sizes = [2, 32], strides = [1, 1]} : vector<2x128xf32> to vector<2x32xf32>
    %128 = vector.extract_strided_slice %123 {offsets = [0, 96], sizes = [2, 32], strides = [1, 1]} : vector<2x128xf32> to vector<2x32xf32>
    %129 = arith.mulf %126, %110 : vector<2x32xf32>
    %130 = arith.mulf %125, %127 : vector<2x32xf32>
    %131 = arith.addf %129, %130 : vector<2x32xf32>
    %132 = math.tanh %131 : vector<2x32xf32>
    %133 = arith.mulf %128, %132 : vector<2x32xf32>
    %c1_89 = arith.constant 1 : index
    %c0_90 = arith.constant 0 : index
    %c0_91 = arith.constant 0 : index
    %134 = vector.load %arg7[%c1_89, %c0_90, %c0_91] : memref<2x2x32xf32, #tpu.memory_space<vmem>>, vector<1x2x32xf32>
    %135 = vector.shape_cast %134 : vector<1x2x32xf32> to vector<2x32xf32>
    %136 = vector.shape_cast %133 : vector<2x32xf32> to vector<1x2x32xf32>
    tpu.vector_store %arg7[%c1_89, %c0_90, %c0_91], %136 {strides = array<i32>} : memref<2x2x32xf32, #tpu.memory_space<vmem>>, vector<1x2x32xf32>,
    %c1_92 = arith.constant 1 : index
    %c0_93 = arith.constant 0 : index
    %c0_94 = arith.constant 0 : index
    %137 = vector.load %arg8[%c1_92, %c0_93, %c0_94] : memref<2x2x32xf32, #tpu.memory_space<vmem>>, vector<1x2x32xf32>
    %138 = vector.shape_cast %137 : vector<1x2x32xf32> to vector<2x32xf32>
    %139 = vector.shape_cast %131 : vector<2x32xf32> to vector<1x2x32xf32>
    tpu.vector_store %arg8[%c1_92, %c0_93, %c0_94], %139 {strides = array<i32>} : memref<2x2x32xf32, #tpu.memory_space<vmem>>, vector<1x2x32xf32>,
    %c2 = arith.constant 2 : index
    %c0_95 = arith.constant 0 : index
    %c0_96 = arith.constant 0 : index
    %140 = vector.load %arg0[%c2, %c0_95, %c0_96] : memref<8x2x4xf32, #tpu.memory_space<vmem>>, vector<1x2x4xf32>
    %141 = vector.shape_cast %140 : vector<1x2x4xf32> to vector<2x4xf32>
    %c0_97 = arith.constant 0 : index
    %c0_98 = arith.constant 0 : index
    %c0_99 = arith.constant 0 : index
    %142 = vector.load %arg7[%c0_97, %c0_98, %c0_99] : memref<2x2x32xf32, #tpu.memory_space<vmem>>, vector<1x2x32xf32>
    %143 = vector.shape_cast %142 : vector<1x2x32xf32> to vector<2x32xf32>
    %c0_100 = arith.constant 0 : index
    %c0_101 = arith.constant 0 : index
    %c0_102 = arith.constant 0 : index
    %144 = vector.load %arg8[%c0_100, %c0_101, %c0_102] : memref<2x2x32xf32, #tpu.memory_space<vmem>>, vector<1x2x32xf32>
    %145 = vector.shape_cast %144 : vector<1x2x32xf32> to vector<2x32xf32>
    %c0_103 = arith.constant 0 : index
    %c0_104 = arith.constant 0 : index
    %146 = vector.load %arg1[%c0_103, %c0_104] : memref<4x128xf32, #tpu.memory_space<vmem>>, vector<4x128xf32>
    %c0_105 = arith.constant 0 : index
    %c0_106 = arith.constant 0 : index
    %147 = vector.load %arg3[%c0_105, %c0_106] : memref<32x128xf32, #tpu.memory_space<vmem>>, vector<32x128xf32>
    %c0_107 = arith.constant 0 : index
    %c0_108 = arith.constant 0 : index
    %148 = vector.load %arg5[%c0_107, %c0_108] : memref<1x128xf32, #tpu.memory_space<vmem>>, vector<1x128xf32>
    %cst_109 = arith.constant dense<0.000000e+00> : vector<2x128xf32>
    %149 = tpu.matmul %141, %146, %cst_109 {dimension_numbers = #tpu.dot_dimension_numbers<[1], [0], [0], [1], [0, 0, 1, 1], [], []>} : vector<2x4xf32>, vector<4x128xf32>, vector<2x128xf32> -> vector<2x128xf32>
    %cst_110 = arith.constant dense<0.000000e+00> : vector<2x128xf32>
    %150 = tpu.matmul %143, %147, %cst_110 {dimension_numbers = #tpu.dot_dimension_numbers<[1], [0], [0], [1], [0, 0, 1, 1], [], []>} : vector<2x32xf32>, vector<32x128xf32>, vector<2x128xf32> -> vector<2x128xf32>
    %151 = arith.addf %149, %150 : vector<2x128xf32>
    %152 = vector.broadcast %148 : vector<1x128xf32> to vector<2x128xf32>
    %153 = arith.addf %151, %152 : vector<2x128xf32>
    %154 = arith.negf %153 : vector<2x128xf32>
    %155 = math.exp %154 : vector<2x128xf32>
    %cst_111 = arith.constant 1.000000e+00 : f32
    %156 = vector.broadcast %cst_111 : f32 to vector<2x128xf32>
    %157 = arith.addf %156, %155 : vector<2x128xf32>
    %158 = arith.divf %156, %157 : vector<2x128xf32>
    %159 = math.tanh %153 : vector<2x128xf32>
    %160 = vector.extract_strided_slice %158 {offsets = [0, 0], sizes = [2, 32], strides = [1, 1]} : vector<2x128xf32> to vector<2x32xf32>
    %161 = vector.extract_strided_slice %158 {offsets = [0, 32], sizes = [2, 32], strides = [1, 1]} : vector<2x128xf32> to vector<2x32xf32>
    %162 = vector.extract_strided_slice %159 {offsets = [0, 64], sizes = [2, 32], strides = [1, 1]} : vector<2x128xf32> to vector<2x32xf32>
    %163 = vector.extract_strided_slice %158 {offsets = [0, 96], sizes = [2, 32], strides = [1, 1]} : vector<2x128xf32> to vector<2x32xf32>
    %164 = arith.mulf %161, %145 : vector<2x32xf32>
    %165 = arith.mulf %160, %162 : vector<2x32xf32>
    %166 = arith.addf %164, %165 : vector<2x32xf32>
    %167 = math.tanh %166 : vector<2x32xf32>
    %168 = arith.mulf %163, %167 : vector<2x32xf32>
    %c0_112 = arith.constant 0 : index
    %c0_113 = arith.constant 0 : index
    %c0_114 = arith.constant 0 : index
    %169 = vector.load %arg7[%c0_112, %c0_113, %c0_114] : memref<2x2x32xf32, #tpu.memory_space<vmem>>, vector<1x2x32xf32>
    %170 = vector.shape_cast %169 : vector<1x2x32xf32> to vector<2x32xf32>
    %171 = vector.shape_cast %168 : vector<2x32xf32> to vector<1x2x32xf32>
    tpu.vector_store %arg7[%c0_112, %c0_113, %c0_114], %171 {strides = array<i32>} : memref<2x2x32xf32, #tpu.memory_space<vmem>>, vector<1x2x32xf32>,
    %c0_115 = arith.constant 0 : index
    %c0_116 = arith.constant 0 : index
    %c0_117 = arith.constant 0 : index
    %172 = vector.load %arg8[%c0_115, %c0_116, %c0_117] : memref<2x2x32xf32, #tpu.memory_space<vmem>>, vector<1x2x32xf32>
    %173 = vector.shape_cast %172 : vector<1x2x32xf32> to vector<2x32xf32>
    %174 = vector.shape_cast %166 : vector<2x32xf32> to vector<1x2x32xf32>
    tpu.vector_store %arg8[%c0_115, %c0_116, %c0_117], %174 {strides = array<i32>} : memref<2x2x32xf32, #tpu.memory_space<vmem>>, vector<1x2x32xf32>,
    %c1_118 = arith.constant 1 : index
    %c0_119 = arith.constant 0 : index
    %c0_120 = arith.constant 0 : index
    %175 = vector.load %arg7[%c1_118, %c0_119, %c0_120] : memref<2x2x32xf32, #tpu.memory_space<vmem>>, vector<1x2x32xf32>
    %176 = vector.shape_cast %175 : vector<1x2x32xf32> to vector<2x32xf32>
    %c1_121 = arith.constant 1 : index
    %c0_122 = arith.constant 0 : index
    %c0_123 = arith.constant 0 : index
    %177 = vector.load %arg8[%c1_121, %c0_122, %c0_123] : memref<2x2x32xf32, #tpu.memory_space<vmem>>, vector<1x2x32xf32>
    %178 = vector.shape_cast %177 : vector<1x2x32xf32> to vector<2x32xf32>
    %c0_124 = arith.constant 0 : index
    %c0_125 = arith.constant 0 : index
    %179 = vector.load %arg2[%c0_124, %c0_125] : memref<32x128xf32, #tpu.memory_space<vmem>>, vector<32x128xf32>
    %c0_126 = arith.constant 0 : index
    %c0_127 = arith.constant 0 : index
    %180 = vector.load %arg4[%c0_126, %c0_127] : memref<32x128xf32, #tpu.memory_space<vmem>>, vector<32x128xf32>
    %c0_128 = arith.constant 0 : index
    %c0_129 = arith.constant 0 : index
    %181 = vector.load %arg6[%c0_128, %c0_129] : memref<1x128xf32, #tpu.memory_space<vmem>>, vector<1x128xf32>
    %cst_130 = arith.constant dense<0.000000e+00> : vector<2x128xf32>
    %182 = tpu.matmul %168, %179, %cst_130 {dimension_numbers = #tpu.dot_dimension_numbers<[1], [0], [0], [1], [0, 0, 1, 1], [], []>} : vector<2x32xf32>, vector<32x128xf32>, vector<2x128xf32> -> vector<2x128xf32>
    %cst_131 = arith.constant dense<0.000000e+00> : vector<2x128xf32>
    %183 = tpu.matmul %176, %180, %cst_131 {dimension_numbers = #tpu.dot_dimension_numbers<[1], [0], [0], [1], [0, 0, 1, 1], [], []>} : vector<2x32xf32>, vector<32x128xf32>, vector<2x128xf32> -> vector<2x128xf32>
    %184 = arith.addf %182, %183 : vector<2x128xf32>
    %185 = vector.broadcast %181 : vector<1x128xf32> to vector<2x128xf32>
    %186 = arith.addf %184, %185 : vector<2x128xf32>
    %187 = arith.negf %186 : vector<2x128xf32>
    %188 = math.exp %187 : vector<2x128xf32>
    %cst_132 = arith.constant 1.000000e+00 : f32
    %189 = vector.broadcast %cst_132 : f32 to vector<2x128xf32>
    %190 = arith.addf %189, %188 : vector<2x128xf32>
    %191 = arith.divf %189, %190 : vector<2x128xf32>
    %192 = math.tanh %186 : vector<2x128xf32>
    %193 = vector.extract_strided_slice %191 {offsets = [0, 0], sizes = [2, 32], strides = [1, 1]} : vector<2x128xf32> to vector<2x32xf32>
    %194 = vector.extract_strided_slice %191 {offsets = [0, 32], sizes = [2, 32], strides = [1, 1]} : vector<2x128xf32> to vector<2x32xf32>
    %195 = vector.extract_strided_slice %192 {offsets = [0, 64], sizes = [2, 32], strides = [1, 1]} : vector<2x128xf32> to vector<2x32xf32>
    %196 = vector.extract_strided_slice %191 {offsets = [0, 96], sizes = [2, 32], strides = [1, 1]} : vector<2x128xf32> to vector<2x32xf32>
    %197 = arith.mulf %194, %178 : vector<2x32xf32>
    %198 = arith.mulf %193, %195 : vector<2x32xf32>
    %199 = arith.addf %197, %198 : vector<2x32xf32>
    %200 = math.tanh %199 : vector<2x32xf32>
    %201 = arith.mulf %196, %200 : vector<2x32xf32>
    %c1_133 = arith.constant 1 : index
    %c0_134 = arith.constant 0 : index
    %c0_135 = arith.constant 0 : index
    %202 = vector.load %arg7[%c1_133, %c0_134, %c0_135] : memref<2x2x32xf32, #tpu.memory_space<vmem>>, vector<1x2x32xf32>
    %203 = vector.shape_cast %202 : vector<1x2x32xf32> to vector<2x32xf32>
    %204 = vector.shape_cast %201 : vector<2x32xf32> to vector<1x2x32xf32>
    tpu.vector_store %arg7[%c1_133, %c0_134, %c0_135], %204 {strides = array<i32>} : memref<2x2x32xf32, #tpu.memory_space<vmem>>, vector<1x2x32xf32>,
    %c1_136 = arith.constant 1 : index
    %c0_137 = arith.constant 0 : index
    %c0_138 = arith.constant 0 : index
    %205 = vector.load %arg8[%c1_136, %c0_137, %c0_138] : memref<2x2x32xf32, #tpu.memory_space<vmem>>, vector<1x2x32xf32>
    %206 = vector.shape_cast %205 : vector<1x2x32xf32> to vector<2x32xf32>
    %207 = vector.shape_cast %199 : vector<2x32xf32> to vector<1x2x32xf32>
    tpu.vector_store %arg8[%c1_136, %c0_137, %c0_138], %207 {strides = array<i32>} : memref<2x2x32xf32, #tpu.memory_space<vmem>>, vector<1x2x32xf32>,
    %c3 = arith.constant 3 : index
    %c0_139 = arith.constant 0 : index
    %c0_140 = arith.constant 0 : index
    %208 = vector.load %arg0[%c3, %c0_139, %c0_140] : memref<8x2x4xf32, #tpu.memory_space<vmem>>, vector<1x2x4xf32>
    %209 = vector.shape_cast %208 : vector<1x2x4xf32> to vector<2x4xf32>
    %c0_141 = arith.constant 0 : index
    %c0_142 = arith.constant 0 : index
    %c0_143 = arith.constant 0 : index
    %210 = vector.load %arg7[%c0_141, %c0_142, %c0_143] : memref<2x2x32xf32, #tpu.memory_space<vmem>>, vector<1x2x32xf32>
    %211 = vector.shape_cast %210 : vector<1x2x32xf32> to vector<2x32xf32>
    %c0_144 = arith.constant 0 : index
    %c0_145 = arith.constant 0 : index
    %c0_146 = arith.constant 0 : index
    %212 = vector.load %arg8[%c0_144, %c0_145, %c0_146] : memref<2x2x32xf32, #tpu.memory_space<vmem>>, vector<1x2x32xf32>
    %213 = vector.shape_cast %212 : vector<1x2x32xf32> to vector<2x32xf32>
    %c0_147 = arith.constant 0 : index
    %c0_148 = arith.constant 0 : index
    %214 = vector.load %arg1[%c0_147, %c0_148] : memref<4x128xf32, #tpu.memory_space<vmem>>, vector<4x128xf32>
    %c0_149 = arith.constant 0 : index
    %c0_150 = arith.constant 0 : index
    %215 = vector.load %arg3[%c0_149, %c0_150] : memref<32x128xf32, #tpu.memory_space<vmem>>, vector<32x128xf32>
    %c0_151 = arith.constant 0 : index
    %c0_152 = arith.constant 0 : index
    %216 = vector.load %arg5[%c0_151, %c0_152] : memref<1x128xf32, #tpu.memory_space<vmem>>, vector<1x128xf32>
    %cst_153 = arith.constant dense<0.000000e+00> : vector<2x128xf32>
    %217 = tpu.matmul %209, %214, %cst_153 {dimension_numbers = #tpu.dot_dimension_numbers<[1], [0], [0], [1], [0, 0, 1, 1], [], []>} : vector<2x4xf32>, vector<4x128xf32>, vector<2x128xf32> -> vector<2x128xf32>
    %cst_154 = arith.constant dense<0.000000e+00> : vector<2x128xf32>
    %218 = tpu.matmul %211, %215, %cst_154 {dimension_numbers = #tpu.dot_dimension_numbers<[1], [0], [0], [1], [0, 0, 1, 1], [], []>} : vector<2x32xf32>, vector<32x128xf32>, vector<2x128xf32> -> vector<2x128xf32>
    %219 = arith.addf %217, %218 : vector<2x128xf32>
    %220 = vector.broadcast %216 : vector<1x128xf32> to vector<2x128xf32>
    %221 = arith.addf %219, %220 : vector<2x128xf32>
    %222 = arith.negf %221 : vector<2x128xf32>
    %223 = math.exp %222 : vector<2x128xf32>
    %cst_155 = arith.constant 1.000000e+00 : f32
    %224 = vector.broadcast %cst_155 : f32 to vector<2x128xf32>
    %225 = arith.addf %224, %223 : vector<2x128xf32>
    %226 = arith.divf %224, %225 : vector<2x128xf32>
    %227 = math.tanh %221 : vector<2x128xf32>
    %228 = vector.extract_strided_slice %226 {offsets = [0, 0], sizes = [2, 32], strides = [1, 1]} : vector<2x128xf32> to vector<2x32xf32>
    %229 = vector.extract_strided_slice %226 {offsets = [0, 32], sizes = [2, 32], strides = [1, 1]} : vector<2x128xf32> to vector<2x32xf32>
    %230 = vector.extract_strided_slice %227 {offsets = [0, 64], sizes = [2, 32], strides = [1, 1]} : vector<2x128xf32> to vector<2x32xf32>
    %231 = vector.extract_strided_slice %226 {offsets = [0, 96], sizes = [2, 32], strides = [1, 1]} : vector<2x128xf32> to vector<2x32xf32>
    %232 = arith.mulf %229, %213 : vector<2x32xf32>
    %233 = arith.mulf %228, %230 : vector<2x32xf32>
    %234 = arith.addf %232, %233 : vector<2x32xf32>
    %235 = math.tanh %234 : vector<2x32xf32>
    %236 = arith.mulf %231, %235 : vector<2x32xf32>
    %c0_156 = arith.constant 0 : index
    %c0_157 = arith.constant 0 : index
    %c0_158 = arith.constant 0 : index
    %237 = vector.load %arg7[%c0_156, %c0_157, %c0_158] : memref<2x2x32xf32, #tpu.memory_space<vmem>>, vector<1x2x32xf32>
    %238 = vector.shape_cast %237 : vector<1x2x32xf32> to vector<2x32xf32>
    %239 = vector.shape_cast %236 : vector<2x32xf32> to vector<1x2x32xf32>
    tpu.vector_store %arg7[%c0_156, %c0_157, %c0_158], %239 {strides = array<i32>} : memref<2x2x32xf32, #tpu.memory_space<vmem>>, vector<1x2x32xf32>,
    %c0_159 = arith.constant 0 : index
    %c0_160 = arith.constant 0 : index
    %c0_161 = arith.constant 0 : index
    %240 = vector.load %arg8[%c0_159, %c0_160, %c0_161] : memref<2x2x32xf32, #tpu.memory_space<vmem>>, vector<1x2x32xf32>
    %241 = vector.shape_cast %240 : vector<1x2x32xf32> to vector<2x32xf32>
    %242 = vector.shape_cast %234 : vector<2x32xf32> to vector<1x2x32xf32>
    tpu.vector_store %arg8[%c0_159, %c0_160, %c0_161], %242 {strides = array<i32>} : memref<2x2x32xf32, #tpu.memory_space<vmem>>, vector<1x2x32xf32>,
    %c1_162 = arith.constant 1 : index
    %c0_163 = arith.constant 0 : index
    %c0_164 = arith.constant 0 : index
    %243 = vector.load %arg7[%c1_162, %c0_163, %c0_164] : memref<2x2x32xf32, #tpu.memory_space<vmem>>, vector<1x2x32xf32>
    %244 = vector.shape_cast %243 : vector<1x2x32xf32> to vector<2x32xf32>
    %c1_165 = arith.constant 1 : index
    %c0_166 = arith.constant 0 : index
    %c0_167 = arith.constant 0 : index
    %245 = vector.load %arg8[%c1_165, %c0_166, %c0_167] : memref<2x2x32xf32, #tpu.memory_space<vmem>>, vector<1x2x32xf32>
    %246 = vector.shape_cast %245 : vector<1x2x32xf32> to vector<2x32xf32>
    %c0_168 = arith.constant 0 : index
    %c0_169 = arith.constant 0 : index
    %247 = vector.load %arg2[%c0_168, %c0_169] : memref<32x128xf32, #tpu.memory_space<vmem>>, vector<32x128xf32>
    %c0_170 = arith.constant 0 : index
    %c0_171 = arith.constant 0 : index
    %248 = vector.load %arg4[%c0_170, %c0_171] : memref<32x128xf32, #tpu.memory_space<vmem>>, vector<32x128xf32>
    %c0_172 = arith.constant 0 : index
    %c0_173 = arith.constant 0 : index
    %249 = vector.load %arg6[%c0_172, %c0_173] : memref<1x128xf32, #tpu.memory_space<vmem>>, vector<1x128xf32>
    %cst_174 = arith.constant dense<0.000000e+00> : vector<2x128xf32>
    %250 = tpu.matmul %236, %247, %cst_174 {dimension_numbers = #tpu.dot_dimension_numbers<[1], [0], [0], [1], [0, 0, 1, 1], [], []>} : vector<2x32xf32>, vector<32x128xf32>, vector<2x128xf32> -> vector<2x128xf32>
    %cst_175 = arith.constant dense<0.000000e+00> : vector<2x128xf32>
    %251 = tpu.matmul %244, %248, %cst_175 {dimension_numbers = #tpu.dot_dimension_numbers<[1], [0], [0], [1], [0, 0, 1, 1], [], []>} : vector<2x32xf32>, vector<32x128xf32>, vector<2x128xf32> -> vector<2x128xf32>
    %252 = arith.addf %250, %251 : vector<2x128xf32>
    %253 = vector.broadcast %249 : vector<1x128xf32> to vector<2x128xf32>
    %254 = arith.addf %252, %253 : vector<2x128xf32>
    %255 = arith.negf %254 : vector<2x128xf32>
    %256 = math.exp %255 : vector<2x128xf32>
    %cst_176 = arith.constant 1.000000e+00 : f32
    %257 = vector.broadcast %cst_176 : f32 to vector<2x128xf32>
    %258 = arith.addf %257, %256 : vector<2x128xf32>
    %259 = arith.divf %257, %258 : vector<2x128xf32>
    %260 = math.tanh %254 : vector<2x128xf32>
    %261 = vector.extract_strided_slice %259 {offsets = [0, 0], sizes = [2, 32], strides = [1, 1]} : vector<2x128xf32> to vector<2x32xf32>
    %262 = vector.extract_strided_slice %259 {offsets = [0, 32], sizes = [2, 32], strides = [1, 1]} : vector<2x128xf32> to vector<2x32xf32>
    %263 = vector.extract_strided_slice %260 {offsets = [0, 64], sizes = [2, 32], strides = [1, 1]} : vector<2x128xf32> to vector<2x32xf32>
    %264 = vector.extract_strided_slice %259 {offsets = [0, 96], sizes = [2, 32], strides = [1, 1]} : vector<2x128xf32> to vector<2x32xf32>
    %265 = arith.mulf %262, %246 : vector<2x32xf32>
    %266 = arith.mulf %261, %263 : vector<2x32xf32>
    %267 = arith.addf %265, %266 : vector<2x32xf32>
    %268 = math.tanh %267 : vector<2x32xf32>
    %269 = arith.mulf %264, %268 : vector<2x32xf32>
    %c1_177 = arith.constant 1 : index
    %c0_178 = arith.constant 0 : index
    %c0_179 = arith.constant 0 : index
    %270 = vector.load %arg7[%c1_177, %c0_178, %c0_179] : memref<2x2x32xf32, #tpu.memory_space<vmem>>, vector<1x2x32xf32>
    %271 = vector.shape_cast %270 : vector<1x2x32xf32> to vector<2x32xf32>
    %272 = vector.shape_cast %269 : vector<2x32xf32> to vector<1x2x32xf32>
    tpu.vector_store %arg7[%c1_177, %c0_178, %c0_179], %272 {strides = array<i32>} : memref<2x2x32xf32, #tpu.memory_space<vmem>>, vector<1x2x32xf32>,
    %c1_180 = arith.constant 1 : index
    %c0_181 = arith.constant 0 : index
    %c0_182 = arith.constant 0 : index
    %273 = vector.load %arg8[%c1_180, %c0_181, %c0_182] : memref<2x2x32xf32, #tpu.memory_space<vmem>>, vector<1x2x32xf32>
    %274 = vector.shape_cast %273 : vector<1x2x32xf32> to vector<2x32xf32>
    %275 = vector.shape_cast %267 : vector<2x32xf32> to vector<1x2x32xf32>
    tpu.vector_store %arg8[%c1_180, %c0_181, %c0_182], %275 {strides = array<i32>} : memref<2x2x32xf32, #tpu.memory_space<vmem>>, vector<1x2x32xf32>,
    %c4 = arith.constant 4 : index
    %c0_183 = arith.constant 0 : index
    %c0_184 = arith.constant 0 : index
    %276 = vector.load %arg0[%c4, %c0_183, %c0_184] : memref<8x2x4xf32, #tpu.memory_space<vmem>>, vector<1x2x4xf32>
    %277 = vector.shape_cast %276 : vector<1x2x4xf32> to vector<2x4xf32>
    %c0_185 = arith.constant 0 : index
    %c0_186 = arith.constant 0 : index
    %c0_187 = arith.constant 0 : index
    %278 = vector.load %arg7[%c0_185, %c0_186, %c0_187] : memref<2x2x32xf32, #tpu.memory_space<vmem>>, vector<1x2x32xf32>
    %279 = vector.shape_cast %278 : vector<1x2x32xf32> to vector<2x32xf32>
    %c0_188 = arith.constant 0 : index
    %c0_189 = arith.constant 0 : index
    %c0_190 = arith.constant 0 : index
    %280 = vector.load %arg8[%c0_188, %c0_189, %c0_190] : memref<2x2x32xf32, #tpu.memory_space<vmem>>, vector<1x2x32xf32>
    %281 = vector.shape_cast %280 : vector<1x2x32xf32> to vector<2x32xf32>
    %c0_191 = arith.constant 0 : index
    %c0_192 = arith.constant 0 : index
    %282 = vector.load %arg1[%c0_191, %c0_192] : memref<4x128xf32, #tpu.memory_space<vmem>>, vector<4x128xf32>
    %c0_193 = arith.constant 0 : index
    %c0_194 = arith.constant 0 : index
    %283 = vector.load %arg3[%c0_193, %c0_194] : memref<32x128xf32, #tpu.memory_space<vmem>>, vector<32x128xf32>
    %c0_195 = arith.constant 0 : index
    %c0_196 = arith.constant 0 : index
    %284 = vector.load %arg5[%c0_195, %c0_196] : memref<1x128xf32, #tpu.memory_space<vmem>>, vector<1x128xf32>
    %cst_197 = arith.constant dense<0.000000e+00> : vector<2x128xf32>
    %285 = tpu.matmul %277, %282, %cst_197 {dimension_numbers = #tpu.dot_dimension_numbers<[1], [0], [0], [1], [0, 0, 1, 1], [], []>} : vector<2x4xf32>, vector<4x128xf32>, vector<2x128xf32> -> vector<2x128xf32>
    %cst_198 = arith.constant dense<0.000000e+00> : vector<2x128xf32>
    %286 = tpu.matmul %279, %283, %cst_198 {dimension_numbers = #tpu.dot_dimension_numbers<[1], [0], [0], [1], [0, 0, 1, 1], [], []>} : vector<2x32xf32>, vector<32x128xf32>, vector<2x128xf32> -> vector<2x128xf32>
    %287 = arith.addf %285, %286 : vector<2x128xf32>
    %288 = vector.broadcast %284 : vector<1x128xf32> to vector<2x128xf32>
    %289 = arith.addf %287, %288 : vector<2x128xf32>
    %290 = arith.negf %289 : vector<2x128xf32>
    %291 = math.exp %290 : vector<2x128xf32>
    %cst_199 = arith.constant 1.000000e+00 : f32
    %292 = vector.broadcast %cst_199 : f32 to vector<2x128xf32>
    %293 = arith.addf %292, %291 : vector<2x128xf32>
    %294 = arith.divf %292, %293 : vector<2x128xf32>
    %295 = math.tanh %289 : vector<2x128xf32>
    %296 = vector.extract_strided_slice %294 {offsets = [0, 0], sizes = [2, 32], strides = [1, 1]} : vector<2x128xf32> to vector<2x32xf32>
    %297 = vector.extract_strided_slice %294 {offsets = [0, 32], sizes = [2, 32], strides = [1, 1]} : vector<2x128xf32> to vector<2x32xf32>
    %298 = vector.extract_strided_slice %295 {offsets = [0, 64], sizes = [2, 32], strides = [1, 1]} : vector<2x128xf32> to vector<2x32xf32>
    %299 = vector.extract_strided_slice %294 {offsets = [0, 96], sizes = [2, 32], strides = [1, 1]} : vector<2x128xf32> to vector<2x32xf32>
    %300 = arith.mulf %297, %281 : vector<2x32xf32>
    %301 = arith.mulf %296, %298 : vector<2x32xf32>
    %302 = arith.addf %300, %301 : vector<2x32xf32>
    %303 = math.tanh %302 : vector<2x32xf32>
    %304 = arith.mulf %299, %303 : vector<2x32xf32>
    %c0_200 = arith.constant 0 : index
    %c0_201 = arith.constant 0 : index
    %c0_202 = arith.constant 0 : index
    %305 = vector.load %arg7[%c0_200, %c0_201, %c0_202] : memref<2x2x32xf32, #tpu.memory_space<vmem>>, vector<1x2x32xf32>
    %306 = vector.shape_cast %305 : vector<1x2x32xf32> to vector<2x32xf32>
    %307 = vector.shape_cast %304 : vector<2x32xf32> to vector<1x2x32xf32>
    tpu.vector_store %arg7[%c0_200, %c0_201, %c0_202], %307 {strides = array<i32>} : memref<2x2x32xf32, #tpu.memory_space<vmem>>, vector<1x2x32xf32>,
    %c0_203 = arith.constant 0 : index
    %c0_204 = arith.constant 0 : index
    %c0_205 = arith.constant 0 : index
    %308 = vector.load %arg8[%c0_203, %c0_204, %c0_205] : memref<2x2x32xf32, #tpu.memory_space<vmem>>, vector<1x2x32xf32>
    %309 = vector.shape_cast %308 : vector<1x2x32xf32> to vector<2x32xf32>
    %310 = vector.shape_cast %302 : vector<2x32xf32> to vector<1x2x32xf32>
    tpu.vector_store %arg8[%c0_203, %c0_204, %c0_205], %310 {strides = array<i32>} : memref<2x2x32xf32, #tpu.memory_space<vmem>>, vector<1x2x32xf32>,
    %c1_206 = arith.constant 1 : index
    %c0_207 = arith.constant 0 : index
    %c0_208 = arith.constant 0 : index
    %311 = vector.load %arg7[%c1_206, %c0_207, %c0_208] : memref<2x2x32xf32, #tpu.memory_space<vmem>>, vector<1x2x32xf32>
    %312 = vector.shape_cast %311 : vector<1x2x32xf32> to vector<2x32xf32>
    %c1_209 = arith.constant 1 : index
    %c0_210 = arith.constant 0 : index
    %c0_211 = arith.constant 0 : index
    %313 = vector.load %arg8[%c1_209, %c0_210, %c0_211] : memref<2x2x32xf32, #tpu.memory_space<vmem>>, vector<1x2x32xf32>
    %314 = vector.shape_cast %313 : vector<1x2x32xf32> to vector<2x32xf32>
    %c0_212 = arith.constant 0 : index
    %c0_213 = arith.constant 0 : index
    %315 = vector.load %arg2[%c0_212, %c0_213] : memref<32x128xf32, #tpu.memory_space<vmem>>, vector<32x128xf32>
    %c0_214 = arith.constant 0 : index
    %c0_215 = arith.constant 0 : index
    %316 = vector.load %arg4[%c0_214, %c0_215] : memref<32x128xf32, #tpu.memory_space<vmem>>, vector<32x128xf32>
    %c0_216 = arith.constant 0 : index
    %c0_217 = arith.constant 0 : index
    %317 = vector.load %arg6[%c0_216, %c0_217] : memref<1x128xf32, #tpu.memory_space<vmem>>, vector<1x128xf32>
    %cst_218 = arith.constant dense<0.000000e+00> : vector<2x128xf32>
    %318 = tpu.matmul %304, %315, %cst_218 {dimension_numbers = #tpu.dot_dimension_numbers<[1], [0], [0], [1], [0, 0, 1, 1], [], []>} : vector<2x32xf32>, vector<32x128xf32>, vector<2x128xf32> -> vector<2x128xf32>
    %cst_219 = arith.constant dense<0.000000e+00> : vector<2x128xf32>
    %319 = tpu.matmul %312, %316, %cst_219 {dimension_numbers = #tpu.dot_dimension_numbers<[1], [0], [0], [1], [0, 0, 1, 1], [], []>} : vector<2x32xf32>, vector<32x128xf32>, vector<2x128xf32> -> vector<2x128xf32>
    %320 = arith.addf %318, %319 : vector<2x128xf32>
    %321 = vector.broadcast %317 : vector<1x128xf32> to vector<2x128xf32>
    %322 = arith.addf %320, %321 : vector<2x128xf32>
    %323 = arith.negf %322 : vector<2x128xf32>
    %324 = math.exp %323 : vector<2x128xf32>
    %cst_220 = arith.constant 1.000000e+00 : f32
    %325 = vector.broadcast %cst_220 : f32 to vector<2x128xf32>
    %326 = arith.addf %325, %324 : vector<2x128xf32>
    %327 = arith.divf %325, %326 : vector<2x128xf32>
    %328 = math.tanh %322 : vector<2x128xf32>
    %329 = vector.extract_strided_slice %327 {offsets = [0, 0], sizes = [2, 32], strides = [1, 1]} : vector<2x128xf32> to vector<2x32xf32>
    %330 = vector.extract_strided_slice %327 {offsets = [0, 32], sizes = [2, 32], strides = [1, 1]} : vector<2x128xf32> to vector<2x32xf32>
    %331 = vector.extract_strided_slice %328 {offsets = [0, 64], sizes = [2, 32], strides = [1, 1]} : vector<2x128xf32> to vector<2x32xf32>
    %332 = vector.extract_strided_slice %327 {offsets = [0, 96], sizes = [2, 32], strides = [1, 1]} : vector<2x128xf32> to vector<2x32xf32>
    %333 = arith.mulf %330, %314 : vector<2x32xf32>
    %334 = arith.mulf %329, %331 : vector<2x32xf32>
    %335 = arith.addf %333, %334 : vector<2x32xf32>
    %336 = math.tanh %335 : vector<2x32xf32>
    %337 = arith.mulf %332, %336 : vector<2x32xf32>
    %c1_221 = arith.constant 1 : index
    %c0_222 = arith.constant 0 : index
    %c0_223 = arith.constant 0 : index
    %338 = vector.load %arg7[%c1_221, %c0_222, %c0_223] : memref<2x2x32xf32, #tpu.memory_space<vmem>>, vector<1x2x32xf32>
    %339 = vector.shape_cast %338 : vector<1x2x32xf32> to vector<2x32xf32>
    %340 = vector.shape_cast %337 : vector<2x32xf32> to vector<1x2x32xf32>
    tpu.vector_store %arg7[%c1_221, %c0_222, %c0_223], %340 {strides = array<i32>} : memref<2x2x32xf32, #tpu.memory_space<vmem>>, vector<1x2x32xf32>,
    %c1_224 = arith.constant 1 : index
    %c0_225 = arith.constant 0 : index
    %c0_226 = arith.constant 0 : index
    %341 = vector.load %arg8[%c1_224, %c0_225, %c0_226] : memref<2x2x32xf32, #tpu.memory_space<vmem>>, vector<1x2x32xf32>
    %342 = vector.shape_cast %341 : vector<1x2x32xf32> to vector<2x32xf32>
    %343 = vector.shape_cast %335 : vector<2x32xf32> to vector<1x2x32xf32>
    tpu.vector_store %arg8[%c1_224, %c0_225, %c0_226], %343 {strides = array<i32>} : memref<2x2x32xf32, #tpu.memory_space<vmem>>, vector<1x2x32xf32>,
    %c5 = arith.constant 5 : index
    %c0_227 = arith.constant 0 : index
    %c0_228 = arith.constant 0 : index
    %344 = vector.load %arg0[%c5, %c0_227, %c0_228] : memref<8x2x4xf32, #tpu.memory_space<vmem>>, vector<1x2x4xf32>
    %345 = vector.shape_cast %344 : vector<1x2x4xf32> to vector<2x4xf32>
    %c0_229 = arith.constant 0 : index
    %c0_230 = arith.constant 0 : index
    %c0_231 = arith.constant 0 : index
    %346 = vector.load %arg7[%c0_229, %c0_230, %c0_231] : memref<2x2x32xf32, #tpu.memory_space<vmem>>, vector<1x2x32xf32>
    %347 = vector.shape_cast %346 : vector<1x2x32xf32> to vector<2x32xf32>
    %c0_232 = arith.constant 0 : index
    %c0_233 = arith.constant 0 : index
    %c0_234 = arith.constant 0 : index
    %348 = vector.load %arg8[%c0_232, %c0_233, %c0_234] : memref<2x2x32xf32, #tpu.memory_space<vmem>>, vector<1x2x32xf32>
    %349 = vector.shape_cast %348 : vector<1x2x32xf32> to vector<2x32xf32>
    %c0_235 = arith.constant 0 : index
    %c0_236 = arith.constant 0 : index
    %350 = vector.load %arg1[%c0_235, %c0_236] : memref<4x128xf32, #tpu.memory_space<vmem>>, vector<4x128xf32>
    %c0_237 = arith.constant 0 : index
    %c0_238 = arith.constant 0 : index
    %351 = vector.load %arg3[%c0_237, %c0_238] : memref<32x128xf32, #tpu.memory_space<vmem>>, vector<32x128xf32>
    %c0_239 = arith.constant 0 : index
    %c0_240 = arith.constant 0 : index
    %352 = vector.load %arg5[%c0_239, %c0_240] : memref<1x128xf32, #tpu.memory_space<vmem>>, vector<1x128xf32>
    %cst_241 = arith.constant dense<0.000000e+00> : vector<2x128xf32>
    %353 = tpu.matmul %345, %350, %cst_241 {dimension_numbers = #tpu.dot_dimension_numbers<[1], [0], [0], [1], [0, 0, 1, 1], [], []>} : vector<2x4xf32>, vector<4x128xf32>, vector<2x128xf32> -> vector<2x128xf32>
    %cst_242 = arith.constant dense<0.000000e+00> : vector<2x128xf32>
    %354 = tpu.matmul %347, %351, %cst_242 {dimension_numbers = #tpu.dot_dimension_numbers<[1], [0], [0], [1], [0, 0, 1, 1], [], []>} : vector<2x32xf32>, vector<32x128xf32>, vector<2x128xf32> -> vector<2x128xf32>
    %355 = arith.addf %353, %354 : vector<2x128xf32>
    %356 = vector.broadcast %352 : vector<1x128xf32> to vector<2x128xf32>
    %357 = arith.addf %355, %356 : vector<2x128xf32>
    %358 = arith.negf %357 : vector<2x128xf32>
    %359 = math.exp %358 : vector<2x128xf32>
    %cst_243 = arith.constant 1.000000e+00 : f32
    %360 = vector.broadcast %cst_243 : f32 to vector<2x128xf32>
    %361 = arith.addf %360, %359 : vector<2x128xf32>
    %362 = arith.divf %360, %361 : vector<2x128xf32>
    %363 = math.tanh %357 : vector<2x128xf32>
    %364 = vector.extract_strided_slice %362 {offsets = [0, 0], sizes = [2, 32], strides = [1, 1]} : vector<2x128xf32> to vector<2x32xf32>
    %365 = vector.extract_strided_slice %362 {offsets = [0, 32], sizes = [2, 32], strides = [1, 1]} : vector<2x128xf32> to vector<2x32xf32>
    %366 = vector.extract_strided_slice %363 {offsets = [0, 64], sizes = [2, 32], strides = [1, 1]} : vector<2x128xf32> to vector<2x32xf32>
    %367 = vector.extract_strided_slice %362 {offsets = [0, 96], sizes = [2, 32], strides = [1, 1]} : vector<2x128xf32> to vector<2x32xf32>
    %368 = arith.mulf %365, %349 : vector<2x32xf32>
    %369 = arith.mulf %364, %366 : vector<2x32xf32>
    %370 = arith.addf %368, %369 : vector<2x32xf32>
    %371 = math.tanh %370 : vector<2x32xf32>
    %372 = arith.mulf %367, %371 : vector<2x32xf32>
    %c0_244 = arith.constant 0 : index
    %c0_245 = arith.constant 0 : index
    %c0_246 = arith.constant 0 : index
    %373 = vector.load %arg7[%c0_244, %c0_245, %c0_246] : memref<2x2x32xf32, #tpu.memory_space<vmem>>, vector<1x2x32xf32>
    %374 = vector.shape_cast %373 : vector<1x2x32xf32> to vector<2x32xf32>
    %375 = vector.shape_cast %372 : vector<2x32xf32> to vector<1x2x32xf32>
    tpu.vector_store %arg7[%c0_244, %c0_245, %c0_246], %375 {strides = array<i32>} : memref<2x2x32xf32, #tpu.memory_space<vmem>>, vector<1x2x32xf32>,
    %c0_247 = arith.constant 0 : index
    %c0_248 = arith.constant 0 : index
    %c0_249 = arith.constant 0 : index
    %376 = vector.load %arg8[%c0_247, %c0_248, %c0_249] : memref<2x2x32xf32, #tpu.memory_space<vmem>>, vector<1x2x32xf32>
    %377 = vector.shape_cast %376 : vector<1x2x32xf32> to vector<2x32xf32>
    %378 = vector.shape_cast %370 : vector<2x32xf32> to vector<1x2x32xf32>
    tpu.vector_store %arg8[%c0_247, %c0_248, %c0_249], %378 {strides = array<i32>} : memref<2x2x32xf32, #tpu.memory_space<vmem>>, vector<1x2x32xf32>,
    %c1_250 = arith.constant 1 : index
    %c0_251 = arith.constant 0 : index
    %c0_252 = arith.constant 0 : index
    %379 = vector.load %arg7[%c1_250, %c0_251, %c0_252] : memref<2x2x32xf32, #tpu.memory_space<vmem>>, vector<1x2x32xf32>
    %380 = vector.shape_cast %379 : vector<1x2x32xf32> to vector<2x32xf32>
    %c1_253 = arith.constant 1 : index
    %c0_254 = arith.constant 0 : index
    %c0_255 = arith.constant 0 : index
    %381 = vector.load %arg8[%c1_253, %c0_254, %c0_255] : memref<2x2x32xf32, #tpu.memory_space<vmem>>, vector<1x2x32xf32>
    %382 = vector.shape_cast %381 : vector<1x2x32xf32> to vector<2x32xf32>
    %c0_256 = arith.constant 0 : index
    %c0_257 = arith.constant 0 : index
    %383 = vector.load %arg2[%c0_256, %c0_257] : memref<32x128xf32, #tpu.memory_space<vmem>>, vector<32x128xf32>
    %c0_258 = arith.constant 0 : index
    %c0_259 = arith.constant 0 : index
    %384 = vector.load %arg4[%c0_258, %c0_259] : memref<32x128xf32, #tpu.memory_space<vmem>>, vector<32x128xf32>
    %c0_260 = arith.constant 0 : index
    %c0_261 = arith.constant 0 : index
    %385 = vector.load %arg6[%c0_260, %c0_261] : memref<1x128xf32, #tpu.memory_space<vmem>>, vector<1x128xf32>
    %cst_262 = arith.constant dense<0.000000e+00> : vector<2x128xf32>
    %386 = tpu.matmul %372, %383, %cst_262 {dimension_numbers = #tpu.dot_dimension_numbers<[1], [0], [0], [1], [0, 0, 1, 1], [], []>} : vector<2x32xf32>, vector<32x128xf32>, vector<2x128xf32> -> vector<2x128xf32>
    %cst_263 = arith.constant dense<0.000000e+00> : vector<2x128xf32>
    %387 = tpu.matmul %380, %384, %cst_263 {dimension_numbers = #tpu.dot_dimension_numbers<[1], [0], [0], [1], [0, 0, 1, 1], [], []>} : vector<2x32xf32>, vector<32x128xf32>, vector<2x128xf32> -> vector<2x128xf32>
    %388 = arith.addf %386, %387 : vector<2x128xf32>
    %389 = vector.broadcast %385 : vector<1x128xf32> to vector<2x128xf32>
    %390 = arith.addf %388, %389 : vector<2x128xf32>
    %391 = arith.negf %390 : vector<2x128xf32>
    %392 = math.exp %391 : vector<2x128xf32>
    %cst_264 = arith.constant 1.000000e+00 : f32
    %393 = vector.broadcast %cst_264 : f32 to vector<2x128xf32>
    %394 = arith.addf %393, %392 : vector<2x128xf32>
    %395 = arith.divf %393, %394 : vector<2x128xf32>
    %396 = math.tanh %390 : vector<2x128xf32>
    %397 = vector.extract_strided_slice %395 {offsets = [0, 0], sizes = [2, 32], strides = [1, 1]} : vector<2x128xf32> to vector<2x32xf32>
    %398 = vector.extract_strided_slice %395 {offsets = [0, 32], sizes = [2, 32], strides = [1, 1]} : vector<2x128xf32> to vector<2x32xf32>
    %399 = vector.extract_strided_slice %396 {offsets = [0, 64], sizes = [2, 32], strides = [1, 1]} : vector<2x128xf32> to vector<2x32xf32>
    %400 = vector.extract_strided_slice %395 {offsets = [0, 96], sizes = [2, 32], strides = [1, 1]} : vector<2x128xf32> to vector<2x32xf32>
    %401 = arith.mulf %398, %382 : vector<2x32xf32>
    %402 = arith.mulf %397, %399 : vector<2x32xf32>
    %403 = arith.addf %401, %402 : vector<2x32xf32>
    %404 = math.tanh %403 : vector<2x32xf32>
    %405 = arith.mulf %400, %404 : vector<2x32xf32>
    %c1_265 = arith.constant 1 : index
    %c0_266 = arith.constant 0 : index
    %c0_267 = arith.constant 0 : index
    %406 = vector.load %arg7[%c1_265, %c0_266, %c0_267] : memref<2x2x32xf32, #tpu.memory_space<vmem>>, vector<1x2x32xf32>
    %407 = vector.shape_cast %406 : vector<1x2x32xf32> to vector<2x32xf32>
    %408 = vector.shape_cast %405 : vector<2x32xf32> to vector<1x2x32xf32>
    tpu.vector_store %arg7[%c1_265, %c0_266, %c0_267], %408 {strides = array<i32>} : memref<2x2x32xf32, #tpu.memory_space<vmem>>, vector<1x2x32xf32>,
    %c1_268 = arith.constant 1 : index
    %c0_269 = arith.constant 0 : index
    %c0_270 = arith.constant 0 : index
    %409 = vector.load %arg8[%c1_268, %c0_269, %c0_270] : memref<2x2x32xf32, #tpu.memory_space<vmem>>, vector<1x2x32xf32>
    %410 = vector.shape_cast %409 : vector<1x2x32xf32> to vector<2x32xf32>
    %411 = vector.shape_cast %403 : vector<2x32xf32> to vector<1x2x32xf32>
    tpu.vector_store %arg8[%c1_268, %c0_269, %c0_270], %411 {strides = array<i32>} : memref<2x2x32xf32, #tpu.memory_space<vmem>>, vector<1x2x32xf32>,
    %c6 = arith.constant 6 : index
    %c0_271 = arith.constant 0 : index
    %c0_272 = arith.constant 0 : index
    %412 = vector.load %arg0[%c6, %c0_271, %c0_272] : memref<8x2x4xf32, #tpu.memory_space<vmem>>, vector<1x2x4xf32>
    %413 = vector.shape_cast %412 : vector<1x2x4xf32> to vector<2x4xf32>
    %c0_273 = arith.constant 0 : index
    %c0_274 = arith.constant 0 : index
    %c0_275 = arith.constant 0 : index
    %414 = vector.load %arg7[%c0_273, %c0_274, %c0_275] : memref<2x2x32xf32, #tpu.memory_space<vmem>>, vector<1x2x32xf32>
    %415 = vector.shape_cast %414 : vector<1x2x32xf32> to vector<2x32xf32>
    %c0_276 = arith.constant 0 : index
    %c0_277 = arith.constant 0 : index
    %c0_278 = arith.constant 0 : index
    %416 = vector.load %arg8[%c0_276, %c0_277, %c0_278] : memref<2x2x32xf32, #tpu.memory_space<vmem>>, vector<1x2x32xf32>
    %417 = vector.shape_cast %416 : vector<1x2x32xf32> to vector<2x32xf32>
    %c0_279 = arith.constant 0 : index
    %c0_280 = arith.constant 0 : index
    %418 = vector.load %arg1[%c0_279, %c0_280] : memref<4x128xf32, #tpu.memory_space<vmem>>, vector<4x128xf32>
    %c0_281 = arith.constant 0 : index
    %c0_282 = arith.constant 0 : index
    %419 = vector.load %arg3[%c0_281, %c0_282] : memref<32x128xf32, #tpu.memory_space<vmem>>, vector<32x128xf32>
    %c0_283 = arith.constant 0 : index
    %c0_284 = arith.constant 0 : index
    %420 = vector.load %arg5[%c0_283, %c0_284] : memref<1x128xf32, #tpu.memory_space<vmem>>, vector<1x128xf32>
    %cst_285 = arith.constant dense<0.000000e+00> : vector<2x128xf32>
    %421 = tpu.matmul %413, %418, %cst_285 {dimension_numbers = #tpu.dot_dimension_numbers<[1], [0], [0], [1], [0, 0, 1, 1], [], []>} : vector<2x4xf32>, vector<4x128xf32>, vector<2x128xf32> -> vector<2x128xf32>
    %cst_286 = arith.constant dense<0.000000e+00> : vector<2x128xf32>
    %422 = tpu.matmul %415, %419, %cst_286 {dimension_numbers = #tpu.dot_dimension_numbers<[1], [0], [0], [1], [0, 0, 1, 1], [], []>} : vector<2x32xf32>, vector<32x128xf32>, vector<2x128xf32> -> vector<2x128xf32>
    %423 = arith.addf %421, %422 : vector<2x128xf32>
    %424 = vector.broadcast %420 : vector<1x128xf32> to vector<2x128xf32>
    %425 = arith.addf %423, %424 : vector<2x128xf32>
    %426 = arith.negf %425 : vector<2x128xf32>
    %427 = math.exp %426 : vector<2x128xf32>
    %cst_287 = arith.constant 1.000000e+00 : f32
    %428 = vector.broadcast %cst_287 : f32 to vector<2x128xf32>
    %429 = arith.addf %428, %427 : vector<2x128xf32>
    %430 = arith.divf %428, %429 : vector<2x128xf32>
    %431 = math.tanh %425 : vector<2x128xf32>
    %432 = vector.extract_strided_slice %430 {offsets = [0, 0], sizes = [2, 32], strides = [1, 1]} : vector<2x128xf32> to vector<2x32xf32>
    %433 = vector.extract_strided_slice %430 {offsets = [0, 32], sizes = [2, 32], strides = [1, 1]} : vector<2x128xf32> to vector<2x32xf32>
    %434 = vector.extract_strided_slice %431 {offsets = [0, 64], sizes = [2, 32], strides = [1, 1]} : vector<2x128xf32> to vector<2x32xf32>
    %435 = vector.extract_strided_slice %430 {offsets = [0, 96], sizes = [2, 32], strides = [1, 1]} : vector<2x128xf32> to vector<2x32xf32>
    %436 = arith.mulf %433, %417 : vector<2x32xf32>
    %437 = arith.mulf %432, %434 : vector<2x32xf32>
    %438 = arith.addf %436, %437 : vector<2x32xf32>
    %439 = math.tanh %438 : vector<2x32xf32>
    %440 = arith.mulf %435, %439 : vector<2x32xf32>
    %c0_288 = arith.constant 0 : index
    %c0_289 = arith.constant 0 : index
    %c0_290 = arith.constant 0 : index
    %441 = vector.load %arg7[%c0_288, %c0_289, %c0_290] : memref<2x2x32xf32, #tpu.memory_space<vmem>>, vector<1x2x32xf32>
    %442 = vector.shape_cast %441 : vector<1x2x32xf32> to vector<2x32xf32>
    %443 = vector.shape_cast %440 : vector<2x32xf32> to vector<1x2x32xf32>
    tpu.vector_store %arg7[%c0_288, %c0_289, %c0_290], %443 {strides = array<i32>} : memref<2x2x32xf32, #tpu.memory_space<vmem>>, vector<1x2x32xf32>,
    %c0_291 = arith.constant 0 : index
    %c0_292 = arith.constant 0 : index
    %c0_293 = arith.constant 0 : index
    %444 = vector.load %arg8[%c0_291, %c0_292, %c0_293] : memref<2x2x32xf32, #tpu.memory_space<vmem>>, vector<1x2x32xf32>
    %445 = vector.shape_cast %444 : vector<1x2x32xf32> to vector<2x32xf32>
    %446 = vector.shape_cast %438 : vector<2x32xf32> to vector<1x2x32xf32>
    tpu.vector_store %arg8[%c0_291, %c0_292, %c0_293], %446 {strides = array<i32>} : memref<2x2x32xf32, #tpu.memory_space<vmem>>, vector<1x2x32xf32>,
    %c1_294 = arith.constant 1 : index
    %c0_295 = arith.constant 0 : index
    %c0_296 = arith.constant 0 : index
    %447 = vector.load %arg7[%c1_294, %c0_295, %c0_296] : memref<2x2x32xf32, #tpu.memory_space<vmem>>, vector<1x2x32xf32>
    %448 = vector.shape_cast %447 : vector<1x2x32xf32> to vector<2x32xf32>
    %c1_297 = arith.constant 1 : index
    %c0_298 = arith.constant 0 : index
    %c0_299 = arith.constant 0 : index
    %449 = vector.load %arg8[%c1_297, %c0_298, %c0_299] : memref<2x2x32xf32, #tpu.memory_space<vmem>>, vector<1x2x32xf32>
    %450 = vector.shape_cast %449 : vector<1x2x32xf32> to vector<2x32xf32>
    %c0_300 = arith.constant 0 : index
    %c0_301 = arith.constant 0 : index
    %451 = vector.load %arg2[%c0_300, %c0_301] : memref<32x128xf32, #tpu.memory_space<vmem>>, vector<32x128xf32>
    %c0_302 = arith.constant 0 : index
    %c0_303 = arith.constant 0 : index
    %452 = vector.load %arg4[%c0_302, %c0_303] : memref<32x128xf32, #tpu.memory_space<vmem>>, vector<32x128xf32>
    %c0_304 = arith.constant 0 : index
    %c0_305 = arith.constant 0 : index
    %453 = vector.load %arg6[%c0_304, %c0_305] : memref<1x128xf32, #tpu.memory_space<vmem>>, vector<1x128xf32>
    %cst_306 = arith.constant dense<0.000000e+00> : vector<2x128xf32>
    %454 = tpu.matmul %440, %451, %cst_306 {dimension_numbers = #tpu.dot_dimension_numbers<[1], [0], [0], [1], [0, 0, 1, 1], [], []>} : vector<2x32xf32>, vector<32x128xf32>, vector<2x128xf32> -> vector<2x128xf32>
    %cst_307 = arith.constant dense<0.000000e+00> : vector<2x128xf32>
    %455 = tpu.matmul %448, %452, %cst_307 {dimension_numbers = #tpu.dot_dimension_numbers<[1], [0], [0], [1], [0, 0, 1, 1], [], []>} : vector<2x32xf32>, vector<32x128xf32>, vector<2x128xf32> -> vector<2x128xf32>
    %456 = arith.addf %454, %455 : vector<2x128xf32>
    %457 = vector.broadcast %453 : vector<1x128xf32> to vector<2x128xf32>
    %458 = arith.addf %456, %457 : vector<2x128xf32>
    %459 = arith.negf %458 : vector<2x128xf32>
    %460 = math.exp %459 : vector<2x128xf32>
    %cst_308 = arith.constant 1.000000e+00 : f32
    %461 = vector.broadcast %cst_308 : f32 to vector<2x128xf32>
    %462 = arith.addf %461, %460 : vector<2x128xf32>
    %463 = arith.divf %461, %462 : vector<2x128xf32>
    %464 = math.tanh %458 : vector<2x128xf32>
    %465 = vector.extract_strided_slice %463 {offsets = [0, 0], sizes = [2, 32], strides = [1, 1]} : vector<2x128xf32> to vector<2x32xf32>
    %466 = vector.extract_strided_slice %463 {offsets = [0, 32], sizes = [2, 32], strides = [1, 1]} : vector<2x128xf32> to vector<2x32xf32>
    %467 = vector.extract_strided_slice %464 {offsets = [0, 64], sizes = [2, 32], strides = [1, 1]} : vector<2x128xf32> to vector<2x32xf32>
    %468 = vector.extract_strided_slice %463 {offsets = [0, 96], sizes = [2, 32], strides = [1, 1]} : vector<2x128xf32> to vector<2x32xf32>
    %469 = arith.mulf %466, %450 : vector<2x32xf32>
    %470 = arith.mulf %465, %467 : vector<2x32xf32>
    %471 = arith.addf %469, %470 : vector<2x32xf32>
    %472 = math.tanh %471 : vector<2x32xf32>
    %473 = arith.mulf %468, %472 : vector<2x32xf32>
    %c1_309 = arith.constant 1 : index
    %c0_310 = arith.constant 0 : index
    %c0_311 = arith.constant 0 : index
    %474 = vector.load %arg7[%c1_309, %c0_310, %c0_311] : memref<2x2x32xf32, #tpu.memory_space<vmem>>, vector<1x2x32xf32>
    %475 = vector.shape_cast %474 : vector<1x2x32xf32> to vector<2x32xf32>
    %476 = vector.shape_cast %473 : vector<2x32xf32> to vector<1x2x32xf32>
    tpu.vector_store %arg7[%c1_309, %c0_310, %c0_311], %476 {strides = array<i32>} : memref<2x2x32xf32, #tpu.memory_space<vmem>>, vector<1x2x32xf32>,
    %c1_312 = arith.constant 1 : index
    %c0_313 = arith.constant 0 : index
    %c0_314 = arith.constant 0 : index
    %477 = vector.load %arg8[%c1_312, %c0_313, %c0_314] : memref<2x2x32xf32, #tpu.memory_space<vmem>>, vector<1x2x32xf32>
    %478 = vector.shape_cast %477 : vector<1x2x32xf32> to vector<2x32xf32>
    %479 = vector.shape_cast %471 : vector<2x32xf32> to vector<1x2x32xf32>
    tpu.vector_store %arg8[%c1_312, %c0_313, %c0_314], %479 {strides = array<i32>} : memref<2x2x32xf32, #tpu.memory_space<vmem>>, vector<1x2x32xf32>,
    %c7 = arith.constant 7 : index
    %c0_315 = arith.constant 0 : index
    %c0_316 = arith.constant 0 : index
    %480 = vector.load %arg0[%c7, %c0_315, %c0_316] : memref<8x2x4xf32, #tpu.memory_space<vmem>>, vector<1x2x4xf32>
    %481 = vector.shape_cast %480 : vector<1x2x4xf32> to vector<2x4xf32>
    %c0_317 = arith.constant 0 : index
    %c0_318 = arith.constant 0 : index
    %c0_319 = arith.constant 0 : index
    %482 = vector.load %arg7[%c0_317, %c0_318, %c0_319] : memref<2x2x32xf32, #tpu.memory_space<vmem>>, vector<1x2x32xf32>
    %483 = vector.shape_cast %482 : vector<1x2x32xf32> to vector<2x32xf32>
    %c0_320 = arith.constant 0 : index
    %c0_321 = arith.constant 0 : index
    %c0_322 = arith.constant 0 : index
    %484 = vector.load %arg8[%c0_320, %c0_321, %c0_322] : memref<2x2x32xf32, #tpu.memory_space<vmem>>, vector<1x2x32xf32>
    %485 = vector.shape_cast %484 : vector<1x2x32xf32> to vector<2x32xf32>
    %c0_323 = arith.constant 0 : index
    %c0_324 = arith.constant 0 : index
    %486 = vector.load %arg1[%c0_323, %c0_324] : memref<4x128xf32, #tpu.memory_space<vmem>>, vector<4x128xf32>
    %c0_325 = arith.constant 0 : index
    %c0_326 = arith.constant 0 : index
    %487 = vector.load %arg3[%c0_325, %c0_326] : memref<32x128xf32, #tpu.memory_space<vmem>>, vector<32x128xf32>
    %c0_327 = arith.constant 0 : index
    %c0_328 = arith.constant 0 : index
    %488 = vector.load %arg5[%c0_327, %c0_328] : memref<1x128xf32, #tpu.memory_space<vmem>>, vector<1x128xf32>
    %cst_329 = arith.constant dense<0.000000e+00> : vector<2x128xf32>
    %489 = tpu.matmul %481, %486, %cst_329 {dimension_numbers = #tpu.dot_dimension_numbers<[1], [0], [0], [1], [0, 0, 1, 1], [], []>} : vector<2x4xf32>, vector<4x128xf32>, vector<2x128xf32> -> vector<2x128xf32>
    %cst_330 = arith.constant dense<0.000000e+00> : vector<2x128xf32>
    %490 = tpu.matmul %483, %487, %cst_330 {dimension_numbers = #tpu.dot_dimension_numbers<[1], [0], [0], [1], [0, 0, 1, 1], [], []>} : vector<2x32xf32>, vector<32x128xf32>, vector<2x128xf32> -> vector<2x128xf32>
    %491 = arith.addf %489, %490 : vector<2x128xf32>
    %492 = vector.broadcast %488 : vector<1x128xf32> to vector<2x128xf32>
    %493 = arith.addf %491, %492 : vector<2x128xf32>
    %494 = arith.negf %493 : vector<2x128xf32>
    %495 = math.exp %494 : vector<2x128xf32>
    %cst_331 = arith.constant 1.000000e+00 : f32
    %496 = vector.broadcast %cst_331 : f32 to vector<2x128xf32>
    %497 = arith.addf %496, %495 : vector<2x128xf32>
    %498 = arith.divf %496, %497 : vector<2x128xf32>
    %499 = math.tanh %493 : vector<2x128xf32>
    %500 = vector.extract_strided_slice %498 {offsets = [0, 0], sizes = [2, 32], strides = [1, 1]} : vector<2x128xf32> to vector<2x32xf32>
    %501 = vector.extract_strided_slice %498 {offsets = [0, 32], sizes = [2, 32], strides = [1, 1]} : vector<2x128xf32> to vector<2x32xf32>
    %502 = vector.extract_strided_slice %499 {offsets = [0, 64], sizes = [2, 32], strides = [1, 1]} : vector<2x128xf32> to vector<2x32xf32>
    %503 = vector.extract_strided_slice %498 {offsets = [0, 96], sizes = [2, 32], strides = [1, 1]} : vector<2x128xf32> to vector<2x32xf32>
    %504 = arith.mulf %501, %485 : vector<2x32xf32>
    %505 = arith.mulf %500, %502 : vector<2x32xf32>
    %506 = arith.addf %504, %505 : vector<2x32xf32>
    %507 = math.tanh %506 : vector<2x32xf32>
    %508 = arith.mulf %503, %507 : vector<2x32xf32>
    %c0_332 = arith.constant 0 : index
    %c0_333 = arith.constant 0 : index
    %c0_334 = arith.constant 0 : index
    %509 = vector.load %arg7[%c0_332, %c0_333, %c0_334] : memref<2x2x32xf32, #tpu.memory_space<vmem>>, vector<1x2x32xf32>
    %510 = vector.shape_cast %509 : vector<1x2x32xf32> to vector<2x32xf32>
    %511 = vector.shape_cast %508 : vector<2x32xf32> to vector<1x2x32xf32>
    tpu.vector_store %arg7[%c0_332, %c0_333, %c0_334], %511 {strides = array<i32>} : memref<2x2x32xf32, #tpu.memory_space<vmem>>, vector<1x2x32xf32>,
    %c0_335 = arith.constant 0 : index
    %c0_336 = arith.constant 0 : index
    %c0_337 = arith.constant 0 : index
    %512 = vector.load %arg8[%c0_335, %c0_336, %c0_337] : memref<2x2x32xf32, #tpu.memory_space<vmem>>, vector<1x2x32xf32>
    %513 = vector.shape_cast %512 : vector<1x2x32xf32> to vector<2x32xf32>
    %514 = vector.shape_cast %506 : vector<2x32xf32> to vector<1x2x32xf32>
    tpu.vector_store %arg8[%c0_335, %c0_336, %c0_337], %514 {strides = array<i32>} : memref<2x2x32xf32, #tpu.memory_space<vmem>>, vector<1x2x32xf32>,
    %c1_338 = arith.constant 1 : index
    %c0_339 = arith.constant 0 : index
    %c0_340 = arith.constant 0 : index
    %515 = vector.load %arg7[%c1_338, %c0_339, %c0_340] : memref<2x2x32xf32, #tpu.memory_space<vmem>>, vector<1x2x32xf32>
    %516 = vector.shape_cast %515 : vector<1x2x32xf32> to vector<2x32xf32>
    %c1_341 = arith.constant 1 : index
    %c0_342 = arith.constant 0 : index
    %c0_343 = arith.constant 0 : index
    %517 = vector.load %arg8[%c1_341, %c0_342, %c0_343] : memref<2x2x32xf32, #tpu.memory_space<vmem>>, vector<1x2x32xf32>
    %518 = vector.shape_cast %517 : vector<1x2x32xf32> to vector<2x32xf32>
    %c0_344 = arith.constant 0 : index
    %c0_345 = arith.constant 0 : index
    %519 = vector.load %arg2[%c0_344, %c0_345] : memref<32x128xf32, #tpu.memory_space<vmem>>, vector<32x128xf32>
    %c0_346 = arith.constant 0 : index
    %c0_347 = arith.constant 0 : index
    %520 = vector.load %arg4[%c0_346, %c0_347] : memref<32x128xf32, #tpu.memory_space<vmem>>, vector<32x128xf32>
    %c0_348 = arith.constant 0 : index
    %c0_349 = arith.constant 0 : index
    %521 = vector.load %arg6[%c0_348, %c0_349] : memref<1x128xf32, #tpu.memory_space<vmem>>, vector<1x128xf32>
    %cst_350 = arith.constant dense<0.000000e+00> : vector<2x128xf32>
    %522 = tpu.matmul %508, %519, %cst_350 {dimension_numbers = #tpu.dot_dimension_numbers<[1], [0], [0], [1], [0, 0, 1, 1], [], []>} : vector<2x32xf32>, vector<32x128xf32>, vector<2x128xf32> -> vector<2x128xf32>
    %cst_351 = arith.constant dense<0.000000e+00> : vector<2x128xf32>
    %523 = tpu.matmul %516, %520, %cst_351 {dimension_numbers = #tpu.dot_dimension_numbers<[1], [0], [0], [1], [0, 0, 1, 1], [], []>} : vector<2x32xf32>, vector<32x128xf32>, vector<2x128xf32> -> vector<2x128xf32>
    %524 = arith.addf %522, %523 : vector<2x128xf32>
    %525 = vector.broadcast %521 : vector<1x128xf32> to vector<2x128xf32>
    %526 = arith.addf %524, %525 : vector<2x128xf32>
    %527 = arith.negf %526 : vector<2x128xf32>
    %528 = math.exp %527 : vector<2x128xf32>
    %cst_352 = arith.constant 1.000000e+00 : f32
    %529 = vector.broadcast %cst_352 : f32 to vector<2x128xf32>
    %530 = arith.addf %529, %528 : vector<2x128xf32>
    %531 = arith.divf %529, %530 : vector<2x128xf32>
    %532 = math.tanh %526 : vector<2x128xf32>
    %533 = vector.extract_strided_slice %531 {offsets = [0, 0], sizes = [2, 32], strides = [1, 1]} : vector<2x128xf32> to vector<2x32xf32>
    %534 = vector.extract_strided_slice %531 {offsets = [0, 32], sizes = [2, 32], strides = [1, 1]} : vector<2x128xf32> to vector<2x32xf32>
    %535 = vector.extract_strided_slice %532 {offsets = [0, 64], sizes = [2, 32], strides = [1, 1]} : vector<2x128xf32> to vector<2x32xf32>
    %536 = vector.extract_strided_slice %531 {offsets = [0, 96], sizes = [2, 32], strides = [1, 1]} : vector<2x128xf32> to vector<2x32xf32>
    %537 = arith.mulf %534, %518 : vector<2x32xf32>
    %538 = arith.mulf %533, %535 : vector<2x32xf32>
    %539 = arith.addf %537, %538 : vector<2x32xf32>
    %540 = math.tanh %539 : vector<2x32xf32>
    %541 = arith.mulf %536, %540 : vector<2x32xf32>
    %c1_353 = arith.constant 1 : index
    %c0_354 = arith.constant 0 : index
    %c0_355 = arith.constant 0 : index
    %542 = vector.load %arg7[%c1_353, %c0_354, %c0_355] : memref<2x2x32xf32, #tpu.memory_space<vmem>>, vector<1x2x32xf32>
    %543 = vector.shape_cast %542 : vector<1x2x32xf32> to vector<2x32xf32>
    %544 = vector.shape_cast %541 : vector<2x32xf32> to vector<1x2x32xf32>
    tpu.vector_store %arg7[%c1_353, %c0_354, %c0_355], %544 {strides = array<i32>} : memref<2x2x32xf32, #tpu.memory_space<vmem>>, vector<1x2x32xf32>,
    %c1_356 = arith.constant 1 : index
    %c0_357 = arith.constant 0 : index
    %c0_358 = arith.constant 0 : index
    %545 = vector.load %arg8[%c1_356, %c0_357, %c0_358] : memref<2x2x32xf32, #tpu.memory_space<vmem>>, vector<1x2x32xf32>
    %546 = vector.shape_cast %545 : vector<1x2x32xf32> to vector<2x32xf32>
    %547 = vector.shape_cast %539 : vector<2x32xf32> to vector<1x2x32xf32>
    tpu.vector_store %arg8[%c1_356, %c0_357, %c0_358], %547 {strides = array<i32>} : memref<2x2x32xf32, #tpu.memory_space<vmem>>, vector<1x2x32xf32>,
    return
  }
}

</mosaic_0001>

<llo_original>
// kernel: desc_seq2seq_forward.3
$region0: #{desc_seq2seq_forward.3}
  #allocation0 [shape = 'u32[]', space=smem, size = 0x4, offset = 0x4, fixed_abs, tag = 'smem constant byte address 0x4 - core index']
  #allocation1 [shape = 'u32[72,128]{1,0:T(1,128)}', space=vmem, size = 0x9000, scoped, tag = 'internal scratch']
  #allocation2 [shape = 'f32[2,2,32]{2,1,0:T(2,128)}', space=vmem, size = 0x800, scoped, tag = 'scratch operand']
  #allocation3 [shape = 'f32[2,2,32]{2,1,0:T(2,128)}', space=vmem, size = 0x800, scoped, tag = 'scratch operand']
  #allocation4 [shape = 'f32[1,1]{1,0:T(1,128)S(1)}', space=vmem, size = 0x200, scoped, tag = 'scoped memory for desc_seq2seq_forward.3']
  %s0 = inlined_call_operand.vmem [shape: f32[4,1,1], index: 0, kind: input, shape index: {}]
  %s1 = inlined_call_operand.vmem [shape: f32[2,1], index: 1, kind: input, shape index: {}]
  %s2 = inlined_call_operand.vmem [shape: f32[2,2,32], index: 2, kind: input, shape index: {}]
  %s3 = inlined_call_operand.vmem [shape: f32[2,2,32], index: 3, kind: input, shape index: {}]
  %s4 = inlined_call_operand.vmem [shape: f32[4,2,1], index: 4, kind: input, shape index: {}]
  %s5 = inlined_call_operand.vmem [shape: f32[1,128], index: 5, kind: input, shape index: {}]
  %s6 = inlined_call_operand.vmem [shape: f32[32,128], index: 6, kind: input, shape index: {}]
  %s7 = inlined_call_operand.hbm [shape: f32[32,128], index: 7, kind: input, shape index: {}]
  %s8 = inlined_call_operand.hbm [shape: f32[32,128], index: 8, kind: input, shape index: {}]
  %s9 = inlined_call_operand.vmem [shape: f32[1,128], index: 9, kind: input, shape index: {}]
  %s10 = inlined_call_operand.vmem [shape: f32[1,128], index: 10, kind: input, shape index: {}]
  %s11 = inlined_call_operand.vmem [shape: f32[32,1], index: 11, kind: input, shape index: {}]
  %s12 = inlined_call_operand.<no memory space> [shape: f32[1,1], index: 12, kind: input, shape index: {}]
  %s13 = inlined_call_operand.vmem [shape: f32[4,2,1], index: 13, kind: output, shape index: {}]
  %s14 = sld [smem:[#allocation0]]
  $region70: #{desc_seq2seq_forward.3} parent=0
    _
  %s16 = ssub.s32 1, %s14
  %s17 = scalar_select 0, %s16, %s14
  %v18 = vstv %s12
  %19 = vst [vmem:[#allocation4] sm:$0x1] %v18
  $region1: #{desc_seq2seq_forward.3} parent=0
    #allocation5 [shape = 'u8[16384]{0}', space=vmem, size = 0x4000, scoped, tag = 'input window, operand 7, single buffered']
    #allocation6 [shape = 's32[1]{0}', space=sflag, size = 0x4, scoped, tag = 'scoped memory for desc_seq2seq_forward.3']
    #allocation7 [shape = 'u8[16384]{0}', space=vmem, size = 0x4000, scoped, tag = 'input window, operand 8, single buffered']
    #allocation8 [shape = 's32[1]{0}', space=sflag, size = 0x4, scoped, tag = 'scoped memory for desc_seq2seq_forward.3']
    %20 = vsyncpa [#allocation6], 0
    %21 = vsyncpa [#allocation8], 0
    // Predicated region
    $region2: #{desc_seq2seq_forward.3} parent=1 // pred_check
      _
    $region3: #{desc_seq2seq_forward.3} parent=1 // pred_check_branch
      %23 = sbr.rel (0) target = $region5
    $region4: #{desc_seq2seq_forward.3} parent=1 // pred_region
      _
    $region5: #{desc_seq2seq_forward.3} parent=1 // pred_fallthru
      _
    // Predicated region
    $region6: #{desc_seq2seq_forward.3} parent=1 // pred_check
      _
    $region7: #{desc_seq2seq_forward.3} parent=1 // pred_check_branch
      %25 = sbr.rel (0) target = $region9
    $region8: #{desc_seq2seq_forward.3} parent=1 // pred_region
      _
    $region9: #{desc_seq2seq_forward.3} parent=1 // pred_fallthru
      _
    // Predicated region
    $region10: #{desc_seq2seq_forward.3} parent=1 // pred_check
      _
    $region11: #{desc_seq2seq_forward.3} parent=1 // pred_check_branch
      %27 = sbr.rel (0) target = $region13
    $region12: #{desc_seq2seq_forward.3} parent=1 // pred_region
      _
    $region13: #{desc_seq2seq_forward.3} parent=1 // pred_fallthru
      _
    // Predicated region
    $region14: #{desc_seq2seq_forward.3} parent=1 // pred_check
      _
    $region15: #{desc_seq2seq_forward.3} parent=1 // pred_check_branch
      %29 = sbr.rel (0) target = $region17
    $region16: #{desc_seq2seq_forward.3} parent=1 // pred_region
      _
    $region17: #{desc_seq2seq_forward.3} parent=1 // pred_fallthru
      _
    // Predicated region
    $region18: #{desc_seq2seq_forward.3} parent=1 // pred_check
      _
    $region19: #{desc_seq2seq_forward.3} parent=1 // pred_check_branch
      %31 = sbr.rel (0) target = $region21
    $region20: #{desc_seq2seq_forward.3} parent=1 // pred_region
      _
    $region21: #{desc_seq2seq_forward.3} parent=1 // pred_fallthru
      _
    // Predicated region
    $region22: #{desc_seq2seq_forward.3} parent=1 // pred_check
      _
    $region23: #{desc_seq2seq_forward.3} parent=1 // pred_check_branch
      %33 = sbr.rel (0) target = $region25
    $region24: #{desc_seq2seq_forward.3} parent=1 // pred_region
      _
    $region25: #{desc_seq2seq_forward.3} parent=1 // pred_fallthru
      _
    // Predicated region
    $region26: #{desc_seq2seq_forward.3} parent=1 // pred_check
      _
    $region27: #{desc_seq2seq_forward.3} parent=1 // pred_check_branch
      %35 = sbr.rel (0) target = $region29
    $region28: #{desc_seq2seq_forward.3} parent=1 // pred_region
      _
    $region29: #{desc_seq2seq_forward.3} parent=1 // pred_fallthru
      _
    // Predicated region
    $region30: #{desc_seq2seq_forward.3} parent=1 // pred_check
      _
    $region31: #{desc_seq2seq_forward.3} parent=1 // pred_check_branch
      %37 = sbr.rel (0) target = $region33
    $region32: #{desc_seq2seq_forward.3} parent=1 // pred_region
      %39 = vsyncadd [#allocation6], 0
      %s40 = sshll.u32 %s7, 4
      %s41 = int_to_ptr.hbm [resolvable:$true] %s40
      %s42 = sshll.u32 [#allocation5], 4
      %s43 = int_to_ptr.vmem [resolvable:$true] %s42
      %48 = dma.hbm_to_vmem [thread:$0]  %s41, 512, %s43, [#allocation6], 128, 128, 8
    $region33: #{desc_seq2seq_forward.3} parent=1 // pred_fallthru
      _
    // Predicated region
    $region34: #{desc_seq2seq_forward.3} parent=1 // pred_check
      _
    $region35: #{desc_seq2seq_forward.3} parent=1 // pred_check_branch
      %50 = sbr.rel (0) target = $region37
    $region36: #{desc_seq2seq_forward.3} parent=1 // pred_region
      %52 = vsyncadd [#allocation8], 0
      %s53 = sshll.u32 %s8, 4
      %s54 = int_to_ptr.hbm [resolvable:$true] %s53
      %s55 = sshll.u32 [#allocation7], 4
      %s56 = int_to_ptr.vmem [resolvable:$true] %s55
      %61 = dma.hbm_to_vmem [thread:$0]  %s54, 512, %s56, [#allocation8], 128, 128, 8
    $region37: #{desc_seq2seq_forward.3} parent=1 // pred_fallthru
      _
    // Predicated region
    $region38: #{desc_seq2seq_forward.3} parent=1 // pred_check
      _
    $region39: #{desc_seq2seq_forward.3} parent=1 // pred_check_branch
      %63 = sbr.rel (0) target = $region41
    $region40: #{desc_seq2seq_forward.3} parent=1 // pred_region
      _
    $region41: #{desc_seq2seq_forward.3} parent=1 // pred_fallthru
      _
    // Predicated region
    $region42: #{desc_seq2seq_forward.3} parent=1 // pred_check
      _
    $region43: #{desc_seq2seq_forward.3} parent=1 // pred_check_branch
      %65 = sbr.rel (0) target = $region45
    $region44: #{desc_seq2seq_forward.3} parent=1 // pred_region
      _
    $region45: #{desc_seq2seq_forward.3} parent=1 // pred_fallthru
      _
    // Predicated region
    $region46: #{desc_seq2seq_forward.3} parent=1 // pred_check
      _
    $region47: #{desc_seq2seq_forward.3} parent=1 // pred_check_branch
      %67 = sbr.rel (0) target = $region49
    $region48: #{desc_seq2seq_forward.3} parent=1 // pred_region
      _
    $region49: #{desc_seq2seq_forward.3} parent=1 // pred_fallthru
      _
    // Predicated region
    $region50: #{desc_seq2seq_forward.3} parent=1 // pred_check
      _
    $region51: #{desc_seq2seq_forward.3} parent=1 // pred_check_branch
      %69 = sbr.rel (0) target = $region53
    $region52: #{desc_seq2seq_forward.3} parent=1 // pred_region
      _
    $region53: #{desc_seq2seq_forward.3} parent=1 // pred_fallthru
      _
    // Predicated region
    $region54: #{desc_seq2seq_forward.3} parent=1 // pred_check
      _
    $region55: #{desc_seq2seq_forward.3} parent=1 // pred_check_branch
      %71 = sbr.rel (0) target = $region57
    $region56: #{desc_seq2seq_forward.3} parent=1 // pred_region
      %73 = dma.done [#allocation6], 512
    $region57: #{desc_seq2seq_forward.3} parent=1 // pred_fallthru
      _
    // Predicated region
    $region58: #{desc_seq2seq_forward.3} parent=1 // pred_check
      _
    $region59: #{desc_seq2seq_forward.3} parent=1 // pred_check_branch
      %75 = sbr.rel (0) target = $region61
    $region60: #{desc_seq2seq_forward.3} parent=1 // pred_region
      %77 = dma.done [#allocation8], 512
    $region61: #{desc_seq2seq_forward.3} parent=1 // pred_fallthru
      _
    %v78 = vld [vmem:[%s2] sm:$0x3]
    %v79 = vld [vmem:[%s2 + $0x2] sm:$0x3]
    %vm80 = vcmask 254976
    %81 = vst.msk [vmem:[#allocation2] sm:$0x3] %vm80, %v78
    %82 = vst.msk [vmem:[#allocation2 + $0x2] sm:$0x3] %vm80, %v79
    %v83 = vld [vmem:[%s3] sm:$0x3]
    %v84 = vld [vmem:[%s3 + $0x2] sm:$0x3]
    %85 = vst.msk [vmem:[#allocation3] sm:$0x3] %vm80, %v83
    %86 = vst.msk [vmem:[#allocation3 + $0x2] sm:$0x3] %vm80, %v84
    %v87 = vld [vmem:[%s1] sm:$0x3]
    %v88 = vld [vmem:[#allocation2] sm:$0x3]
    %v89 = vld [vmem:[#allocation3] sm:$0x3]
    %v90 = vld [vmem:[%s5] sm:$0x1]
    %v91 = vld [vmem:[#allocation5] sm:$0xff]
    %v92 = vld [vmem:[#allocation5 + $0x8] sm:$0xff]
    %v93 = vld [vmem:[#allocation5 + $0x10] sm:$0xff]
    %v94 = vld [vmem:[#allocation5 + $0x18] sm:$0xff]
    %v95 = vld [vmem:[%s9] sm:$0x1]
    %vm96 = vcmask 261120
    %v98 = vsel %vm96, %v88, 0
    %100 = vmatpush.msra.mxu0 0.0
    %101 = vmatpush.msra.mxu0 0.0
    %102 = vmatpush.msra.mxu0 0.0
    %103 = vmatpush.msra.mxu0 0.0
    %104 = vmatpush.msra.mxu0 0.0
    %105 = vmatpush.msra.mxu0 0.0
    %106 = vmatpush.msra.mxu0 0.0
    %107 = vmatpush.msra.mxu0 0.0
    %108 = vmatpush.msra.mxu0 0.0
    %109 = vmatpush.msra.mxu0 0.0
    %110 = vmatpush.msra.mxu0 0.0
    %111 = vmatpush.msra.mxu0 0.0
    %112 = vmatpush.msra.mxu0 %v94
    %113 = vmatpush.msra.mxu0 %v93
    %114 = vmatpush.msra.mxu0 %v92
    %115 = vmatpush.msra.mxu0 %v91
    %116 = vmatmul.f32.gmra.mxu0 %v98
    %v117 = vpop.f32.mrf.mxu0
    %v118 = vadd.f32 0.0, %v117
    %119 = vdwg.mxu0
    %vm120 = vcmask 7168
    %v122 = vsel %vm120, %v87, 0
    %vm124 = vcmask 1040384
    %v126 = vsel %vm124, %v90, 0
    %128 = vmatpush.msra.mxu0 0.0
    %129 = vmatpush.msra.mxu0 0.0
    %130 = vmatpush.msra.mxu0 0.0
    %131 = vmatpush.msra.mxu0 0.0
    %132 = vmatpush.msra.mxu0 0.0
    %133 = vmatpush.msra.mxu0 0.0
    %134 = vmatpush.msra.mxu0 0.0
    %135 = vmatpush.msra.mxu0 0.0
    %136 = vmatpush.msra.mxu0 0.0
    %137 = vmatpush.msra.mxu0 0.0
    %138 = vmatpush.msra.mxu0 0.0
    %139 = vmatpush.msra.mxu0 0.0
    %140 = vmatpush.msra.mxu0 0.0
    %141 = vmatpush.msra.mxu0 0.0
    %142 = vmatpush.msra.mxu0 0.0
    %143 = vmatpush.msra.mxu0 %v126
    %144 = vmatmul.f32.gmra.mxu0 %v122
    %v145 = vpop.f32.mrf.mxu0
    %v146 = vadd.f32 %v118, %v145
    %147 = vdwg.mxu0
    %v149 = vperm.slane %v95, 0
    %v151 = vadd.f32 %v146, %v149
    %v152 = vxor.u32 %v151, 2147483648
    %v153 = vmul.f32 %v152, 1.442695
    %v154 = vpow.pop %v153
    %v155 = vadd.f32 %v154, 1.0
    %v156 = vrcp.pop %v155
    %v157 = vmul.f32 %v155, %v156
    %v158 = vsub.f32 1.0, %v157
    %v159 = vmul.f32 %v156, %v158
    %v160 = vadd.f32 %v156, %v159
    %vm161 = vweird.f32 %v155
    %vm162 = vweird.f32 %v156
    %vm163 = vmor %vm161, %vm162
    %v164 = vsel %vm163, %v156, %v160
    %v165 = vand.u32 2147483647, %v155
    %vm166 = vcmp.eq.f32.partialorder %v165, 8.507059e+37
    %v167 = vand.u32 %v155, 2147483648
    %v168 = vor.u32 1.1754944e-38, %v167
    %v169 = vsel %vm166, %v168, %v164
    %v170 = vmul.f32 1.0, %v169
    %v171 = vtanh.pop %v151
    %173 = vrot.lane.b32.xlu0 %v89, 32
    %v174 = vpop.permute.xlu0 %173
    %v176 = vmul.f32 %v170, %v174
    %178 = vrot.lane.b32.xlu0 %v171, 64
    %v179 = vpop.permute.xlu0 %178
    %v181 = vmul.f32 %v170, %v179
    %183 = vrot.lane.b32.xlu0 %v181, 32
    %v184 = vpop.permute.xlu0 %183
    %v186 = vadd.f32 %v176, %v184
    %v187 = vtanh.pop %v186
    %189 = vrot.lane.b32.xlu0 %v187, 64
    %v190 = vpop.permute.xlu0 %189
    %v192 = vmul.f32 %v170, %v190
    %194 = vrot.lane.b32.xlu0 %v192, 32
    %v195 = vpop.permute.xlu0 %194
    %197 = vst.msk [vmem:[#allocation2] sm:$0x3] %vm80, %v195
    %199 = vrot.lane.b32.xlu0 %v186, 96
    %v200 = vpop.permute.xlu0 %199
    %202 = vst.msk [vmem:[#allocation3] sm:$0x3] %vm80, %v200
    %s203 = scalar_lea.vmem [#allocation2], 2
    %v204 = vld [vmem:[%s203] sm:$0x3]
    %s205 = scalar_lea.vmem [#allocation3], 2
    %v206 = vld [vmem:[%s205] sm:$0x3]
    %v207 = vld [vmem:[%s6] sm:$0xff]
    %v208 = vld [vmem:[%s6 + $0x8] sm:$0xff]
    %v209 = vld [vmem:[%s6 + $0x10] sm:$0xff]
    %v210 = vld [vmem:[%s6 + $0x18] sm:$0xff]
    %v211 = vld [vmem:[#allocation7] sm:$0xff]
    %v212 = vld [vmem:[#allocation7 + $0x8] sm:$0xff]
    %v213 = vld [vmem:[#allocation7 + $0x10] sm:$0xff]
    %v214 = vld [vmem:[#allocation7 + $0x18] sm:$0xff]
    %v215 = vld [vmem:[%s10] sm:$0x1]
    %v217 = vsel %vm96, %v204, 0
    %219 = vmatpush.msra.mxu0 0.0
    %220 = vmatpush.msra.mxu0 0.0
    %221 = vmatpush.msra.mxu0 0.0
    %222 = vmatpush.msra.mxu0 0.0
    %223 = vmatpush.msra.mxu0 0.0
    %224 = vmatpush.msra.mxu0 0.0
    %225 = vmatpush.msra.mxu0 0.0
    %226 = vmatpush.msra.mxu0 0.0
    %227 = vmatpush.msra.mxu0 0.0
    %228 = vmatpush.msra.mxu0 0.0
    %229 = vmatpush.msra.mxu0 0.0
    %230 = vmatpush.msra.mxu0 0.0
    %231 = vmatpush.msra.mxu0 %v214
    %232 = vmatpush.msra.mxu0 %v213
    %233 = vmatpush.msra.mxu0 %v212
    %234 = vmatpush.msra.mxu0 %v211
    %235 = vmatmul.f32.gmra.mxu0 %v217
    %v236 = vpop.f32.mrf.mxu0
    %v237 = vadd.f32 0.0, %v236
    %238 = vdwg.mxu0
    %v239 = vsel %vm96, %v195, 0
    %241 = vmatpush.msra.mxu0 0.0
    %242 = vmatpush.msra.mxu0 0.0
    %243 = vmatpush.msra.mxu0 0.0
    %244 = vmatpush.msra.mxu0 0.0
    %245 = vmatpush.msra.mxu0 0.0
    %246 = vmatpush.msra.mxu0 0.0
    %247 = vmatpush.msra.mxu0 0.0
    %248 = vmatpush.msra.mxu0 0.0
    %249 = vmatpush.msra.mxu0 0.0
    %250 = vmatpush.msra.mxu0 0.0
    %251 = vmatpush.msra.mxu0 0.0
    %252 = vmatpush.msra.mxu0 0.0
    %253 = vmatpush.msra.mxu0 %v210
    %254 = vmatpush.msra.mxu0 %v209
    %255 = vmatpush.msra.mxu0 %v208
    %256 = vmatpush.msra.mxu0 %v207
    %257 = vmatmul.f32.gmra.mxu0 %v239
    %v258 = vpop.f32.mrf.mxu0
    %v259 = vadd.f32 %v237, %v258
    %260 = vdwg.mxu0
    %v262 = vperm.slane %v215, 0
    %v264 = vadd.f32 %v259, %v262
    %v265 = vxor.u32 %v264, 2147483648
    %v266 = vmul.f32 %v265, 1.442695
    %v267 = vpow.pop %v266
    %v268 = vadd.f32 %v267, 1.0
    %v269 = vrcp.pop %v268
    %v270 = vmul.f32 %v268, %v269
    %v271 = vsub.f32 1.0, %v270
    %v272 = vmul.f32 %v269, %v271
    %v273 = vadd.f32 %v269, %v272
    %vm274 = vweird.f32 %v268
    %vm275 = vweird.f32 %v269
    %vm276 = vmor %vm274, %vm275
    %v277 = vsel %vm276, %v269, %v273
    %v278 = vand.u32 2147483647, %v268
    %vm279 = vcmp.eq.f32.partialorder %v278, 8.507059e+37
    %v280 = vand.u32 %v268, 2147483648
    %v281 = vor.u32 1.1754944e-38, %v280
    %v282 = vsel %vm279, %v281, %v277
    %v283 = vmul.f32 1.0, %v282
    %v284 = vtanh.pop %v264
    %286 = vrot.lane.b32.xlu0 %v206, 32
    %v287 = vpop.permute.xlu0 %286
    %v289 = vmul.f32 %v283, %v287
    %291 = vrot.lane.b32.xlu0 %v284, 64
    %v292 = vpop.permute.xlu0 %291
    %v294 = vmul.f32 %v283, %v292
    %296 = vrot.lane.b32.xlu0 %v294, 32
    %v297 = vpop.permute.xlu0 %296
    %v299 = vadd.f32 %v289, %v297
    %v300 = vtanh.pop %v299
    %302 = vrot.lane.b32.xlu0 %v300, 64
    %v303 = vpop.permute.xlu0 %302
    %v305 = vmul.f32 %v283, %v303
    %307 = vrot.lane.b32.xlu0 %v305, 32
    %v308 = vpop.permute.xlu0 %307
    %310 = vst.msk [vmem:[%s203] sm:$0x3] %vm80, %v308
    %312 = vrot.lane.b32.xlu0 %v299, 96
    %v313 = vpop.permute.xlu0 %312
    %315 = vst.msk [vmem:[%s205] sm:$0x3] %vm80, %v313
    %v316 = vld [vmem:[%s11] sm:$0xff]
    %v317 = vld [vmem:[%s11 + $0x8] sm:$0xff]
    %v318 = vld [vmem:[%s11 + $0x10] sm:$0xff]
    %v319 = vld [vmem:[%s11 + $0x18] sm:$0xff]
    %v320 = vld [vmem:[#allocation4] sm:$0x1]
    %v322 = vperm.slane %v320, 0
    %v324 = vsel %vm96, %v308, 0
    %326 = vmatpush.msra.mxu0 0.0
    %327 = vmatpush.msra.mxu0 0.0
    %328 = vmatpush.msra.mxu0 0.0
    %329 = vmatpush.msra.mxu0 0.0
    %330 = vmatpush.msra.mxu0 0.0
    %331 = vmatpush.msra.mxu0 0.0
    %332 = vmatpush.msra.mxu0 0.0
    %333 = vmatpush.msra.mxu0 0.0
    %334 = vmatpush.msra.mxu0 0.0
    %335 = vmatpush.msra.mxu0 0.0
    %336 = vmatpush.msra.mxu0 0.0
    %337 = vmatpush.msra.mxu0 0.0
    %338 = vmatpush.msra.mxu0 %v319
    %339 = vmatpush.msra.mxu0 %v318
    %340 = vmatpush.msra.mxu0 %v317
    %341 = vmatpush.msra.mxu0 %v316
    %342 = vmatmul.f32.gmra.mxu0 %v324
    %v343 = vpop.f32.mrf.mxu0
    %v344 = vadd.f32 %v322, %v343
    %345 = vdwg.mxu0
    %vm346 = vcmask 1024
    %347 = vst.msk [vmem:[%s13] sm:$0x3] %vm346, %v344
    %v348 = vld [vmem:[%s0] sm:$0x1]
    %s349 = scalar_lea.vmem %s4, 2
    %v350 = vld [vmem:[%s349] sm:$0x3]
    %v352 = vperm.slane %v348, 0
    %v354 = vmul.f32 %v352, %v350
    %v355 = vsub.f32 1.0, %v348
    %v357 = vperm.slane %v355, 0
    %v359 = vmul.f32 %v357, %v344
    %v360 = vadd.f32 %v354, %v359
    %v361 = vld [vmem:[#allocation2] sm:$0x3]
    %v362 = vld [vmem:[#allocation3] sm:$0x3]
    %v363 = vld [vmem:[%s5] sm:$0x1]
    %v364 = vld [vmem:[#allocation5] sm:$0xff]
    %v365 = vld [vmem:[#allocation5 + $0x8] sm:$0xff]
    %v366 = vld [vmem:[#allocation5 + $0x10] sm:$0xff]
    %v367 = vld [vmem:[#allocation5 + $0x18] sm:$0xff]
    %v368 = vld [vmem:[%s9] sm:$0x1]
    %v370 = vsel %vm96, %v361, 0
    %372 = vmatpush.msra.mxu0 0.0
    %373 = vmatpush.msra.mxu0 0.0
    %374 = vmatpush.msra.mxu0 0.0
    %375 = vmatpush.msra.mxu0 0.0
    %376 = vmatpush.msra.mxu0 0.0
    %377 = vmatpush.msra.mxu0 0.0
    %378 = vmatpush.msra.mxu0 0.0
    %379 = vmatpush.msra.mxu0 0.0
    %380 = vmatpush.msra.mxu0 0.0
    %381 = vmatpush.msra.mxu0 0.0
    %382 = vmatpush.msra.mxu0 0.0
    %383 = vmatpush.msra.mxu0 0.0
    %384 = vmatpush.msra.mxu0 %v367
    %385 = vmatpush.msra.mxu0 %v366
    %386 = vmatpush.msra.mxu0 %v365
    %387 = vmatpush.msra.mxu0 %v364
    %388 = vmatmul.f32.gmra.mxu0 %v370
    %v389 = vpop.f32.mrf.mxu0
    %v390 = vadd.f32 0.0, %v389
    %391 = vdwg.mxu0
    %v393 = vsel %vm120, %v360, 0
    %v396 = vsel %vm124, %v363, 0
    %398 = vmatpush.msra.mxu0 0.0
    %399 = vmatpush.msra.mxu0 0.0
    %400 = vmatpush.msra.mxu0 0.0
    %401 = vmatpush.msra.mxu0 0.0
    %402 = vmatpush.msra.mxu0 0.0
    %403 = vmatpush.msra.mxu0 0.0
    %404 = vmatpush.msra.mxu0 0.0
    %405 = vmatpush.msra.mxu0 0.0
    %406 = vmatpush.msra.mxu0 0.0
    %407 = vmatpush.msra.mxu0 0.0
    %408 = vmatpush.msra.mxu0 0.0
    %409 = vmatpush.msra.mxu0 0.0
    %410 = vmatpush.msra.mxu0 0.0
    %411 = vmatpush.msra.mxu0 0.0
    %412 = vmatpush.msra.mxu0 0.0
    %413 = vmatpush.msra.mxu0 %v396
    %414 = vmatmul.f32.gmra.mxu0 %v393
    %v415 = vpop.f32.mrf.mxu0
    %v416 = vadd.f32 %v390, %v415
    %417 = vdwg.mxu0
    %v419 = vperm.slane %v368, 0
    %v421 = vadd.f32 %v416, %v419
    %v422 = vxor.u32 %v421, 2147483648
    %v423 = vmul.f32 %v422, 1.442695
    %v424 = vpow.pop %v423
    %v425 = vadd.f32 %v424, 1.0
    %v426 = vrcp.pop %v425
    %v427 = vmul.f32 %v425, %v426
    %v428 = vsub.f32 1.0, %v427
    %v429 = vmul.f32 %v426, %v428
    %v430 = vadd.f32 %v426, %v429
    %vm431 = vweird.f32 %v425
    %vm432 = vweird.f32 %v426
    %vm433 = vmor %vm431, %vm432
    %v434 = vsel %vm433, %v426, %v430
    %v435 = vand.u32 2147483647, %v425
    %vm436 = vcmp.eq.f32.partialorder %v435, 8.507059e+37
    %v437 = vand.u32 %v425, 2147483648
    %v438 = vor.u32 1.1754944e-38, %v437
    %v439 = vsel %vm436, %v438, %v434
    %v440 = vmul.f32 1.0, %v439
    %v441 = vtanh.pop %v421
    %443 = vrot.lane.b32.xlu0 %v362, 32
    %v444 = vpop.permute.xlu0 %443
    %v446 = vmul.f32 %v440, %v444
    %448 = vrot.lane.b32.xlu0 %v441, 64
    %v449 = vpop.permute.xlu0 %448
    %v451 = vmul.f32 %v440, %v449
    %453 = vrot.lane.b32.xlu0 %v451, 32
    %v454 = vpop.permute.xlu0 %453
    %v456 = vadd.f32 %v446, %v454
    %v457 = vtanh.pop %v456
    %459 = vrot.lane.b32.xlu0 %v457, 64
    %v460 = vpop.permute.xlu0 %459
    %v462 = vmul.f32 %v440, %v460
    %464 = vrot.lane.b32.xlu0 %v462, 32
    %v465 = vpop.permute.xlu0 %464
    %467 = vst.msk [vmem:[#allocation2] sm:$0x3] %vm80, %v465
    %469 = vrot.lane.b32.xlu0 %v456, 96
    %v470 = vpop.permute.xlu0 %469
    %472 = vst.msk [vmem:[#allocation3] sm:$0x3] %vm80, %v470
    %v473 = vld [vmem:[%s203] sm:$0x3]
    %v474 = vld [vmem:[%s205] sm:$0x3]
    %v475 = vld [vmem:[%s6] sm:$0xff]
    %v476 = vld [vmem:[%s6 + $0x8] sm:$0xff]
    %v477 = vld [vmem:[%s6 + $0x10] sm:$0xff]
    %v478 = vld [vmem:[%s6 + $0x18] sm:$0xff]
    %v479 = vld [vmem:[#allocation7] sm:$0xff]
    %v480 = vld [vmem:[#allocation7 + $0x8] sm:$0xff]
    %v481 = vld [vmem:[#allocation7 + $0x10] sm:$0xff]
    %v482 = vld [vmem:[#allocation7 + $0x18] sm:$0xff]
    %v483 = vld [vmem:[%s10] sm:$0x1]
    %v485 = vsel %vm96, %v473, 0
    %487 = vmatpush.msra.mxu0 0.0
    %488 = vmatpush.msra.mxu0 0.0
    %489 = vmatpush.msra.mxu0 0.0
    %490 = vmatpush.msra.mxu0 0.0
    %491 = vmatpush.msra.mxu0 0.0
    %492 = vmatpush.msra.mxu0 0.0
    %493 = vmatpush.msra.mxu0 0.0
    %494 = vmatpush.msra.mxu0 0.0
    %495 = vmatpush.msra.mxu0 0.0
    %496 = vmatpush.msra.mxu0 0.0
    %497 = vmatpush.msra.mxu0 0.0
    %498 = vmatpush.msra.mxu0 0.0
    %499 = vmatpush.msra.mxu0 %v482
    %500 = vmatpush.msra.mxu0 %v481
    %501 = vmatpush.msra.mxu0 %v480
    %502 = vmatpush.msra.mxu0 %v479
    %503 = vmatmul.f32.gmra.mxu0 %v485
    %v504 = vpop.f32.mrf.mxu0
    %v505 = vadd.f32 0.0, %v504
    %506 = vdwg.mxu0
    %v507 = vsel %vm96, %v465, 0
    %509 = vmatpush.msra.mxu0 0.0
    %510 = vmatpush.msra.mxu0 0.0
    %511 = vmatpush.msra.mxu0 0.0
    %512 = vmatpush.msra.mxu0 0.0
    %513 = vmatpush.msra.mxu0 0.0
    %514 = vmatpush.msra.mxu0 0.0
    %515 = vmatpush.msra.mxu0 0.0
    %516 = vmatpush.msra.mxu0 0.0
    %517 = vmatpush.msra.mxu0 0.0
    %518 = vmatpush.msra.mxu0 0.0
    %519 = vmatpush.msra.mxu0 0.0
    %520 = vmatpush.msra.mxu0 0.0
    %521 = vmatpush.msra.mxu0 %v478
    %522 = vmatpush.msra.mxu0 %v477
    %523 = vmatpush.msra.mxu0 %v476
    %524 = vmatpush.msra.mxu0 %v475
    %525 = vmatmul.f32.gmra.mxu0 %v507
    %v526 = vpop.f32.mrf.mxu0
    %v527 = vadd.f32 %v505, %v526
    %528 = vdwg.mxu0
    %v530 = vperm.slane %v483, 0
    %v532 = vadd.f32 %v527, %v530
    %v533 = vxor.u32 %v532, 2147483648
    %v534 = vmul.f32 %v533, 1.442695
    %v535 = vpow.pop %v534
    %v536 = vadd.f32 %v535, 1.0
    %v537 = vrcp.pop %v536
    %v538 = vmul.f32 %v536, %v537
    %v539 = vsub.f32 1.0, %v538
    %v540 = vmul.f32 %v537, %v539
    %v541 = vadd.f32 %v537, %v540
    %vm542 = vweird.f32 %v536
    %vm543 = vweird.f32 %v537
    %vm544 = vmor %vm542, %vm543
    %v545 = vsel %vm544, %v537, %v541
    %v546 = vand.u32 2147483647, %v536
    %vm547 = vcmp.eq.f32.partialorder %v546, 8.507059e+37
    %v548 = vand.u32 %v536, 2147483648
    %v549 = vor.u32 1.1754944e-38, %v548
    %v550 = vsel %vm547, %v549, %v545
    %v551 = vmul.f32 1.0, %v550
    %v552 = vtanh.pop %v532
    %554 = vrot.lane.b32.xlu0 %v474, 32
    %v555 = vpop.permute.xlu0 %554
    %v557 = vmul.f32 %v551, %v555
    %559 = vrot.lane.b32.xlu0 %v552, 64
    %v560 = vpop.permute.xlu0 %559
    %v562 = vmul.f32 %v551, %v560
    %564 = vrot.lane.b32.xlu0 %v562, 32
    %v565 = vpop.permute.xlu0 %564
    %v567 = vadd.f32 %v557, %v565
    %v568 = vtanh.pop %v567
    %570 = vrot.lane.b32.xlu0 %v568, 64
    %v571 = vpop.permute.xlu0 %570
    %v573 = vmul.f32 %v551, %v571
    %575 = vrot.lane.b32.xlu0 %v573, 32
    %v576 = vpop.permute.xlu0 %575
    %578 = vst.msk [vmem:[%s203] sm:$0x3] %vm80, %v576
    %580 = vrot.lane.b32.xlu0 %v567, 96
    %v581 = vpop.permute.xlu0 %580
    %583 = vst.msk [vmem:[%s205] sm:$0x3] %vm80, %v581
    %v584 = vld [vmem:[%s11] sm:$0xff]
    %v585 = vld [vmem:[%s11 + $0x8] sm:$0xff]
    %v586 = vld [vmem:[%s11 + $0x10] sm:$0xff]
    %v587 = vld [vmem:[%s11 + $0x18] sm:$0xff]
    %v588 = vld [vmem:[#allocation4] sm:$0x1]
    %v590 = vperm.slane %v588, 0
    %v592 = vsel %vm96, %v576, 0
    %594 = vmatpush.msra.mxu0 0.0
    %595 = vmatpush.msra.mxu0 0.0
    %596 = vmatpush.msra.mxu0 0.0
    %597 = vmatpush.msra.mxu0 0.0
    %598 = vmatpush.msra.mxu0 0.0
    %599 = vmatpush.msra.mxu0 0.0
    %600 = vmatpush.msra.mxu0 0.0
    %601 = vmatpush.msra.mxu0 0.0
    %602 = vmatpush.msra.mxu0 0.0
    %603 = vmatpush.msra.mxu0 0.0
    %604 = vmatpush.msra.mxu0 0.0
    %605 = vmatpush.msra.mxu0 0.0
    %606 = vmatpush.msra.mxu0 %v587
    %607 = vmatpush.msra.mxu0 %v586
    %608 = vmatpush.msra.mxu0 %v585
    %609 = vmatpush.msra.mxu0 %v584
    %610 = vmatmul.f32.gmra.mxu0 %v592
    %v611 = vpop.f32.mrf.mxu0
    %v612 = vadd.f32 %v590, %v611
    %613 = vdwg.mxu0
    %s614 = scalar_lea.vmem %s13, 2
    %615 = vst.msk [vmem:[%s614] sm:$0x3] %vm346, %v612
    %s616 = scalar_lea.vmem %s0, 1
    %v617 = vld [vmem:[%s616] sm:$0x1]
    %s618 = scalar_lea.vmem %s4, 4
    %v619 = vld [vmem:[%s618] sm:$0x3]
    %v621 = vperm.slane %v617, 0
    %v623 = vmul.f32 %v621, %v619
    %v624 = vsub.f32 1.0, %v617
    %v626 = vperm.slane %v624, 0
    %v628 = vmul.f32 %v626, %v612
    %v629 = vadd.f32 %v623, %v628
    %v630 = vld [vmem:[#allocation2] sm:$0x3]
    %v631 = vld [vmem:[#allocation3] sm:$0x3]
    %v632 = vld [vmem:[%s5] sm:$0x1]
    %v633 = vld [vmem:[#allocation5] sm:$0xff]
    %v634 = vld [vmem:[#allocation5 + $0x8] sm:$0xff]
    %v635 = vld [vmem:[#allocation5 + $0x10] sm:$0xff]
    %v636 = vld [vmem:[#allocation5 + $0x18] sm:$0xff]
    %v637 = vld [vmem:[%s9] sm:$0x1]
    %v639 = vsel %vm96, %v630, 0
    %641 = vmatpush.msra.mxu0 0.0
    %642 = vmatpush.msra.mxu0 0.0
    %643 = vmatpush.msra.mxu0 0.0
    %644 = vmatpush.msra.mxu0 0.0
    %645 = vmatpush.msra.mxu0 0.0
    %646 = vmatpush.msra.mxu0 0.0
    %647 = vmatpush.msra.mxu0 0.0
    %648 = vmatpush.msra.mxu0 0.0
    %649 = vmatpush.msra.mxu0 0.0
    %650 = vmatpush.msra.mxu0 0.0
    %651 = vmatpush.msra.mxu0 0.0
    %652 = vmatpush.msra.mxu0 0.0
    %653 = vmatpush.msra.mxu0 %v636
    %654 = vmatpush.msra.mxu0 %v635
    %655 = vmatpush.msra.mxu0 %v634
    %656 = vmatpush.msra.mxu0 %v633
    %657 = vmatmul.f32.gmra.mxu0 %v639
    %v658 = vpop.f32.mrf.mxu0
    %v659 = vadd.f32 0.0, %v658
    %660 = vdwg.mxu0
    %v662 = vsel %vm120, %v629, 0
    %v665 = vsel %vm124, %v632, 0
    %667 = vmatpush.msra.mxu0 0.0
    %668 = vmatpush.msra.mxu0 0.0
    %669 = vmatpush.msra.mxu0 0.0
    %670 = vmatpush.msra.mxu0 0.0
    %671 = vmatpush.msra.mxu0 0.0
    %672 = vmatpush.msra.mxu0 0.0
    %673 = vmatpush.msra.mxu0 0.0
    %674 = vmatpush.msra.mxu0 0.0
    %675 = vmatpush.msra.mxu0 0.0
    %676 = vmatpush.msra.mxu0 0.0
    %677 = vmatpush.msra.mxu0 0.0
    %678 = vmatpush.msra.mxu0 0.0
    %679 = vmatpush.msra.mxu0 0.0
    %680 = vmatpush.msra.mxu0 0.0
    %681 = vmatpush.msra.mxu0 0.0
    %682 = vmatpush.msra.mxu0 %v665
    %683 = vmatmul.f32.gmra.mxu0 %v662
    %v684 = vpop.f32.mrf.mxu0
    %v685 = vadd.f32 %v659, %v684
    %686 = vdwg.mxu0
    %v688 = vperm.slane %v637, 0
    %v690 = vadd.f32 %v685, %v688
    %v691 = vxor.u32 %v690, 2147483648
    %v692 = vmul.f32 %v691, 1.442695
    %v693 = vpow.pop %v692
    %v694 = vadd.f32 %v693, 1.0
    %v695 = vrcp.pop %v694
    %v696 = vmul.f32 %v694, %v695
    %v697 = vsub.f32 1.0, %v696
    %v698 = vmul.f32 %v695, %v697
    %v699 = vadd.f32 %v695, %v698
    %vm700 = vweird.f32 %v694
    %vm701 = vweird.f32 %v695
    %vm702 = vmor %vm700, %vm701
    %v703 = vsel %vm702, %v695, %v699
    %v704 = vand.u32 2147483647, %v694
    %vm705 = vcmp.eq.f32.partialorder %v704, 8.507059e+37
    %v706 = vand.u32 %v694, 2147483648
    %v707 = vor.u32 1.1754944e-38, %v706
    %v708 = vsel %vm705, %v707, %v703
    %v709 = vmul.f32 1.0, %v708
    %v710 = vtanh.pop %v690
    %712 = vrot.lane.b32.xlu0 %v631, 32
    %v713 = vpop.permute.xlu0 %712
    %v715 = vmul.f32 %v709, %v713
    %717 = vrot.lane.b32.xlu0 %v710, 64
    %v718 = vpop.permute.xlu0 %717
    %v720 = vmul.f32 %v709, %v718
    %722 = vrot.lane.b32.xlu0 %v720, 32
    %v723 = vpop.permute.xlu0 %722
    %v725 = vadd.f32 %v715, %v723
    %v726 = vtanh.pop %v725
    %728 = vrot.lane.b32.xlu0 %v726, 64
    %v729 = vpop.permute.xlu0 %728
    %v731 = vmul.f32 %v709, %v729
    %733 = vrot.lane.b32.xlu0 %v731, 32
    %v734 = vpop.permute.xlu0 %733
    %736 = vst.msk [vmem:[#allocation2] sm:$0x3] %vm80, %v734
    %738 = vrot.lane.b32.xlu0 %v725, 96
    %v739 = vpop.permute.xlu0 %738
    %741 = vst.msk [vmem:[#allocation3] sm:$0x3] %vm80, %v739
    %v742 = vld [vmem:[%s203] sm:$0x3]
    %v743 = vld [vmem:[%s205] sm:$0x3]
    %v744 = vld [vmem:[%s6] sm:$0xff]
    %v745 = vld [vmem:[%s6 + $0x8] sm:$0xff]
    %v746 = vld [vmem:[%s6 + $0x10] sm:$0xff]
    %v747 = vld [vmem:[%s6 + $0x18] sm:$0xff]
    %v748 = vld [vmem:[#allocation7] sm:$0xff]
    %v749 = vld [vmem:[#allocation7 + $0x8] sm:$0xff]
    %v750 = vld [vmem:[#allocation7 + $0x10] sm:$0xff]
    %v751 = vld [vmem:[#allocation7 + $0x18] sm:$0xff]
    %v752 = vld [vmem:[%s10] sm:$0x1]
    %v754 = vsel %vm96, %v742, 0
    %756 = vmatpush.msra.mxu0 0.0
    %757 = vmatpush.msra.mxu0 0.0
    %758 = vmatpush.msra.mxu0 0.0
    %759 = vmatpush.msra.mxu0 0.0
    %760 = vmatpush.msra.mxu0 0.0
    %761 = vmatpush.msra.mxu0 0.0
    %762 = vmatpush.msra.mxu0 0.0
    %763 = vmatpush.msra.mxu0 0.0
    %764 = vmatpush.msra.mxu0 0.0
    %765 = vmatpush.msra.mxu0 0.0
    %766 = vmatpush.msra.mxu0 0.0
    %767 = vmatpush.msra.mxu0 0.0
    %768 = vmatpush.msra.mxu0 %v751
    %769 = vmatpush.msra.mxu0 %v750
    %770 = vmatpush.msra.mxu0 %v749
    %771 = vmatpush.msra.mxu0 %v748
    %772 = vmatmul.f32.gmra.mxu0 %v754
    %v773 = vpop.f32.mrf.mxu0
    %v774 = vadd.f32 0.0, %v773
    %775 = vdwg.mxu0
    %v776 = vsel %vm96, %v734, 0
    %778 = vmatpush.msra.mxu0 0.0
    %779 = vmatpush.msra.mxu0 0.0
    %780 = vmatpush.msra.mxu0 0.0
    %781 = vmatpush.msra.mxu0 0.0
    %782 = vmatpush.msra.mxu0 0.0
    %783 = vmatpush.msra.mxu0 0.0
    %784 = vmatpush.msra.mxu0 0.0
    %785 = vmatpush.msra.mxu0 0.0
    %786 = vmatpush.msra.mxu0 0.0
    %787 = vmatpush.msra.mxu0 0.0
    %788 = vmatpush.msra.mxu0 0.0
    %789 = vmatpush.msra.mxu0 0.0
    %790 = vmatpush.msra.mxu0 %v747
    %791 = vmatpush.msra.mxu0 %v746
    %792 = vmatpush.msra.mxu0 %v745
    %793 = vmatpush.msra.mxu0 %v744
    %794 = vmatmul.f32.gmra.mxu0 %v776
    %v795 = vpop.f32.mrf.mxu0
    %v796 = vadd.f32 %v774, %v795
    %797 = vdwg.mxu0
    %v799 = vperm.slane %v752, 0
    %v801 = vadd.f32 %v796, %v799
    %v802 = vxor.u32 %v801, 2147483648
    %v803 = vmul.f32 %v802, 1.442695
    %v804 = vpow.pop %v803
    %v805 = vadd.f32 %v804, 1.0
    %v806 = vrcp.pop %v805
    %v807 = vmul.f32 %v805, %v806
    %v808 = vsub.f32 1.0, %v807
    %v809 = vmul.f32 %v806, %v808
    %v810 = vadd.f32 %v806, %v809
    %vm811 = vweird.f32 %v805
    %vm812 = vweird.f32 %v806
    %vm813 = vmor %vm811, %vm812
    %v814 = vsel %vm813, %v806, %v810
    %v815 = vand.u32 2147483647, %v805
    %vm816 = vcmp.eq.f32.partialorder %v815, 8.507059e+37
    %v817 = vand.u32 %v805, 2147483648
    %v818 = vor.u32 1.1754944e-38, %v817
    %v819 = vsel %vm816, %v818, %v814
    %v820 = vmul.f32 1.0, %v819
    %v821 = vtanh.pop %v801
    %823 = vrot.lane.b32.xlu0 %v743, 32
    %v824 = vpop.permute.xlu0 %823
    %v826 = vmul.f32 %v820, %v824
    %828 = vrot.lane.b32.xlu0 %v821, 64
    %v829 = vpop.permute.xlu0 %828
    %v831 = vmul.f32 %v820, %v829
    %833 = vrot.lane.b32.xlu0 %v831, 32
    %v834 = vpop.permute.xlu0 %833
    %v836 = vadd.f32 %v826, %v834
    %v837 = vtanh.pop %v836
    %839 = vrot.lane.b32.xlu0 %v837, 64
    %v840 = vpop.permute.xlu0 %839
    %v842 = vmul.f32 %v820, %v840
    %844 = vrot.lane.b32.xlu0 %v842, 32
    %v845 = vpop.permute.xlu0 %844
    %847 = vst.msk [vmem:[%s203] sm:$0x3] %vm80, %v845
    %849 = vrot.lane.b32.xlu0 %v836, 96
    %v850 = vpop.permute.xlu0 %849
    %852 = vst.msk [vmem:[%s205] sm:$0x3] %vm80, %v850
    %v853 = vld [vmem:[%s11] sm:$0xff]
    %v854 = vld [vmem:[%s11 + $0x8] sm:$0xff]
    %v855 = vld [vmem:[%s11 + $0x10] sm:$0xff]
    %v856 = vld [vmem:[%s11 + $0x18] sm:$0xff]
    %v857 = vld [vmem:[#allocation4] sm:$0x1]
    %v859 = vperm.slane %v857, 0
    %v861 = vsel %vm96, %v845, 0
    %863 = vmatpush.msra.mxu0 0.0
    %864 = vmatpush.msra.mxu0 0.0
    %865 = vmatpush.msra.mxu0 0.0
    %866 = vmatpush.msra.mxu0 0.0
    %867 = vmatpush.msra.mxu0 0.0
    %868 = vmatpush.msra.mxu0 0.0
    %869 = vmatpush.msra.mxu0 0.0
    %870 = vmatpush.msra.mxu0 0.0
    %871 = vmatpush.msra.mxu0 0.0
    %872 = vmatpush.msra.mxu0 0.0
    %873 = vmatpush.msra.mxu0 0.0
    %874 = vmatpush.msra.mxu0 0.0
    %875 = vmatpush.msra.mxu0 %v856
    %876 = vmatpush.msra.mxu0 %v855
    %877 = vmatpush.msra.mxu0 %v854
    %878 = vmatpush.msra.mxu0 %v853
    %879 = vmatmul.f32.gmra.mxu0 %v861
    %v880 = vpop.f32.mrf.mxu0
    %v881 = vadd.f32 %v859, %v880
    %882 = vdwg.mxu0
    %s883 = scalar_lea.vmem %s13, 4
    %884 = vst.msk [vmem:[%s883] sm:$0x3] %vm346, %v881
    %s885 = scalar_lea.vmem %s0, 2
    %v886 = vld [vmem:[%s885] sm:$0x1]
    %s887 = scalar_lea.vmem %s4, 6
    %v888 = vld [vmem:[%s887] sm:$0x3]
    %v890 = vperm.slane %v886, 0
    %v892 = vmul.f32 %v890, %v888
    %v893 = vsub.f32 1.0, %v886
    %v895 = vperm.slane %v893, 0
    %v897 = vmul.f32 %v895, %v881
    %v898 = vadd.f32 %v892, %v897
    %v899 = vld [vmem:[#allocation2] sm:$0x3]
    %v900 = vld [vmem:[#allocation3] sm:$0x3]
    %v901 = vld [vmem:[%s5] sm:$0x1]
    %v902 = vld [vmem:[#allocation5] sm:$0xff]
    %v903 = vld [vmem:[#allocation5 + $0x8] sm:$0xff]
    %v904 = vld [vmem:[#allocation5 + $0x10] sm:$0xff]
    %v905 = vld [vmem:[#allocation5 + $0x18] sm:$0xff]
    %v906 = vld [vmem:[%s9] sm:$0x1]
    %v908 = vsel %vm96, %v899, 0
    %910 = vmatpush.msra.mxu0 0.0
    %911 = vmatpush.msra.mxu0 0.0
    %912 = vmatpush.msra.mxu0 0.0
    %913 = vmatpush.msra.mxu0 0.0
    %914 = vmatpush.msra.mxu0 0.0
    %915 = vmatpush.msra.mxu0 0.0
    %916 = vmatpush.msra.mxu0 0.0
    %917 = vmatpush.msra.mxu0 0.0
    %918 = vmatpush.msra.mxu0 0.0
    %919 = vmatpush.msra.mxu0 0.0
    %920 = vmatpush.msra.mxu0 0.0
    %921 = vmatpush.msra.mxu0 0.0
    %922 = vmatpush.msra.mxu0 %v905
    %923 = vmatpush.msra.mxu0 %v904
    %924 = vmatpush.msra.mxu0 %v903
    %925 = vmatpush.msra.mxu0 %v902
    %926 = vmatmul.f32.gmra.mxu0 %v908
    %v927 = vpop.f32.mrf.mxu0
    %v928 = vadd.f32 0.0, %v927
    %929 = vdwg.mxu0
    %v931 = vsel %vm120, %v898, 0
    %v934 = vsel %vm124, %v901, 0
    %936 = vmatpush.msra.mxu0 0.0
    %937 = vmatpush.msra.mxu0 0.0
    %938 = vmatpush.msra.mxu0 0.0
    %939 = vmatpush.msra.mxu0 0.0
    %940 = vmatpush.msra.mxu0 0.0
    %941 = vmatpush.msra.mxu0 0.0
    %942 = vmatpush.msra.mxu0 0.0
    %943 = vmatpush.msra.mxu0 0.0
    %944 = vmatpush.msra.mxu0 0.0
    %945 = vmatpush.msra.mxu0 0.0
    %946 = vmatpush.msra.mxu0 0.0
    %947 = vmatpush.msra.mxu0 0.0
    %948 = vmatpush.msra.mxu0 0.0
    %949 = vmatpush.msra.mxu0 0.0
    %950 = vmatpush.msra.mxu0 0.0
    %951 = vmatpush.msra.mxu0 %v934
    %952 = vmatmul.f32.gmra.mxu0 %v931
    %v953 = vpop.f32.mrf.mxu0
    %v954 = vadd.f32 %v928, %v953
    %955 = vdwg.mxu0
    %v957 = vperm.slane %v906, 0
    %v959 = vadd.f32 %v954, %v957
    %v960 = vxor.u32 %v959, 2147483648
    %v961 = vmul.f32 %v960, 1.442695
    %v962 = vpow.pop %v961
    %v963 = vadd.f32 %v962, 1.0
    %v964 = vrcp.pop %v963
    %v965 = vmul.f32 %v963, %v964
    %v966 = vsub.f32 1.0, %v965
    %v967 = vmul.f32 %v964, %v966
    %v968 = vadd.f32 %v964, %v967
    %vm969 = vweird.f32 %v963
    %vm970 = vweird.f32 %v964
    %vm971 = vmor %vm969, %vm970
    %v972 = vsel %vm971, %v964, %v968
    %v973 = vand.u32 2147483647, %v963
    %vm974 = vcmp.eq.f32.partialorder %v973, 8.507059e+37
    %v975 = vand.u32 %v963, 2147483648
    %v976 = vor.u32 1.1754944e-38, %v975
    %v977 = vsel %vm974, %v976, %v972
    %v978 = vmul.f32 1.0, %v977
    %v979 = vtanh.pop %v959
    %981 = vrot.lane.b32.xlu0 %v900, 32
    %v982 = vpop.permute.xlu0 %981
    %v984 = vmul.f32 %v978, %v982
    %986 = vrot.lane.b32.xlu0 %v979, 64
    %v987 = vpop.permute.xlu0 %986
    %v989 = vmul.f32 %v978, %v987
    %991 = vrot.lane.b32.xlu0 %v989, 32
    %v992 = vpop.permute.xlu0 %991
    %v994 = vadd.f32 %v984, %v992
    %v995 = vtanh.pop %v994
    %997 = vrot.lane.b32.xlu0 %v995, 64
    %v998 = vpop.permute.xlu0 %997
    %v1000 = vmul.f32 %v978, %v998
    %1002 = vrot.lane.b32.xlu0 %v1000, 32
    %v1003 = vpop.permute.xlu0 %1002
    %1005 = vst.msk [vmem:[#allocation2] sm:$0x3] %vm80, %v1003
    %1007 = vrot.lane.b32.xlu0 %v994, 96
    %v1008 = vpop.permute.xlu0 %1007
    %1010 = vst.msk [vmem:[#allocation3] sm:$0x3] %vm80, %v1008
    %v1011 = vld [vmem:[%s203] sm:$0x3]
    %v1012 = vld [vmem:[%s205] sm:$0x3]
    %v1013 = vld [vmem:[%s6] sm:$0xff]
    %v1014 = vld [vmem:[%s6 + $0x8] sm:$0xff]
    %v1015 = vld [vmem:[%s6 + $0x10] sm:$0xff]
    %v1016 = vld [vmem:[%s6 + $0x18] sm:$0xff]
    %v1017 = vld [vmem:[#allocation7] sm:$0xff]
    %v1018 = vld [vmem:[#allocation7 + $0x8] sm:$0xff]
    %v1019 = vld [vmem:[#allocation7 + $0x10] sm:$0xff]
    %v1020 = vld [vmem:[#allocation7 + $0x18] sm:$0xff]
    %v1021 = vld [vmem:[%s10] sm:$0x1]
    %v1023 = vsel %vm96, %v1011, 0
    %1025 = vmatpush.msra.mxu0 0.0
    %1026 = vmatpush.msra.mxu0 0.0
    %1027 = vmatpush.msra.mxu0 0.0
    %1028 = vmatpush.msra.mxu0 0.0
    %1029 = vmatpush.msra.mxu0 0.0
    %1030 = vmatpush.msra.mxu0 0.0
    %1031 = vmatpush.msra.mxu0 0.0
    %1032 = vmatpush.msra.mxu0 0.0
    %1033 = vmatpush.msra.mxu0 0.0
    %1034 = vmatpush.msra.mxu0 0.0
    %1035 = vmatpush.msra.mxu0 0.0
    %1036 = vmatpush.msra.mxu0 0.0
    %1037 = vmatpush.msra.mxu0 %v1020
    %1038 = vmatpush.msra.mxu0 %v1019
    %1039 = vmatpush.msra.mxu0 %v1018
    %1040 = vmatpush.msra.mxu0 %v1017
    %1041 = vmatmul.f32.gmra.mxu0 %v1023
    %v1042 = vpop.f32.mrf.mxu0
    %v1043 = vadd.f32 0.0, %v1042
    %1044 = vdwg.mxu0
    %v1045 = vsel %vm96, %v1003, 0
    %1047 = vmatpush.msra.mxu0 0.0
    %1048 = vmatpush.msra.mxu0 0.0
    %1049 = vmatpush.msra.mxu0 0.0
    %1050 = vmatpush.msra.mxu0 0.0
    %1051 = vmatpush.msra.mxu0 0.0
    %1052 = vmatpush.msra.mxu0 0.0
    %1053 = vmatpush.msra.mxu0 0.0
    %1054 = vmatpush.msra.mxu0 0.0
    %1055 = vmatpush.msra.mxu0 0.0
    %1056 = vmatpush.msra.mxu0 0.0
    %1057 = vmatpush.msra.mxu0 0.0
    %1058 = vmatpush.msra.mxu0 0.0
    %1059 = vmatpush.msra.mxu0 %v1016
    %1060 = vmatpush.msra.mxu0 %v1015
    %1061 = vmatpush.msra.mxu0 %v1014
    %1062 = vmatpush.msra.mxu0 %v1013
    %1063 = vmatmul.f32.gmra.mxu0 %v1045
    %v1064 = vpop.f32.mrf.mxu0
    %v1065 = vadd.f32 %v1043, %v1064
    %1066 = vdwg.mxu0
    %v1068 = vperm.slane %v1021, 0
    %v1070 = vadd.f32 %v1065, %v1068
    %v1071 = vxor.u32 %v1070, 2147483648
    %v1072 = vmul.f32 %v1071, 1.442695
    %v1073 = vpow.pop %v1072
    %v1074 = vadd.f32 %v1073, 1.0
    %v1075 = vrcp.pop %v1074
    %v1076 = vmul.f32 %v1074, %v1075
    %v1077 = vsub.f32 1.0, %v1076
    %v1078 = vmul.f32 %v1075, %v1077
    %v1079 = vadd.f32 %v1075, %v1078
    %vm1080 = vweird.f32 %v1074
    %vm1081 = vweird.f32 %v1075
    %vm1082 = vmor %vm1080, %vm1081
    %v1083 = vsel %vm1082, %v1075, %v1079
    %v1084 = vand.u32 2147483647, %v1074
    %vm1085 = vcmp.eq.f32.partialorder %v1084, 8.507059e+37
    %v1086 = vand.u32 %v1074, 2147483648
    %v1087 = vor.u32 1.1754944e-38, %v1086
    %v1088 = vsel %vm1085, %v1087, %v1083
    %v1089 = vmul.f32 1.0, %v1088
    %v1090 = vtanh.pop %v1070
    %1092 = vrot.lane.b32.xlu0 %v1012, 32
    %v1093 = vpop.permute.xlu0 %1092
    %v1095 = vmul.f32 %v1089, %v1093
    %1097 = vrot.lane.b32.xlu0 %v1090, 64
    %v1098 = vpop.permute.xlu0 %1097
    %v1100 = vmul.f32 %v1089, %v1098
    %1102 = vrot.lane.b32.xlu0 %v1100, 32
    %v1103 = vpop.permute.xlu0 %1102
    %v1105 = vadd.f32 %v1095, %v1103
    %v1106 = vtanh.pop %v1105
    %1108 = vrot.lane.b32.xlu0 %v1106, 64
    %v1109 = vpop.permute.xlu0 %1108
    %v1111 = vmul.f32 %v1089, %v1109
    %1113 = vrot.lane.b32.xlu0 %v1111, 32
    %v1114 = vpop.permute.xlu0 %1113
    %1116 = vst.msk [vmem:[%s203] sm:$0x3] %vm80, %v1114
    %1118 = vrot.lane.b32.xlu0 %v1105, 96
    %v1119 = vpop.permute.xlu0 %1118
    %1121 = vst.msk [vmem:[%s205] sm:$0x3] %vm80, %v1119
    %v1122 = vld [vmem:[%s11] sm:$0xff]
    %v1123 = vld [vmem:[%s11 + $0x8] sm:$0xff]
    %v1124 = vld [vmem:[%s11 + $0x10] sm:$0xff]
    %v1125 = vld [vmem:[%s11 + $0x18] sm:$0xff]
    %v1126 = vld [vmem:[#allocation4] sm:$0x1]
    %v1128 = vperm.slane %v1126, 0
    %v1130 = vsel %vm96, %v1114, 0
    %1132 = vmatpush.msra.mxu0 0.0
    %1133 = vmatpush.msra.mxu0 0.0
    %1134 = vmatpush.msra.mxu0 0.0
    %1135 = vmatpush.msra.mxu0 0.0
    %1136 = vmatpush.msra.mxu0 0.0
    %1137 = vmatpush.msra.mxu0 0.0
    %1138 = vmatpush.msra.mxu0 0.0
    %1139 = vmatpush.msra.mxu0 0.0
    %1140 = vmatpush.msra.mxu0 0.0
    %1141 = vmatpush.msra.mxu0 0.0
    %1142 = vmatpush.msra.mxu0 0.0
    %1143 = vmatpush.msra.mxu0 0.0
    %1144 = vmatpush.msra.mxu0 %v1125
    %1145 = vmatpush.msra.mxu0 %v1124
    %1146 = vmatpush.msra.mxu0 %v1123
    %1147 = vmatpush.msra.mxu0 %v1122
    %1148 = vmatmul.f32.gmra.mxu0 %v1130
    %v1149 = vpop.f32.mrf.mxu0
    %v1150 = vadd.f32 %v1128, %v1149
    %1151 = vdwg.mxu0
    %s1152 = scalar_lea.vmem %s13, 6
    %1153 = vst.msk [vmem:[%s1152] sm:$0x3] %vm346, %v1150
    // Predicated region
    $region62: #{desc_seq2seq_forward.3} parent=1 // pred_check
      _
    $region63: #{desc_seq2seq_forward.3} parent=1 // pred_check_branch
      %1155 = sbr.rel (0) target = $region65
    $region64: #{desc_seq2seq_forward.3} parent=1 // pred_region
      _
    $region65: #{desc_seq2seq_forward.3} parent=1 // pred_fallthru
      _
    // Predicated region
    $region66: #{desc_seq2seq_forward.3} parent=1 // pred_check
      _
    $region67: #{desc_seq2seq_forward.3} parent=1 // pred_check_branch
      %1157 = sbr.rel (0) target = $region69
    $region68: #{desc_seq2seq_forward.3} parent=1 // pred_region
      _
    $region69: #{desc_seq2seq_forward.3} parent=1 // pred_fallthru
      _
    %1158 = vsyncpa [#allocation6], 1
    %1159 = vsyncpa [#allocation8], 1

// kernel: desc_seq2seq_forward.2
$region0: #{desc_seq2seq_forward.2}
  #allocation0 [shape = 'u32[]', space=smem, size = 0x4, offset = 0x4, fixed_abs, tag = 'smem constant byte address 0x4 - core index']
  #allocation1 [shape = 'u32[72,128]{1,0:T(1,128)}', space=vmem, size = 0x9000, scoped, tag = 'internal scratch']
  %s0 = inlined_call_operand.vmem [shape: f32[8,2,4], index: 0, kind: input, shape index: {}]
  %s1 = inlined_call_operand.vmem [shape: f32[4,128], index: 1, kind: input, shape index: {}]
  %s2 = inlined_call_operand.vmem [shape: f32[32,128], index: 2, kind: input, shape index: {}]
  %s3 = inlined_call_operand.hbm [shape: f32[32,128], index: 3, kind: input, shape index: {}]
  %s4 = inlined_call_operand.hbm [shape: f32[32,128], index: 4, kind: input, shape index: {}]
  %s5 = inlined_call_operand.vmem [shape: f32[1,128], index: 5, kind: input, shape index: {}]
  %s6 = inlined_call_operand.vmem [shape: f32[1,128], index: 6, kind: input, shape index: {}]
  %s7 = inlined_call_operand.vmem [shape: f32[2,2,32], index: 7, kind: output, shape index: {0}]
  %s8 = inlined_call_operand.vmem [shape: f32[2,2,32], index: 8, kind: output, shape index: {1}]
  %9 = xla_tuple %s7, %s8
  %s10 = sld [smem:[#allocation0]]
  $region54: #{desc_seq2seq_forward.2} parent=0
    _
  %s12 = ssub.s32 1, %s10
  %s13 = scalar_select 0, %s12, %s10
  $region1: #{desc_seq2seq_forward.2} parent=0
    #allocation2 [shape = 'u8[16384]{0}', space=vmem, size = 0x4000, scoped, tag = 'input window, operand 3, single buffered']
    #allocation3 [shape = 's32[1]{0}', space=sflag, size = 0x4, scoped, tag = 'scoped memory for desc_seq2seq_forward.2']
    #allocation4 [shape = 'u8[16384]{0}', space=vmem, size = 0x4000, scoped, tag = 'input window, operand 4, single buffered']
    #allocation5 [shape = 's32[1]{0}', space=sflag, size = 0x4, scoped, tag = 'scoped memory for desc_seq2seq_forward.2']
    %14 = vsyncpa [#allocation3], 0
    %15 = vsyncpa [#allocation5], 0
    // Predicated region
    $region2: #{desc_seq2seq_forward.2} parent=1 // pred_check
      _
    $region3: #{desc_seq2seq_forward.2} parent=1 // pred_check_branch
      %17 = sbr.rel (0) target = $region5
    $region4: #{desc_seq2seq_forward.2} parent=1 // pred_region
      _
    $region5: #{desc_seq2seq_forward.2} parent=1 // pred_fallthru
      _
    // Predicated region
    $region6: #{desc_seq2seq_forward.2} parent=1 // pred_check
      _
    $region7: #{desc_seq2seq_forward.2} parent=1 // pred_check_branch
      %19 = sbr.rel (0) target = $region9
    $region8: #{desc_seq2seq_forward.2} parent=1 // pred_region
      _
    $region9: #{desc_seq2seq_forward.2} parent=1 // pred_fallthru
      _
    // Predicated region
    $region10: #{desc_seq2seq_forward.2} parent=1 // pred_check
      _
    $region11: #{desc_seq2seq_forward.2} parent=1 // pred_check_branch
      %21 = sbr.rel (0) target = $region13
    $region12: #{desc_seq2seq_forward.2} parent=1 // pred_region
      _
    $region13: #{desc_seq2seq_forward.2} parent=1 // pred_fallthru
      _
    // Predicated region
    $region14: #{desc_seq2seq_forward.2} parent=1 // pred_check
      _
    $region15: #{desc_seq2seq_forward.2} parent=1 // pred_check_branch
      %23 = sbr.rel (0) target = $region17
    $region16: #{desc_seq2seq_forward.2} parent=1 // pred_region
      %25 = vsyncadd [#allocation3], 0
      %s26 = sshll.u32 %s3, 4
      %s27 = int_to_ptr.hbm [resolvable:$true] %s26
      %s28 = sshll.u32 [#allocation2], 4
      %s29 = int_to_ptr.vmem [resolvable:$true] %s28
      %34 = dma.hbm_to_vmem [thread:$0]  %s27, 512, %s29, [#allocation3], 128, 128, 8
    $region17: #{desc_seq2seq_forward.2} parent=1 // pred_fallthru
      _
    // Predicated region
    $region18: #{desc_seq2seq_forward.2} parent=1 // pred_check
      _
    $region19: #{desc_seq2seq_forward.2} parent=1 // pred_check_branch
      %36 = sbr.rel (0) target = $region21
    $region20: #{desc_seq2seq_forward.2} parent=1 // pred_region
      %38 = vsyncadd [#allocation5], 0
      %s39 = sshll.u32 %s4, 4
      %s40 = int_to_ptr.hbm [resolvable:$true] %s39
      %s41 = sshll.u32 [#allocation4], 4
      %s42 = int_to_ptr.vmem [resolvable:$true] %s41
      %47 = dma.hbm_to_vmem [thread:$0]  %s40, 512, %s42, [#allocation5], 128, 128, 8
    $region21: #{desc_seq2seq_forward.2} parent=1 // pred_fallthru
      _
    // Predicated region
    $region22: #{desc_seq2seq_forward.2} parent=1 // pred_check
      _
    $region23: #{desc_seq2seq_forward.2} parent=1 // pred_check_branch
      %49 = sbr.rel (0) target = $region25
    $region24: #{desc_seq2seq_forward.2} parent=1 // pred_region
      _
    $region25: #{desc_seq2seq_forward.2} parent=1 // pred_fallthru
      _
    // Predicated region
    $region26: #{desc_seq2seq_forward.2} parent=1 // pred_check
      _
    $region27: #{desc_seq2seq_forward.2} parent=1 // pred_check_branch
      %51 = sbr.rel (0) target = $region29
    $region28: #{desc_seq2seq_forward.2} parent=1 // pred_region
      _
    $region29: #{desc_seq2seq_forward.2} parent=1 // pred_fallthru
      _
    // Predicated region
    $region30: #{desc_seq2seq_forward.2} parent=1 // pred_check
      _
    $region31: #{desc_seq2seq_forward.2} parent=1 // pred_check_branch
      %53 = sbr.rel (0) target = $region33
    $region32: #{desc_seq2seq_forward.2} parent=1 // pred_region
      %55 = dma.done [#allocation3], 512
    $region33: #{desc_seq2seq_forward.2} parent=1 // pred_fallthru
      _
    // Predicated region
    $region34: #{desc_seq2seq_forward.2} parent=1 // pred_check
      _
    $region35: #{desc_seq2seq_forward.2} parent=1 // pred_check_branch
      %57 = sbr.rel (0) target = $region37
    $region36: #{desc_seq2seq_forward.2} parent=1 // pred_region
      %59 = dma.done [#allocation5], 512
    $region37: #{desc_seq2seq_forward.2} parent=1 // pred_fallthru
      _
    %vm60 = vcmask 254976
    %61 = vst.msk [vmem:[%s7] sm:$0x3] %vm60, 0.0
    %62 = vst.msk [vmem:[%s7 + $0x2] sm:$0x3] %vm60, 0.0
    %63 = vst.msk [vmem:[%s8] sm:$0x3] %vm60, 0.0
    %64 = vst.msk [vmem:[%s8 + $0x2] sm:$0x3] %vm60, 0.0
    %v65 = vld [vmem:[%s0] sm:$0x3]
    %v66 = vld [vmem:[%s7] sm:$0x3]
    %v67 = vld [vmem:[%s8] sm:$0x3]
    %v68 = vld [vmem:[%s1] sm:$0xf]
    %v69 = vld [vmem:[#allocation2] sm:$0xff]
    %v70 = vld [vmem:[#allocation2 + $0x8] sm:$0xff]
    %v71 = vld [vmem:[#allocation2 + $0x10] sm:$0xff]
    %v72 = vld [vmem:[#allocation2 + $0x18] sm:$0xff]
    %v73 = vld [vmem:[%s5] sm:$0x1]
    %vm74 = vcmask 261120
    %v76 = vsel %vm74, %v66, 0
    %78 = vmatpush.msra.mxu0 0.0
    %79 = vmatpush.msra.mxu0 0.0
    %80 = vmatpush.msra.mxu0 0.0
    %81 = vmatpush.msra.mxu0 0.0
    %82 = vmatpush.msra.mxu0 0.0
    %83 = vmatpush.msra.mxu0 0.0
    %84 = vmatpush.msra.mxu0 0.0
    %85 = vmatpush.msra.mxu0 0.0
    %86 = vmatpush.msra.mxu0 0.0
    %87 = vmatpush.msra.mxu0 0.0
    %88 = vmatpush.msra.mxu0 0.0
    %89 = vmatpush.msra.mxu0 0.0
    %90 = vmatpush.msra.mxu0 %v72
    %91 = vmatpush.msra.mxu0 %v71
    %92 = vmatpush.msra.mxu0 %v70
    %93 = vmatpush.msra.mxu0 %v69
    %94 = vmatmul.f32.gmra.mxu0 %v76
    %v95 = vpop.f32.mrf.mxu0
    %v96 = vadd.f32 0.0, %v95
    %97 = vdwg.mxu0
    %vm98 = vcmask 31744
    %v100 = vsel %vm98, %v65, 0
    %vm102 = vcmask 1043456
    %v104 = vsel %vm102, %v68, 0
    %106 = vmatpush.msra.mxu0 0.0
    %107 = vmatpush.msra.mxu0 0.0
    %108 = vmatpush.msra.mxu0 0.0
    %109 = vmatpush.msra.mxu0 0.0
    %110 = vmatpush.msra.mxu0 0.0
    %111 = vmatpush.msra.mxu0 0.0
    %112 = vmatpush.msra.mxu0 0.0
    %113 = vmatpush.msra.mxu0 0.0
    %114 = vmatpush.msra.mxu0 0.0
    %115 = vmatpush.msra.mxu0 0.0
    %116 = vmatpush.msra.mxu0 0.0
    %117 = vmatpush.msra.mxu0 0.0
    %118 = vmatpush.msra.mxu0 0.0
    %119 = vmatpush.msra.mxu0 0.0
    %120 = vmatpush.msra.mxu0 0.0
    %121 = vmatpush.msra.mxu0 %v104
    %122 = vmatmul.f32.gmra.mxu0 %v100
    %v123 = vpop.f32.mrf.mxu0
    %v124 = vadd.f32 %v96, %v123
    %125 = vdwg.mxu0
    %v127 = vperm.slane %v73, 0
    %v129 = vadd.f32 %v124, %v127
    %v130 = vxor.u32 %v129, 2147483648
    %v131 = vmul.f32 %v130, 1.442695
    %v132 = vpow.pop %v131
    %v133 = vadd.f32 %v132, 1.0
    %v134 = vrcp.pop %v133
    %v135 = vmul.f32 %v133, %v134
    %v136 = vsub.f32 1.0, %v135
    %v137 = vmul.f32 %v134, %v136
    %v138 = vadd.f32 %v134, %v137
    %vm139 = vweird.f32 %v133
    %vm140 = vweird.f32 %v134
    %vm141 = vmor %vm139, %vm140
    %v142 = vsel %vm141, %v134, %v138
    %v143 = vand.u32 2147483647, %v133
    %vm144 = vcmp.eq.f32.partialorder %v143, 8.507059e+37
    %v145 = vand.u32 %v133, 2147483648
    %v146 = vor.u32 1.1754944e-38, %v145
    %v147 = vsel %vm144, %v146, %v142
    %v148 = vmul.f32 1.0, %v147
    %v149 = vtanh.pop %v129
    %151 = vrot.lane.b32.xlu0 %v67, 32
    %v152 = vpop.permute.xlu0 %151
    %v154 = vmul.f32 %v148, %v152
    %156 = vrot.lane.b32.xlu0 %v149, 64
    %v157 = vpop.permute.xlu0 %156
    %v159 = vmul.f32 %v148, %v157
    %161 = vrot.lane.b32.xlu0 %v159, 32
    %v162 = vpop.permute.xlu0 %161
    %v164 = vadd.f32 %v154, %v162
    %v165 = vtanh.pop %v164
    %167 = vrot.lane.b32.xlu0 %v165, 64
    %v168 = vpop.permute.xlu0 %167
    %v170 = vmul.f32 %v148, %v168
    %172 = vrot.lane.b32.xlu0 %v170, 32
    %v173 = vpop.permute.xlu0 %172
    %175 = vst.msk [vmem:[%s7] sm:$0x3] %vm60, %v173
    %177 = vrot.lane.b32.xlu0 %v164, 96
    %v178 = vpop.permute.xlu0 %177
    %180 = vst.msk [vmem:[%s8] sm:$0x3] %vm60, %v178
    %s181 = scalar_lea.vmem %s7, 2
    %v182 = vld [vmem:[%s181] sm:$0x3]
    %s183 = scalar_lea.vmem %s8, 2
    %v184 = vld [vmem:[%s183] sm:$0x3]
    %v185 = vld [vmem:[%s2] sm:$0xff]
    %v186 = vld [vmem:[%s2 + $0x8] sm:$0xff]
    %v187 = vld [vmem:[%s2 + $0x10] sm:$0xff]
    %v188 = vld [vmem:[%s2 + $0x18] sm:$0xff]
    %v189 = vld [vmem:[#allocation4] sm:$0xff]
    %v190 = vld [vmem:[#allocation4 + $0x8] sm:$0xff]
    %v191 = vld [vmem:[#allocation4 + $0x10] sm:$0xff]
    %v192 = vld [vmem:[#allocation4 + $0x18] sm:$0xff]
    %v193 = vld [vmem:[%s6] sm:$0x1]
    %v195 = vsel %vm74, %v182, 0
    %197 = vmatpush.msra.mxu0 0.0
    %198 = vmatpush.msra.mxu0 0.0
    %199 = vmatpush.msra.mxu0 0.0
    %200 = vmatpush.msra.mxu0 0.0
    %201 = vmatpush.msra.mxu0 0.0
    %202 = vmatpush.msra.mxu0 0.0
    %203 = vmatpush.msra.mxu0 0.0
    %204 = vmatpush.msra.mxu0 0.0
    %205 = vmatpush.msra.mxu0 0.0
    %206 = vmatpush.msra.mxu0 0.0
    %207 = vmatpush.msra.mxu0 0.0
    %208 = vmatpush.msra.mxu0 0.0
    %209 = vmatpush.msra.mxu0 %v192
    %210 = vmatpush.msra.mxu0 %v191
    %211 = vmatpush.msra.mxu0 %v190
    %212 = vmatpush.msra.mxu0 %v189
    %213 = vmatmul.f32.gmra.mxu0 %v195
    %v214 = vpop.f32.mrf.mxu0
    %v215 = vadd.f32 0.0, %v214
    %216 = vdwg.mxu0
    %v217 = vsel %vm74, %v173, 0
    %219 = vmatpush.msra.mxu0 0.0
    %220 = vmatpush.msra.mxu0 0.0
    %221 = vmatpush.msra.mxu0 0.0
    %222 = vmatpush.msra.mxu0 0.0
    %223 = vmatpush.msra.mxu0 0.0
    %224 = vmatpush.msra.mxu0 0.0
    %225 = vmatpush.msra.mxu0 0.0
    %226 = vmatpush.msra.mxu0 0.0
    %227 = vmatpush.msra.mxu0 0.0
    %228 = vmatpush.msra.mxu0 0.0
    %229 = vmatpush.msra.mxu0 0.0
    %230 = vmatpush.msra.mxu0 0.0
    %231 = vmatpush.msra.mxu0 %v188
    %232 = vmatpush.msra.mxu0 %v187
    %233 = vmatpush.msra.mxu0 %v186
    %234 = vmatpush.msra.mxu0 %v185
    %235 = vmatmul.f32.gmra.mxu0 %v217
    %v236 = vpop.f32.mrf.mxu0
    %v237 = vadd.f32 %v215, %v236
    %238 = vdwg.mxu0
    %v240 = vperm.slane %v193, 0
    %v242 = vadd.f32 %v237, %v240
    %v243 = vxor.u32 %v242, 2147483648
    %v244 = vmul.f32 %v243, 1.442695
    %v245 = vpow.pop %v244
    %v246 = vadd.f32 %v245, 1.0
    %v247 = vrcp.pop %v246
    %v248 = vmul.f32 %v246, %v247
    %v249 = vsub.f32 1.0, %v248
    %v250 = vmul.f32 %v247, %v249
    %v251 = vadd.f32 %v247, %v250
    %vm252 = vweird.f32 %v246
    %vm253 = vweird.f32 %v247
    %vm254 = vmor %vm252, %vm253
    %v255 = vsel %vm254, %v247, %v251
    %v256 = vand.u32 2147483647, %v246
    %vm257 = vcmp.eq.f32.partialorder %v256, 8.507059e+37
    %v258 = vand.u32 %v246, 2147483648
    %v259 = vor.u32 1.1754944e-38, %v258
    %v260 = vsel %vm257, %v259, %v255
    %v261 = vmul.f32 1.0, %v260
    %v262 = vtanh.pop %v242
    %264 = vrot.lane.b32.xlu0 %v184, 32
    %v265 = vpop.permute.xlu0 %264
    %v267 = vmul.f32 %v261, %v265
    %269 = vrot.lane.b32.xlu0 %v262, 64
    %v270 = vpop.permute.xlu0 %269
    %v272 = vmul.f32 %v261, %v270
    %274 = vrot.lane.b32.xlu0 %v272, 32
    %v275 = vpop.permute.xlu0 %274
    %v277 = vadd.f32 %v267, %v275
    %v278 = vtanh.pop %v277
    %280 = vrot.lane.b32.xlu0 %v278, 64
    %v281 = vpop.permute.xlu0 %280
    %v283 = vmul.f32 %v261, %v281
    %285 = vrot.lane.b32.xlu0 %v283, 32
    %v286 = vpop.permute.xlu0 %285
    %288 = vst.msk [vmem:[%s181] sm:$0x3] %vm60, %v286
    %290 = vrot.lane.b32.xlu0 %v277, 96
    %v291 = vpop.permute.xlu0 %290
    %293 = vst.msk [vmem:[%s183] sm:$0x3] %vm60, %v291
    %s294 = scalar_lea.vmem %s0, 2
    %v295 = vld [vmem:[%s294] sm:$0x3]
    %v296 = vld [vmem:[%s7] sm:$0x3]
    %v297 = vld [vmem:[%s8] sm:$0x3]
    %v298 = vld [vmem:[%s1] sm:$0xf]
    %v299 = vld [vmem:[#allocation2] sm:$0xff]
    %v300 = vld [vmem:[#allocation2 + $0x8] sm:$0xff]
    %v301 = vld [vmem:[#allocation2 + $0x10] sm:$0xff]
    %v302 = vld [vmem:[#allocation2 + $0x18] sm:$0xff]
    %v303 = vld [vmem:[%s5] sm:$0x1]
    %v305 = vsel %vm74, %v296, 0
    %307 = vmatpush.msra.mxu0 0.0
    %308 = vmatpush.msra.mxu0 0.0
    %309 = vmatpush.msra.mxu0 0.0
    %310 = vmatpush.msra.mxu0 0.0
    %311 = vmatpush.msra.mxu0 0.0
    %312 = vmatpush.msra.mxu0 0.0
    %313 = vmatpush.msra.mxu0 0.0
    %314 = vmatpush.msra.mxu0 0.0
    %315 = vmatpush.msra.mxu0 0.0
    %316 = vmatpush.msra.mxu0 0.0
    %317 = vmatpush.msra.mxu0 0.0
    %318 = vmatpush.msra.mxu0 0.0
    %319 = vmatpush.msra.mxu0 %v302
    %320 = vmatpush.msra.mxu0 %v301
    %321 = vmatpush.msra.mxu0 %v300
    %322 = vmatpush.msra.mxu0 %v299
    %323 = vmatmul.f32.gmra.mxu0 %v305
    %v324 = vpop.f32.mrf.mxu0
    %v325 = vadd.f32 0.0, %v324
    %326 = vdwg.mxu0
    %v328 = vsel %vm98, %v295, 0
    %v331 = vsel %vm102, %v298, 0
    %333 = vmatpush.msra.mxu0 0.0
    %334 = vmatpush.msra.mxu0 0.0
    %335 = vmatpush.msra.mxu0 0.0
    %336 = vmatpush.msra.mxu0 0.0
    %337 = vmatpush.msra.mxu0 0.0
    %338 = vmatpush.msra.mxu0 0.0
    %339 = vmatpush.msra.mxu0 0.0
    %340 = vmatpush.msra.mxu0 0.0
    %341 = vmatpush.msra.mxu0 0.0
    %342 = vmatpush.msra.mxu0 0.0
    %343 = vmatpush.msra.mxu0 0.0
    %344 = vmatpush.msra.mxu0 0.0
    %345 = vmatpush.msra.mxu0 0.0
    %346 = vmatpush.msra.mxu0 0.0
    %347 = vmatpush.msra.mxu0 0.0
    %348 = vmatpush.msra.mxu0 %v331
    %349 = vmatmul.f32.gmra.mxu0 %v328
    %v350 = vpop.f32.mrf.mxu0
    %v351 = vadd.f32 %v325, %v350
    %352 = vdwg.mxu0
    %v354 = vperm.slane %v303, 0
    %v356 = vadd.f32 %v351, %v354
    %v357 = vxor.u32 %v356, 2147483648
    %v358 = vmul.f32 %v357, 1.442695
    %v359 = vpow.pop %v358
    %v360 = vadd.f32 %v359, 1.0
    %v361 = vrcp.pop %v360
    %v362 = vmul.f32 %v360, %v361
    %v363 = vsub.f32 1.0, %v362
    %v364 = vmul.f32 %v361, %v363
    %v365 = vadd.f32 %v361, %v364
    %vm366 = vweird.f32 %v360
    %vm367 = vweird.f32 %v361
    %vm368 = vmor %vm366, %vm367
    %v369 = vsel %vm368, %v361, %v365
    %v370 = vand.u32 2147483647, %v360
    %vm371 = vcmp.eq.f32.partialorder %v370, 8.507059e+37
    %v372 = vand.u32 %v360, 2147483648
    %v373 = vor.u32 1.1754944e-38, %v372
    %v374 = vsel %vm371, %v373, %v369
    %v375 = vmul.f32 1.0, %v374
    %v376 = vtanh.pop %v356
    %378 = vrot.lane.b32.xlu0 %v297, 32
    %v379 = vpop.permute.xlu0 %378
    %v381 = vmul.f32 %v375, %v379
    %383 = vrot.lane.b32.xlu0 %v376, 64
    %v384 = vpop.permute.xlu0 %383
    %v386 = vmul.f32 %v375, %v384
    %388 = vrot.lane.b32.xlu0 %v386, 32
    %v389 = vpop.permute.xlu0 %388
    %v391 = vadd.f32 %v381, %v389
    %v392 = vtanh.pop %v391
    %394 = vrot.lane.b32.xlu0 %v392, 64
    %v395 = vpop.permute.xlu0 %394
    %v397 = vmul.f32 %v375, %v395
    %399 = vrot.lane.b32.xlu0 %v397, 32
    %v400 = vpop.permute.xlu0 %399
    %402 = vst.msk [vmem:[%s7] sm:$0x3] %vm60, %v400
    %404 = vrot.lane.b32.xlu0 %v391, 96
    %v405 = vpop.permute.xlu0 %404
    %407 = vst.msk [vmem:[%s8] sm:$0x3] %vm60, %v405
    %v408 = vld [vmem:[%s181] sm:$0x3]
    %v409 = vld [vmem:[%s183] sm:$0x3]
    %v410 = vld [vmem:[%s2] sm:$0xff]
    %v411 = vld [vmem:[%s2 + $0x8] sm:$0xff]
    %v412 = vld [vmem:[%s2 + $0x10] sm:$0xff]
    %v413 = vld [vmem:[%s2 + $0x18] sm:$0xff]
    %v414 = vld [vmem:[#allocation4] sm:$0xff]
    %v415 = vld [vmem:[#allocation4 + $0x8] sm:$0xff]
    %v416 = vld [vmem:[#allocation4 + $0x10] sm:$0xff]
    %v417 = vld [vmem:[#allocation4 + $0x18] sm:$0xff]
    %v418 = vld [vmem:[%s6] sm:$0x1]
    %v420 = vsel %vm74, %v408, 0
    %422 = vmatpush.msra.mxu0 0.0
    %423 = vmatpush.msra.mxu0 0.0
    %424 = vmatpush.msra.mxu0 0.0
    %425 = vmatpush.msra.mxu0 0.0
    %426 = vmatpush.msra.mxu0 0.0
    %427 = vmatpush.msra.mxu0 0.0
    %428 = vmatpush.msra.mxu0 0.0
    %429 = vmatpush.msra.mxu0 0.0
    %430 = vmatpush.msra.mxu0 0.0
    %431 = vmatpush.msra.mxu0 0.0
    %432 = vmatpush.msra.mxu0 0.0
    %433 = vmatpush.msra.mxu0 0.0
    %434 = vmatpush.msra.mxu0 %v417
    %435 = vmatpush.msra.mxu0 %v416
    %436 = vmatpush.msra.mxu0 %v415
    %437 = vmatpush.msra.mxu0 %v414
    %438 = vmatmul.f32.gmra.mxu0 %v420
    %v439 = vpop.f32.mrf.mxu0
    %v440 = vadd.f32 0.0, %v439
    %441 = vdwg.mxu0
    %v442 = vsel %vm74, %v400, 0
    %444 = vmatpush.msra.mxu0 0.0
    %445 = vmatpush.msra.mxu0 0.0
    %446 = vmatpush.msra.mxu0 0.0
    %447 = vmatpush.msra.mxu0 0.0
    %448 = vmatpush.msra.mxu0 0.0
    %449 = vmatpush.msra.mxu0 0.0
    %450 = vmatpush.msra.mxu0 0.0
    %451 = vmatpush.msra.mxu0 0.0
    %452 = vmatpush.msra.mxu0 0.0
    %453 = vmatpush.msra.mxu0 0.0
    %454 = vmatpush.msra.mxu0 0.0
    %455 = vmatpush.msra.mxu0 0.0
    %456 = vmatpush.msra.mxu0 %v413
    %457 = vmatpush.msra.mxu0 %v412
    %458 = vmatpush.msra.mxu0 %v411
    %459 = vmatpush.msra.mxu0 %v410
    %460 = vmatmul.f32.gmra.mxu0 %v442
    %v461 = vpop.f32.mrf.mxu0
    %v462 = vadd.f32 %v440, %v461
    %463 = vdwg.mxu0
    %v465 = vperm.slane %v418, 0
    %v467 = vadd.f32 %v462, %v465
    %v468 = vxor.u32 %v467, 2147483648
    %v469 = vmul.f32 %v468, 1.442695
    %v470 = vpow.pop %v469
    %v471 = vadd.f32 %v470, 1.0
    %v472 = vrcp.pop %v471
    %v473 = vmul.f32 %v471, %v472
    %v474 = vsub.f32 1.0, %v473
    %v475 = vmul.f32 %v472, %v474
    %v476 = vadd.f32 %v472, %v475
    %vm477 = vweird.f32 %v471
    %vm478 = vweird.f32 %v472
    %vm479 = vmor %vm477, %vm478
    %v480 = vsel %vm479, %v472, %v476
    %v481 = vand.u32 2147483647, %v471
    %vm482 = vcmp.eq.f32.partialorder %v481, 8.507059e+37
    %v483 = vand.u32 %v471, 2147483648
    %v484 = vor.u32 1.1754944e-38, %v483
    %v485 = vsel %vm482, %v484, %v480
    %v486 = vmul.f32 1.0, %v485
    %v487 = vtanh.pop %v467
    %489 = vrot.lane.b32.xlu0 %v409, 32
    %v490 = vpop.permute.xlu0 %489
    %v492 = vmul.f32 %v486, %v490
    %494 = vrot.lane.b32.xlu0 %v487, 64
    %v495 = vpop.permute.xlu0 %494
    %v497 = vmul.f32 %v486, %v495
    %499 = vrot.lane.b32.xlu0 %v497, 32
    %v500 = vpop.permute.xlu0 %499
    %v502 = vadd.f32 %v492, %v500
    %v503 = vtanh.pop %v502
    %505 = vrot.lane.b32.xlu0 %v503, 64
    %v506 = vpop.permute.xlu0 %505
    %v508 = vmul.f32 %v486, %v506
    %510 = vrot.lane.b32.xlu0 %v508, 32
    %v511 = vpop.permute.xlu0 %510
    %513 = vst.msk [vmem:[%s181] sm:$0x3] %vm60, %v511
    %515 = vrot.lane.b32.xlu0 %v502, 96
    %v516 = vpop.permute.xlu0 %515
    %518 = vst.msk [vmem:[%s183] sm:$0x3] %vm60, %v516
    %s519 = scalar_lea.vmem %s0, 4
    %v520 = vld [vmem:[%s519] sm:$0x3]
    %v521 = vld [vmem:[%s7] sm:$0x3]
    %v522 = vld [vmem:[%s8] sm:$0x3]
    %v523 = vld [vmem:[%s1] sm:$0xf]
    %v524 = vld [vmem:[#allocation2] sm:$0xff]
    %v525 = vld [vmem:[#allocation2 + $0x8] sm:$0xff]
    %v526 = vld [vmem:[#allocation2 + $0x10] sm:$0xff]
    %v527 = vld [vmem:[#allocation2 + $0x18] sm:$0xff]
    %v528 = vld [vmem:[%s5] sm:$0x1]
    %v530 = vsel %vm74, %v521, 0
    %532 = vmatpush.msra.mxu0 0.0
    %533 = vmatpush.msra.mxu0 0.0
    %534 = vmatpush.msra.mxu0 0.0
    %535 = vmatpush.msra.mxu0 0.0
    %536 = vmatpush.msra.mxu0 0.0
    %537 = vmatpush.msra.mxu0 0.0
    %538 = vmatpush.msra.mxu0 0.0
    %539 = vmatpush.msra.mxu0 0.0
    %540 = vmatpush.msra.mxu0 0.0
    %541 = vmatpush.msra.mxu0 0.0
    %542 = vmatpush.msra.mxu0 0.0
    %543 = vmatpush.msra.mxu0 0.0
    %544 = vmatpush.msra.mxu0 %v527
    %545 = vmatpush.msra.mxu0 %v526
    %546 = vmatpush.msra.mxu0 %v525
    %547 = vmatpush.msra.mxu0 %v524
    %548 = vmatmul.f32.gmra.mxu0 %v530
    %v549 = vpop.f32.mrf.mxu0
    %v550 = vadd.f32 0.0, %v549
    %551 = vdwg.mxu0
    %v553 = vsel %vm98, %v520, 0
    %v556 = vsel %vm102, %v523, 0
    %558 = vmatpush.msra.mxu0 0.0
    %559 = vmatpush.msra.mxu0 0.0
    %560 = vmatpush.msra.mxu0 0.0
    %561 = vmatpush.msra.mxu0 0.0
    %562 = vmatpush.msra.mxu0 0.0
    %563 = vmatpush.msra.mxu0 0.0
    %564 = vmatpush.msra.mxu0 0.0
    %565 = vmatpush.msra.mxu0 0.0
    %566 = vmatpush.msra.mxu0 0.0
    %567 = vmatpush.msra.mxu0 0.0
    %568 = vmatpush.msra.mxu0 0.0
    %569 = vmatpush.msra.mxu0 0.0
    %570 = vmatpush.msra.mxu0 0.0
    %571 = vmatpush.msra.mxu0 0.0
    %572 = vmatpush.msra.mxu0 0.0
    %573 = vmatpush.msra.mxu0 %v556
    %574 = vmatmul.f32.gmra.mxu0 %v553
    %v575 = vpop.f32.mrf.mxu0
    %v576 = vadd.f32 %v550, %v575
    %577 = vdwg.mxu0
    %v579 = vperm.slane %v528, 0
    %v581 = vadd.f32 %v576, %v579
    %v582 = vxor.u32 %v581, 2147483648
    %v583 = vmul.f32 %v582, 1.442695
    %v584 = vpow.pop %v583
    %v585 = vadd.f32 %v584, 1.0
    %v586 = vrcp.pop %v585
    %v587 = vmul.f32 %v585, %v586
    %v588 = vsub.f32 1.0, %v587
    %v589 = vmul.f32 %v586, %v588
    %v590 = vadd.f32 %v586, %v589
    %vm591 = vweird.f32 %v585
    %vm592 = vweird.f32 %v586
    %vm593 = vmor %vm591, %vm592
    %v594 = vsel %vm593, %v586, %v590
    %v595 = vand.u32 2147483647, %v585
    %vm596 = vcmp.eq.f32.partialorder %v595, 8.507059e+37
    %v597 = vand.u32 %v585, 2147483648
    %v598 = vor.u32 1.1754944e-38, %v597
    %v599 = vsel %vm596, %v598, %v594
    %v600 = vmul.f32 1.0, %v599
    %v601 = vtanh.pop %v581
    %603 = vrot.lane.b32.xlu0 %v522, 32
    %v604 = vpop.permute.xlu0 %603
    %v606 = vmul.f32 %v600, %v604
    %608 = vrot.lane.b32.xlu0 %v601, 64
    %v609 = vpop.permute.xlu0 %608
    %v611 = vmul.f32 %v600, %v609
    %613 = vrot.lane.b32.xlu0 %v611, 32
    %v614 = vpop.permute.xlu0 %613
    %v616 = vadd.f32 %v606, %v614
    %v617 = vtanh.pop %v616
    %619 = vrot.lane.b32.xlu0 %v617, 64
    %v620 = vpop.permute.xlu0 %619
    %v622 = vmul.f32 %v600, %v620
    %624 = vrot.lane.b32.xlu0 %v622, 32
    %v625 = vpop.permute.xlu0 %624
    %627 = vst.msk [vmem:[%s7] sm:$0x3] %vm60, %v625
    %629 = vrot.lane.b32.xlu0 %v616, 96
    %v630 = vpop.permute.xlu0 %629
    %632 = vst.msk [vmem:[%s8] sm:$0x3] %vm60, %v630
    %v633 = vld [vmem:[%s181] sm:$0x3]
    %v634 = vld [vmem:[%s183] sm:$0x3]
    %v635 = vld [vmem:[%s2] sm:$0xff]
    %v636 = vld [vmem:[%s2 + $0x8] sm:$0xff]
    %v637 = vld [vmem:[%s2 + $0x10] sm:$0xff]
    %v638 = vld [vmem:[%s2 + $0x18] sm:$0xff]
    %v639 = vld [vmem:[#allocation4] sm:$0xff]
    %v640 = vld [vmem:[#allocation4 + $0x8] sm:$0xff]
    %v641 = vld [vmem:[#allocation4 + $0x10] sm:$0xff]
    %v642 = vld [vmem:[#allocation4 + $0x18] sm:$0xff]
    %v643 = vld [vmem:[%s6] sm:$0x1]
    %v645 = vsel %vm74, %v633, 0
    %647 = vmatpush.msra.mxu0 0.0
    %648 = vmatpush.msra.mxu0 0.0
    %649 = vmatpush.msra.mxu0 0.0
    %650 = vmatpush.msra.mxu0 0.0
    %651 = vmatpush.msra.mxu0 0.0
    %652 = vmatpush.msra.mxu0 0.0
    %653 = vmatpush.msra.mxu0 0.0
    %654 = vmatpush.msra.mxu0 0.0
    %655 = vmatpush.msra.mxu0 0.0
    %656 = vmatpush.msra.mxu0 0.0
    %657 = vmatpush.msra.mxu0 0.0
    %658 = vmatpush.msra.mxu0 0.0
    %659 = vmatpush.msra.mxu0 %v642
    %660 = vmatpush.msra.mxu0 %v641
    %661 = vmatpush.msra.mxu0 %v640
    %662 = vmatpush.msra.mxu0 %v639
    %663 = vmatmul.f32.gmra.mxu0 %v645
    %v664 = vpop.f32.mrf.mxu0
    %v665 = vadd.f32 0.0, %v664
    %666 = vdwg.mxu0
    %v667 = vsel %vm74, %v625, 0
    %669 = vmatpush.msra.mxu0 0.0
    %670 = vmatpush.msra.mxu0 0.0
    %671 = vmatpush.msra.mxu0 0.0
    %672 = vmatpush.msra.mxu0 0.0
    %673 = vmatpush.msra.mxu0 0.0
    %674 = vmatpush.msra.mxu0 0.0
    %675 = vmatpush.msra.mxu0 0.0
    %676 = vmatpush.msra.mxu0 0.0
    %677 = vmatpush.msra.mxu0 0.0
    %678 = vmatpush.msra.mxu0 0.0
    %679 = vmatpush.msra.mxu0 0.0
    %680 = vmatpush.msra.mxu0 0.0
    %681 = vmatpush.msra.mxu0 %v638
    %682 = vmatpush.msra.mxu0 %v637
    %683 = vmatpush.msra.mxu0 %v636
    %684 = vmatpush.msra.mxu0 %v635
    %685 = vmatmul.f32.gmra.mxu0 %v667
    %v686 = vpop.f32.mrf.mxu0
    %v687 = vadd.f32 %v665, %v686
    %688 = vdwg.mxu0
    %v690 = vperm.slane %v643, 0
    %v692 = vadd.f32 %v687, %v690
    %v693 = vxor.u32 %v692, 2147483648
    %v694 = vmul.f32 %v693, 1.442695
    %v695 = vpow.pop %v694
    %v696 = vadd.f32 %v695, 1.0
    %v697 = vrcp.pop %v696
    %v698 = vmul.f32 %v696, %v697
    %v699 = vsub.f32 1.0, %v698
    %v700 = vmul.f32 %v697, %v699
    %v701 = vadd.f32 %v697, %v700
    %vm702 = vweird.f32 %v696
    %vm703 = vweird.f32 %v697
    %vm704 = vmor %vm702, %vm703
    %v705 = vsel %vm704, %v697, %v701
    %v706 = vand.u32 2147483647, %v696
    %vm707 = vcmp.eq.f32.partialorder %v706, 8.507059e+37
    %v708 = vand.u32 %v696, 2147483648
    %v709 = vor.u32 1.1754944e-38, %v708
    %v710 = vsel %vm707, %v709, %v705
    %v711 = vmul.f32 1.0, %v710
    %v712 = vtanh.pop %v692
    %714 = vrot.lane.b32.xlu0 %v634, 32
    %v715 = vpop.permute.xlu0 %714
    %v717 = vmul.f32 %v711, %v715
    %719 = vrot.lane.b32.xlu0 %v712, 64
    %v720 = vpop.permute.xlu0 %719
    %v722 = vmul.f32 %v711, %v720
    %724 = vrot.lane.b32.xlu0 %v722, 32
    %v725 = vpop.permute.xlu0 %724
    %v727 = vadd.f32 %v717, %v725
    %v728 = vtanh.pop %v727
    %730 = vrot.lane.b32.xlu0 %v728, 64
    %v731 = vpop.permute.xlu0 %730
    %v733 = vmul.f32 %v711, %v731
    %735 = vrot.lane.b32.xlu0 %v733, 32
    %v736 = vpop.permute.xlu0 %735
    %738 = vst.msk [vmem:[%s181] sm:$0x3] %vm60, %v736
    %740 = vrot.lane.b32.xlu0 %v727, 96
    %v741 = vpop.permute.xlu0 %740
    %743 = vst.msk [vmem:[%s183] sm:$0x3] %vm60, %v741
    %s744 = scalar_lea.vmem %s0, 6
    %v745 = vld [vmem:[%s744] sm:$0x3]
    %v746 = vld [vmem:[%s7] sm:$0x3]
    %v747 = vld [vmem:[%s8] sm:$0x3]
    %v748 = vld [vmem:[%s1] sm:$0xf]
    %v749 = vld [vmem:[#allocation2] sm:$0xff]
    %v750 = vld [vmem:[#allocation2 + $0x8] sm:$0xff]
    %v751 = vld [vmem:[#allocation2 + $0x10] sm:$0xff]
    %v752 = vld [vmem:[#allocation2 + $0x18] sm:$0xff]
    %v753 = vld [vmem:[%s5] sm:$0x1]
    %v755 = vsel %vm74, %v746, 0
    %757 = vmatpush.msra.mxu0 0.0
    %758 = vmatpush.msra.mxu0 0.0
    %759 = vmatpush.msra.mxu0 0.0
    %760 = vmatpush.msra.mxu0 0.0
    %761 = vmatpush.msra.mxu0 0.0
    %762 = vmatpush.msra.mxu0 0.0
    %763 = vmatpush.msra.mxu0 0.0
    %764 = vmatpush.msra.mxu0 0.0
    %765 = vmatpush.msra.mxu0 0.0
    %766 = vmatpush.msra.mxu0 0.0
    %767 = vmatpush.msra.mxu0 0.0
    %768 = vmatpush.msra.mxu0 0.0
    %769 = vmatpush.msra.mxu0 %v752
    %770 = vmatpush.msra.mxu0 %v751
    %771 = vmatpush.msra.mxu0 %v750
    %772 = vmatpush.msra.mxu0 %v749
    %773 = vmatmul.f32.gmra.mxu0 %v755
    %v774 = vpop.f32.mrf.mxu0
    %v775 = vadd.f32 0.0, %v774
    %776 = vdwg.mxu0
    %v778 = vsel %vm98, %v745, 0
    %v781 = vsel %vm102, %v748, 0
    %783 = vmatpush.msra.mxu0 0.0
    %784 = vmatpush.msra.mxu0 0.0
    %785 = vmatpush.msra.mxu0 0.0
    %786 = vmatpush.msra.mxu0 0.0
    %787 = vmatpush.msra.mxu0 0.0
    %788 = vmatpush.msra.mxu0 0.0
    %789 = vmatpush.msra.mxu0 0.0
    %790 = vmatpush.msra.mxu0 0.0
    %791 = vmatpush.msra.mxu0 0.0
    %792 = vmatpush.msra.mxu0 0.0
    %793 = vmatpush.msra.mxu0 0.0
    %794 = vmatpush.msra.mxu0 0.0
    %795 = vmatpush.msra.mxu0 0.0
    %796 = vmatpush.msra.mxu0 0.0
    %797 = vmatpush.msra.mxu0 0.0
    %798 = vmatpush.msra.mxu0 %v781
    %799 = vmatmul.f32.gmra.mxu0 %v778
    %v800 = vpop.f32.mrf.mxu0
    %v801 = vadd.f32 %v775, %v800
    %802 = vdwg.mxu0
    %v804 = vperm.slane %v753, 0
    %v806 = vadd.f32 %v801, %v804
    %v807 = vxor.u32 %v806, 2147483648
    %v808 = vmul.f32 %v807, 1.442695
    %v809 = vpow.pop %v808
    %v810 = vadd.f32 %v809, 1.0
    %v811 = vrcp.pop %v810
    %v812 = vmul.f32 %v810, %v811
    %v813 = vsub.f32 1.0, %v812
    %v814 = vmul.f32 %v811, %v813
    %v815 = vadd.f32 %v811, %v814
    %vm816 = vweird.f32 %v810
    %vm817 = vweird.f32 %v811
    %vm818 = vmor %vm816, %vm817
    %v819 = vsel %vm818, %v811, %v815
    %v820 = vand.u32 2147483647, %v810
    %vm821 = vcmp.eq.f32.partialorder %v820, 8.507059e+37
    %v822 = vand.u32 %v810, 2147483648
    %v823 = vor.u32 1.1754944e-38, %v822
    %v824 = vsel %vm821, %v823, %v819
    %v825 = vmul.f32 1.0, %v824
    %v826 = vtanh.pop %v806
    %828 = vrot.lane.b32.xlu0 %v747, 32
    %v829 = vpop.permute.xlu0 %828
    %v831 = vmul.f32 %v825, %v829
    %833 = vrot.lane.b32.xlu0 %v826, 64
    %v834 = vpop.permute.xlu0 %833
    %v836 = vmul.f32 %v825, %v834
    %838 = vrot.lane.b32.xlu0 %v836, 32
    %v839 = vpop.permute.xlu0 %838
    %v841 = vadd.f32 %v831, %v839
    %v842 = vtanh.pop %v841
    %844 = vrot.lane.b32.xlu0 %v842, 64
    %v845 = vpop.permute.xlu0 %844
    %v847 = vmul.f32 %v825, %v845
    %849 = vrot.lane.b32.xlu0 %v847, 32
    %v850 = vpop.permute.xlu0 %849
    %852 = vst.msk [vmem:[%s7] sm:$0x3] %vm60, %v850
    %854 = vrot.lane.b32.xlu0 %v841, 96
    %v855 = vpop.permute.xlu0 %854
    %857 = vst.msk [vmem:[%s8] sm:$0x3] %vm60, %v855
    %v858 = vld [vmem:[%s181] sm:$0x3]
    %v859 = vld [vmem:[%s183] sm:$0x3]
    %v860 = vld [vmem:[%s2] sm:$0xff]
    %v861 = vld [vmem:[%s2 + $0x8] sm:$0xff]
    %v862 = vld [vmem:[%s2 + $0x10] sm:$0xff]
    %v863 = vld [vmem:[%s2 + $0x18] sm:$0xff]
    %v864 = vld [vmem:[#allocation4] sm:$0xff]
    %v865 = vld [vmem:[#allocation4 + $0x8] sm:$0xff]
    %v866 = vld [vmem:[#allocation4 + $0x10] sm:$0xff]
    %v867 = vld [vmem:[#allocation4 + $0x18] sm:$0xff]
    %v868 = vld [vmem:[%s6] sm:$0x1]
    %v870 = vsel %vm74, %v858, 0
    %872 = vmatpush.msra.mxu0 0.0
    %873 = vmatpush.msra.mxu0 0.0
    %874 = vmatpush.msra.mxu0 0.0
    %875 = vmatpush.msra.mxu0 0.0
    %876 = vmatpush.msra.mxu0 0.0
    %877 = vmatpush.msra.mxu0 0.0
    %878 = vmatpush.msra.mxu0 0.0
    %879 = vmatpush.msra.mxu0 0.0
    %880 = vmatpush.msra.mxu0 0.0
    %881 = vmatpush.msra.mxu0 0.0
    %882 = vmatpush.msra.mxu0 0.0
    %883 = vmatpush.msra.mxu0 0.0
    %884 = vmatpush.msra.mxu0 %v867
    %885 = vmatpush.msra.mxu0 %v866
    %886 = vmatpush.msra.mxu0 %v865
    %887 = vmatpush.msra.mxu0 %v864
    %888 = vmatmul.f32.gmra.mxu0 %v870
    %v889 = vpop.f32.mrf.mxu0
    %v890 = vadd.f32 0.0, %v889
    %891 = vdwg.mxu0
    %v892 = vsel %vm74, %v850, 0
    %894 = vmatpush.msra.mxu0 0.0
    %895 = vmatpush.msra.mxu0 0.0
    %896 = vmatpush.msra.mxu0 0.0
    %897 = vmatpush.msra.mxu0 0.0
    %898 = vmatpush.msra.mxu0 0.0
    %899 = vmatpush.msra.mxu0 0.0
    %900 = vmatpush.msra.mxu0 0.0
    %901 = vmatpush.msra.mxu0 0.0
    %902 = vmatpush.msra.mxu0 0.0
    %903 = vmatpush.msra.mxu0 0.0
    %904 = vmatpush.msra.mxu0 0.0
    %905 = vmatpush.msra.mxu0 0.0
    %906 = vmatpush.msra.mxu0 %v863
    %907 = vmatpush.msra.mxu0 %v862
    %908 = vmatpush.msra.mxu0 %v861
    %909 = vmatpush.msra.mxu0 %v860
    %910 = vmatmul.f32.gmra.mxu0 %v892
    %v911 = vpop.f32.mrf.mxu0
    %v912 = vadd.f32 %v890, %v911
    %913 = vdwg.mxu0
    %v915 = vperm.slane %v868, 0
    %v917 = vadd.f32 %v912, %v915
    %v918 = vxor.u32 %v917, 2147483648
    %v919 = vmul.f32 %v918, 1.442695
    %v920 = vpow.pop %v919
    %v921 = vadd.f32 %v920, 1.0
    %v922 = vrcp.pop %v921
    %v923 = vmul.f32 %v921, %v922
    %v924 = vsub.f32 1.0, %v923
    %v925 = vmul.f32 %v922, %v924
    %v926 = vadd.f32 %v922, %v925
    %vm927 = vweird.f32 %v921
    %vm928 = vweird.f32 %v922
    %vm929 = vmor %vm927, %vm928
    %v930 = vsel %vm929, %v922, %v926
    %v931 = vand.u32 2147483647, %v921
    %vm932 = vcmp.eq.f32.partialorder %v931, 8.507059e+37
    %v933 = vand.u32 %v921, 2147483648
    %v934 = vor.u32 1.1754944e-38, %v933
    %v935 = vsel %vm932, %v934, %v930
    %v936 = vmul.f32 1.0, %v935
    %v937 = vtanh.pop %v917
    %939 = vrot.lane.b32.xlu0 %v859, 32
    %v940 = vpop.permute.xlu0 %939
    %v942 = vmul.f32 %v936, %v940
    %944 = vrot.lane.b32.xlu0 %v937, 64
    %v945 = vpop.permute.xlu0 %944
    %v947 = vmul.f32 %v936, %v945
    %949 = vrot.lane.b32.xlu0 %v947, 32
    %v950 = vpop.permute.xlu0 %949
    %v952 = vadd.f32 %v942, %v950
    %v953 = vtanh.pop %v952
    %955 = vrot.lane.b32.xlu0 %v953, 64
    %v956 = vpop.permute.xlu0 %955
    %v958 = vmul.f32 %v936, %v956
    %960 = vrot.lane.b32.xlu0 %v958, 32
    %v961 = vpop.permute.xlu0 %960
    %963 = vst.msk [vmem:[%s181] sm:$0x3] %vm60, %v961
    %965 = vrot.lane.b32.xlu0 %v952, 96
    %v966 = vpop.permute.xlu0 %965
    %968 = vst.msk [vmem:[%s183] sm:$0x3] %vm60, %v966
    %s969 = scalar_lea.vmem %s0, 8
    %v970 = vld [vmem:[%s969] sm:$0x3]
    %v971 = vld [vmem:[%s7] sm:$0x3]
    %v972 = vld [vmem:[%s8] sm:$0x3]
    %v973 = vld [vmem:[%s1] sm:$0xf]
    %v974 = vld [vmem:[#allocation2] sm:$0xff]
    %v975 = vld [vmem:[#allocation2 + $0x8] sm:$0xff]
    %v976 = vld [vmem:[#allocation2 + $0x10] sm:$0xff]
    %v977 = vld [vmem:[#allocation2 + $0x18] sm:$0xff]
    %v978 = vld [vmem:[%s5] sm:$0x1]
    %v980 = vsel %vm74, %v971, 0
    %982 = vmatpush.msra.mxu0 0.0
    %983 = vmatpush.msra.mxu0 0.0
    %984 = vmatpush.msra.mxu0 0.0
    %985 = vmatpush.msra.mxu0 0.0
    %986 = vmatpush.msra.mxu0 0.0
    %987 = vmatpush.msra.mxu0 0.0
    %988 = vmatpush.msra.mxu0 0.0
    %989 = vmatpush.msra.mxu0 0.0
    %990 = vmatpush.msra.mxu0 0.0
    %991 = vmatpush.msra.mxu0 0.0
    %992 = vmatpush.msra.mxu0 0.0
    %993 = vmatpush.msra.mxu0 0.0
    %994 = vmatpush.msra.mxu0 %v977
    %995 = vmatpush.msra.mxu0 %v976
    %996 = vmatpush.msra.mxu0 %v975
    %997 = vmatpush.msra.mxu0 %v974
    %998 = vmatmul.f32.gmra.mxu0 %v980
    %v999 = vpop.f32.mrf.mxu0
    %v1000 = vadd.f32 0.0, %v999
    %1001 = vdwg.mxu0
    %v1003 = vsel %vm98, %v970, 0
    %v1006 = vsel %vm102, %v973, 0
    %1008 = vmatpush.msra.mxu0 0.0
    %1009 = vmatpush.msra.mxu0 0.0
    %1010 = vmatpush.msra.mxu0 0.0
    %1011 = vmatpush.msra.mxu0 0.0
    %1012 = vmatpush.msra.mxu0 0.0
    %1013 = vmatpush.msra.mxu0 0.0
    %1014 = vmatpush.msra.mxu0 0.0
    %1015 = vmatpush.msra.mxu0 0.0
    %1016 = vmatpush.msra.mxu0 0.0
    %1017 = vmatpush.msra.mxu0 0.0
    %1018 = vmatpush.msra.mxu0 0.0
    %1019 = vmatpush.msra.mxu0 0.0
    %1020 = vmatpush.msra.mxu0 0.0
    %1021 = vmatpush.msra.mxu0 0.0
    %1022 = vmatpush.msra.mxu0 0.0
    %1023 = vmatpush.msra.mxu0 %v1006
    %1024 = vmatmul.f32.gmra.mxu0 %v1003
    %v1025 = vpop.f32.mrf.mxu0
    %v1026 = vadd.f32 %v1000, %v1025
    %1027 = vdwg.mxu0
    %v1029 = vperm.slane %v978, 0
    %v1031 = vadd.f32 %v1026, %v1029
    %v1032 = vxor.u32 %v1031, 2147483648
    %v1033 = vmul.f32 %v1032, 1.442695
    %v1034 = vpow.pop %v1033
    %v1035 = vadd.f32 %v1034, 1.0
    %v1036 = vrcp.pop %v1035
    %v1037 = vmul.f32 %v1035, %v1036
    %v1038 = vsub.f32 1.0, %v1037
    %v1039 = vmul.f32 %v1036, %v1038
    %v1040 = vadd.f32 %v1036, %v1039
    %vm1041 = vweird.f32 %v1035
    %vm1042 = vweird.f32 %v1036
    %vm1043 = vmor %vm1041, %vm1042
    %v1044 = vsel %vm1043, %v1036, %v1040
    %v1045 = vand.u32 2147483647, %v1035
    %vm1046 = vcmp.eq.f32.partialorder %v1045, 8.507059e+37
    %v1047 = vand.u32 %v1035, 2147483648
    %v1048 = vor.u32 1.1754944e-38, %v1047
    %v1049 = vsel %vm1046, %v1048, %v1044
    %v1050 = vmul.f32 1.0, %v1049
    %v1051 = vtanh.pop %v1031
    %1053 = vrot.lane.b32.xlu0 %v972, 32
    %v1054 = vpop.permute.xlu0 %1053
    %v1056 = vmul.f32 %v1050, %v1054
    %1058 = vrot.lane.b32.xlu0 %v1051, 64
    %v1059 = vpop.permute.xlu0 %1058
    %v1061 = vmul.f32 %v1050, %v1059
    %1063 = vrot.lane.b32.xlu0 %v1061, 32
    %v1064 = vpop.permute.xlu0 %1063
    %v1066 = vadd.f32 %v1056, %v1064
    %v1067 = vtanh.pop %v1066
    %1069 = vrot.lane.b32.xlu0 %v1067, 64
    %v1070 = vpop.permute.xlu0 %1069
    %v1072 = vmul.f32 %v1050, %v1070
    %1074 = vrot.lane.b32.xlu0 %v1072, 32
    %v1075 = vpop.permute.xlu0 %1074
    %1077 = vst.msk [vmem:[%s7] sm:$0x3] %vm60, %v1075
    %1079 = vrot.lane.b32.xlu0 %v1066, 96
    %v1080 = vpop.permute.xlu0 %1079
    %1082 = vst.msk [vmem:[%s8] sm:$0x3] %vm60, %v1080
    %v1083 = vld [vmem:[%s181] sm:$0x3]
    %v1084 = vld [vmem:[%s183] sm:$0x3]
    %v1085 = vld [vmem:[%s2] sm:$0xff]
    %v1086 = vld [vmem:[%s2 + $0x8] sm:$0xff]
    %v1087 = vld [vmem:[%s2 + $0x10] sm:$0xff]
    %v1088 = vld [vmem:[%s2 + $0x18] sm:$0xff]
    %v1089 = vld [vmem:[#allocation4] sm:$0xff]
    %v1090 = vld [vmem:[#allocation4 + $0x8] sm:$0xff]
    %v1091 = vld [vmem:[#allocation4 + $0x10] sm:$0xff]
    %v1092 = vld [vmem:[#allocation4 + $0x18] sm:$0xff]
    %v1093 = vld [vmem:[%s6] sm:$0x1]
    %v1095 = vsel %vm74, %v1083, 0
    %1097 = vmatpush.msra.mxu0 0.0
    %1098 = vmatpush.msra.mxu0 0.0
    %1099 = vmatpush.msra.mxu0 0.0
    %1100 = vmatpush.msra.mxu0 0.0
    %1101 = vmatpush.msra.mxu0 0.0
    %1102 = vmatpush.msra.mxu0 0.0
    %1103 = vmatpush.msra.mxu0 0.0
    %1104 = vmatpush.msra.mxu0 0.0
    %1105 = vmatpush.msra.mxu0 0.0
    %1106 = vmatpush.msra.mxu0 0.0
    %1107 = vmatpush.msra.mxu0 0.0
    %1108 = vmatpush.msra.mxu0 0.0
    %1109 = vmatpush.msra.mxu0 %v1092
    %1110 = vmatpush.msra.mxu0 %v1091
    %1111 = vmatpush.msra.mxu0 %v1090
    %1112 = vmatpush.msra.mxu0 %v1089
    %1113 = vmatmul.f32.gmra.mxu0 %v1095
    %v1114 = vpop.f32.mrf.mxu0
    %v1115 = vadd.f32 0.0, %v1114
    %1116 = vdwg.mxu0
    %v1117 = vsel %vm74, %v1075, 0
    %1119 = vmatpush.msra.mxu0 0.0
    %1120 = vmatpush.msra.mxu0 0.0
    %1121 = vmatpush.msra.mxu0 0.0
    %1122 = vmatpush.msra.mxu0 0.0
    %1123 = vmatpush.msra.mxu0 0.0
    %1124 = vmatpush.msra.mxu0 0.0
    %1125 = vmatpush.msra.mxu0 0.0
    %1126 = vmatpush.msra.mxu0 0.0
    %1127 = vmatpush.msra.mxu0 0.0
    %1128 = vmatpush.msra.mxu0 0.0
    %1129 = vmatpush.msra.mxu0 0.0
    %1130 = vmatpush.msra.mxu0 0.0
    %1131 = vmatpush.msra.mxu0 %v1088
    %1132 = vmatpush.msra.mxu0 %v1087
    %1133 = vmatpush.msra.mxu0 %v1086
    %1134 = vmatpush.msra.mxu0 %v1085
    %1135 = vmatmul.f32.gmra.mxu0 %v1117
    %v1136 = vpop.f32.mrf.mxu0
    %v1137 = vadd.f32 %v1115, %v1136
    %1138 = vdwg.mxu0
    %v1140 = vperm.slane %v1093, 0
    %v1142 = vadd.f32 %v1137, %v1140
    %v1143 = vxor.u32 %v1142, 2147483648
    %v1144 = vmul.f32 %v1143, 1.442695
    %v1145 = vpow.pop %v1144
    %v1146 = vadd.f32 %v1145, 1.0
    %v1147 = vrcp.pop %v1146
    %v1148 = vmul.f32 %v1146, %v1147
    %v1149 = vsub.f32 1.0, %v1148
    %v1150 = vmul.f32 %v1147, %v1149
    %v1151 = vadd.f32 %v1147, %v1150
    %vm1152 = vweird.f32 %v1146
    %vm1153 = vweird.f32 %v1147
    %vm1154 = vmor %vm1152, %vm1153
    %v1155 = vsel %vm1154, %v1147, %v1151
    %v1156 = vand.u32 2147483647, %v1146
    %vm1157 = vcmp.eq.f32.partialorder %v1156, 8.507059e+37
    %v1158 = vand.u32 %v1146, 2147483648
    %v1159 = vor.u32 1.1754944e-38, %v1158
    %v1160 = vsel %vm1157, %v1159, %v1155
    %v1161 = vmul.f32 1.0, %v1160
    %v1162 = vtanh.pop %v1142
    %1164 = vrot.lane.b32.xlu0 %v1084, 32
    %v1165 = vpop.permute.xlu0 %1164
    %v1167 = vmul.f32 %v1161, %v1165
    %1169 = vrot.lane.b32.xlu0 %v1162, 64
    %v1170 = vpop.permute.xlu0 %1169
    %v1172 = vmul.f32 %v1161, %v1170
    %1174 = vrot.lane.b32.xlu0 %v1172, 32
    %v1175 = vpop.permute.xlu0 %1174
    %v1177 = vadd.f32 %v1167, %v1175
    %v1178 = vtanh.pop %v1177
    %1180 = vrot.lane.b32.xlu0 %v1178, 64
    %v1181 = vpop.permute.xlu0 %1180
    %v1183 = vmul.f32 %v1161, %v1181
    %1185 = vrot.lane.b32.xlu0 %v1183, 32
    %v1186 = vpop.permute.xlu0 %1185
    %1188 = vst.msk [vmem:[%s181] sm:$0x3] %vm60, %v1186
    %1190 = vrot.lane.b32.xlu0 %v1177, 96
    %v1191 = vpop.permute.xlu0 %1190
    %1193 = vst.msk [vmem:[%s183] sm:$0x3] %vm60, %v1191
    %s1194 = scalar_lea.vmem %s0, 10
    %v1195 = vld [vmem:[%s1194] sm:$0x3]
    %v1196 = vld [vmem:[%s7] sm:$0x3]
    %v1197 = vld [vmem:[%s8] sm:$0x3]
    %v1198 = vld [vmem:[%s1] sm:$0xf]
    %v1199 = vld [vmem:[#allocation2] sm:$0xff]
    %v1200 = vld [vmem:[#allocation2 + $0x8] sm:$0xff]
    %v1201 = vld [vmem:[#allocation2 + $0x10] sm:$0xff]
    %v1202 = vld [vmem:[#allocation2 + $0x18] sm:$0xff]
    %v1203 = vld [vmem:[%s5] sm:$0x1]
    %v1205 = vsel %vm74, %v1196, 0
    %1207 = vmatpush.msra.mxu0 0.0
    %1208 = vmatpush.msra.mxu0 0.0
    %1209 = vmatpush.msra.mxu0 0.0
    %1210 = vmatpush.msra.mxu0 0.0
    %1211 = vmatpush.msra.mxu0 0.0
    %1212 = vmatpush.msra.mxu0 0.0
    %1213 = vmatpush.msra.mxu0 0.0
    %1214 = vmatpush.msra.mxu0 0.0
    %1215 = vmatpush.msra.mxu0 0.0
    %1216 = vmatpush.msra.mxu0 0.0
    %1217 = vmatpush.msra.mxu0 0.0
    %1218 = vmatpush.msra.mxu0 0.0
    %1219 = vmatpush.msra.mxu0 %v1202
    %1220 = vmatpush.msra.mxu0 %v1201
    %1221 = vmatpush.msra.mxu0 %v1200
    %1222 = vmatpush.msra.mxu0 %v1199
    %1223 = vmatmul.f32.gmra.mxu0 %v1205
    %v1224 = vpop.f32.mrf.mxu0
    %v1225 = vadd.f32 0.0, %v1224
    %1226 = vdwg.mxu0
    %v1228 = vsel %vm98, %v1195, 0
    %v1231 = vsel %vm102, %v1198, 0
    %1233 = vmatpush.msra.mxu0 0.0
    %1234 = vmatpush.msra.mxu0 0.0
    %1235 = vmatpush.msra.mxu0 0.0
    %1236 = vmatpush.msra.mxu0 0.0
    %1237 = vmatpush.msra.mxu0 0.0
    %1238 = vmatpush.msra.mxu0 0.0
    %1239 = vmatpush.msra.mxu0 0.0
    %1240 = vmatpush.msra.mxu0 0.0
    %1241 = vmatpush.msra.mxu0 0.0
    %1242 = vmatpush.msra.mxu0 0.0
    %1243 = vmatpush.msra.mxu0 0.0
    %1244 = vmatpush.msra.mxu0 0.0
    %1245 = vmatpush.msra.mxu0 0.0
    %1246 = vmatpush.msra.mxu0 0.0
    %1247 = vmatpush.msra.mxu0 0.0
    %1248 = vmatpush.msra.mxu0 %v1231
    %1249 = vmatmul.f32.gmra.mxu0 %v1228
    %v1250 = vpop.f32.mrf.mxu0
    %v1251 = vadd.f32 %v1225, %v1250
    %1252 = vdwg.mxu0
    %v1254 = vperm.slane %v1203, 0
    %v1256 = vadd.f32 %v1251, %v1254
    %v1257 = vxor.u32 %v1256, 2147483648
    %v1258 = vmul.f32 %v1257, 1.442695
    %v1259 = vpow.pop %v1258
    %v1260 = vadd.f32 %v1259, 1.0
    %v1261 = vrcp.pop %v1260
    %v1262 = vmul.f32 %v1260, %v1261
    %v1263 = vsub.f32 1.0, %v1262
    %v1264 = vmul.f32 %v1261, %v1263
    %v1265 = vadd.f32 %v1261, %v1264
    %vm1266 = vweird.f32 %v1260
    %vm1267 = vweird.f32 %v1261
    %vm1268 = vmor %vm1266, %vm1267
    %v1269 = vsel %vm1268, %v1261, %v1265
    %v1270 = vand.u32 2147483647, %v1260
    %vm1271 = vcmp.eq.f32.partialorder %v1270, 8.507059e+37
    %v1272 = vand.u32 %v1260, 2147483648
    %v1273 = vor.u32 1.1754944e-38, %v1272
    %v1274 = vsel %vm1271, %v1273, %v1269
    %v1275 = vmul.f32 1.0, %v1274
    %v1276 = vtanh.pop %v1256
    %1278 = vrot.lane.b32.xlu0 %v1197, 32
    %v1279 = vpop.permute.xlu0 %1278
    %v1281 = vmul.f32 %v1275, %v1279
    %1283 = vrot.lane.b32.xlu0 %v1276, 64
    %v1284 = vpop.permute.xlu0 %1283
    %v1286 = vmul.f32 %v1275, %v1284
    %1288 = vrot.lane.b32.xlu0 %v1286, 32
    %v1289 = vpop.permute.xlu0 %1288
    %v1291 = vadd.f32 %v1281, %v1289
    %v1292 = vtanh.pop %v1291
    %1294 = vrot.lane.b32.xlu0 %v1292, 64
    %v1295 = vpop.permute.xlu0 %1294
    %v1297 = vmul.f32 %v1275, %v1295
    %1299 = vrot.lane.b32.xlu0 %v1297, 32
    %v1300 = vpop.permute.xlu0 %1299
    %1302 = vst.msk [vmem:[%s7] sm:$0x3] %vm60, %v1300
    %1304 = vrot.lane.b32.xlu0 %v1291, 96
    %v1305 = vpop.permute.xlu0 %1304
    %1307 = vst.msk [vmem:[%s8] sm:$0x3] %vm60, %v1305
    %v1308 = vld [vmem:[%s181] sm:$0x3]
    %v1309 = vld [vmem:[%s183] sm:$0x3]
    %v1310 = vld [vmem:[%s2] sm:$0xff]
    %v1311 = vld [vmem:[%s2 + $0x8] sm:$0xff]
    %v1312 = vld [vmem:[%s2 + $0x10] sm:$0xff]
    %v1313 = vld [vmem:[%s2 + $0x18] sm:$0xff]
    %v1314 = vld [vmem:[#allocation4] sm:$0xff]
    %v1315 = vld [vmem:[#allocation4 + $0x8] sm:$0xff]
    %v1316 = vld [vmem:[#allocation4 + $0x10] sm:$0xff]
    %v1317 = vld [vmem:[#allocation4 + $0x18] sm:$0xff]
    %v1318 = vld [vmem:[%s6] sm:$0x1]
    %v1320 = vsel %vm74, %v1308, 0
    %1322 = vmatpush.msra.mxu0 0.0
    %1323 = vmatpush.msra.mxu0 0.0
    %1324 = vmatpush.msra.mxu0 0.0
    %1325 = vmatpush.msra.mxu0 0.0
    %1326 = vmatpush.msra.mxu0 0.0
    %1327 = vmatpush.msra.mxu0 0.0
    %1328 = vmatpush.msra.mxu0 0.0
    %1329 = vmatpush.msra.mxu0 0.0
    %1330 = vmatpush.msra.mxu0 0.0
    %1331 = vmatpush.msra.mxu0 0.0
    %1332 = vmatpush.msra.mxu0 0.0
    %1333 = vmatpush.msra.mxu0 0.0
    %1334 = vmatpush.msra.mxu0 %v1317
    %1335 = vmatpush.msra.mxu0 %v1316
    %1336 = vmatpush.msra.mxu0 %v1315
    %1337 = vmatpush.msra.mxu0 %v1314
    %1338 = vmatmul.f32.gmra.mxu0 %v1320
    %v1339 = vpop.f32.mrf.mxu0
    %v1340 = vadd.f32 0.0, %v1339
    %1341 = vdwg.mxu0
    %v1342 = vsel %vm74, %v1300, 0
    %1344 = vmatpush.msra.mxu0 0.0
    %1345 = vmatpush.msra.mxu0 0.0
    %1346 = vmatpush.msra.mxu0 0.0
    %1347 = vmatpush.msra.mxu0 0.0
    %1348 = vmatpush.msra.mxu0 0.0
    %1349 = vmatpush.msra.mxu0 0.0
    %1350 = vmatpush.msra.mxu0 0.0
    %1351 = vmatpush.msra.mxu0 0.0
    %1352 = vmatpush.msra.mxu0 0.0
    %1353 = vmatpush.msra.mxu0 0.0
    %1354 = vmatpush.msra.mxu0 0.0
    %1355 = vmatpush.msra.mxu0 0.0
    %1356 = vmatpush.msra.mxu0 %v1313
    %1357 = vmatpush.msra.mxu0 %v1312
    %1358 = vmatpush.msra.mxu0 %v1311
    %1359 = vmatpush.msra.mxu0 %v1310
    %1360 = vmatmul.f32.gmra.mxu0 %v1342
    %v1361 = vpop.f32.mrf.mxu0
    %v1362 = vadd.f32 %v1340, %v1361
    %1363 = vdwg.mxu0
    %v1365 = vperm.slane %v1318, 0
    %v1367 = vadd.f32 %v1362, %v1365
    %v1368 = vxor.u32 %v1367, 2147483648
    %v1369 = vmul.f32 %v1368, 1.442695
    %v1370 = vpow.pop %v1369
    %v1371 = vadd.f32 %v1370, 1.0
    %v1372 = vrcp.pop %v1371
    %v1373 = vmul.f32 %v1371, %v1372
    %v1374 = vsub.f32 1.0, %v1373
    %v1375 = vmul.f32 %v1372, %v1374
    %v1376 = vadd.f32 %v1372, %v1375
    %vm1377 = vweird.f32 %v1371
    %vm1378 = vweird.f32 %v1372
    %vm1379 = vmor %vm1377, %vm1378
    %v1380 = vsel %vm1379, %v1372, %v1376
    %v1381 = vand.u32 2147483647, %v1371
    %vm1382 = vcmp.eq.f32.partialorder %v1381, 8.507059e+37
    %v1383 = vand.u32 %v1371, 2147483648
    %v1384 = vor.u32 1.1754944e-38, %v1383
    %v1385 = vsel %vm1382, %v1384, %v1380
    %v1386 = vmul.f32 1.0, %v1385
    %v1387 = vtanh.pop %v1367
    %1389 = vrot.lane.b32.xlu0 %v1309, 32
    %v1390 = vpop.permute.xlu0 %1389
    %v1392 = vmul.f32 %v1386, %v1390
    %1394 = vrot.lane.b32.xlu0 %v1387, 64
    %v1395 = vpop.permute.xlu0 %1394
    %v1397 = vmul.f32 %v1386, %v1395
    %1399 = vrot.lane.b32.xlu0 %v1397, 32
    %v1400 = vpop.permute.xlu0 %1399
    %v1402 = vadd.f32 %v1392, %v1400
    %v1403 = vtanh.pop %v1402
    %1405 = vrot.lane.b32.xlu0 %v1403, 64
    %v1406 = vpop.permute.xlu0 %1405
    %v1408 = vmul.f32 %v1386, %v1406
    %1410 = vrot.lane.b32.xlu0 %v1408, 32
    %v1411 = vpop.permute.xlu0 %1410
    %1413 = vst.msk [vmem:[%s181] sm:$0x3] %vm60, %v1411
    %1415 = vrot.lane.b32.xlu0 %v1402, 96
    %v1416 = vpop.permute.xlu0 %1415
    %1418 = vst.msk [vmem:[%s183] sm:$0x3] %vm60, %v1416
    %s1419 = scalar_lea.vmem %s0, 12
    %v1420 = vld [vmem:[%s1419] sm:$0x3]
    %v1421 = vld [vmem:[%s7] sm:$0x3]
    %v1422 = vld [vmem:[%s8] sm:$0x3]
    %v1423 = vld [vmem:[%s1] sm:$0xf]
    %v1424 = vld [vmem:[#allocation2] sm:$0xff]
    %v1425 = vld [vmem:[#allocation2 + $0x8] sm:$0xff]
    %v1426 = vld [vmem:[#allocation2 + $0x10] sm:$0xff]
    %v1427 = vld [vmem:[#allocation2 + $0x18] sm:$0xff]
    %v1428 = vld [vmem:[%s5] sm:$0x1]
    %v1430 = vsel %vm74, %v1421, 0
    %1432 = vmatpush.msra.mxu0 0.0
    %1433 = vmatpush.msra.mxu0 0.0
    %1434 = vmatpush.msra.mxu0 0.0
    %1435 = vmatpush.msra.mxu0 0.0
    %1436 = vmatpush.msra.mxu0 0.0
    %1437 = vmatpush.msra.mxu0 0.0
    %1438 = vmatpush.msra.mxu0 0.0
    %1439 = vmatpush.msra.mxu0 0.0
    %1440 = vmatpush.msra.mxu0 0.0
    %1441 = vmatpush.msra.mxu0 0.0
    %1442 = vmatpush.msra.mxu0 0.0
    %1443 = vmatpush.msra.mxu0 0.0
    %1444 = vmatpush.msra.mxu0 %v1427
    %1445 = vmatpush.msra.mxu0 %v1426
    %1446 = vmatpush.msra.mxu0 %v1425
    %1447 = vmatpush.msra.mxu0 %v1424
    %1448 = vmatmul.f32.gmra.mxu0 %v1430
    %v1449 = vpop.f32.mrf.mxu0
    %v1450 = vadd.f32 0.0, %v1449
    %1451 = vdwg.mxu0
    %v1453 = vsel %vm98, %v1420, 0
    %v1456 = vsel %vm102, %v1423, 0
    %1458 = vmatpush.msra.mxu0 0.0
    %1459 = vmatpush.msra.mxu0 0.0
    %1460 = vmatpush.msra.mxu0 0.0
    %1461 = vmatpush.msra.mxu0 0.0
    %1462 = vmatpush.msra.mxu0 0.0
    %1463 = vmatpush.msra.mxu0 0.0
    %1464 = vmatpush.msra.mxu0 0.0
    %1465 = vmatpush.msra.mxu0 0.0
    %1466 = vmatpush.msra.mxu0 0.0
    %1467 = vmatpush.msra.mxu0 0.0
    %1468 = vmatpush.msra.mxu0 0.0
    %1469 = vmatpush.msra.mxu0 0.0
    %1470 = vmatpush.msra.mxu0 0.0
    %1471 = vmatpush.msra.mxu0 0.0
    %1472 = vmatpush.msra.mxu0 0.0
    %1473 = vmatpush.msra.mxu0 %v1456
    %1474 = vmatmul.f32.gmra.mxu0 %v1453
    %v1475 = vpop.f32.mrf.mxu0
    %v1476 = vadd.f32 %v1450, %v1475
    %1477 = vdwg.mxu0
    %v1479 = vperm.slane %v1428, 0
    %v1481 = vadd.f32 %v1476, %v1479
    %v1482 = vxor.u32 %v1481, 2147483648
    %v1483 = vmul.f32 %v1482, 1.442695
    %v1484 = vpow.pop %v1483
    %v1485 = vadd.f32 %v1484, 1.0
    %v1486 = vrcp.pop %v1485
    %v1487 = vmul.f32 %v1485, %v1486
    %v1488 = vsub.f32 1.0, %v1487
    %v1489 = vmul.f32 %v1486, %v1488
    %v1490 = vadd.f32 %v1486, %v1489
    %vm1491 = vweird.f32 %v1485
    %vm1492 = vweird.f32 %v1486
    %vm1493 = vmor %vm1491, %vm1492
    %v1494 = vsel %vm1493, %v1486, %v1490
    %v1495 = vand.u32 2147483647, %v1485
    %vm1496 = vcmp.eq.f32.partialorder %v1495, 8.507059e+37
    %v1497 = vand.u32 %v1485, 2147483648
    %v1498 = vor.u32 1.1754944e-38, %v1497
    %v1499 = vsel %vm1496, %v1498, %v1494
    %v1500 = vmul.f32 1.0, %v1499
    %v1501 = vtanh.pop %v1481
    %1503 = vrot.lane.b32.xlu0 %v1422, 32
    %v1504 = vpop.permute.xlu0 %1503
    %v1506 = vmul.f32 %v1500, %v1504
    %1508 = vrot.lane.b32.xlu0 %v1501, 64
    %v1509 = vpop.permute.xlu0 %1508
    %v1511 = vmul.f32 %v1500, %v1509
    %1513 = vrot.lane.b32.xlu0 %v1511, 32
    %v1514 = vpop.permute.xlu0 %1513
    %v1516 = vadd.f32 %v1506, %v1514
    %v1517 = vtanh.pop %v1516
    %1519 = vrot.lane.b32.xlu0 %v1517, 64
    %v1520 = vpop.permute.xlu0 %1519
    %v1522 = vmul.f32 %v1500, %v1520
    %1524 = vrot.lane.b32.xlu0 %v1522, 32
    %v1525 = vpop.permute.xlu0 %1524
    %1527 = vst.msk [vmem:[%s7] sm:$0x3] %vm60, %v1525
    %1529 = vrot.lane.b32.xlu0 %v1516, 96
    %v1530 = vpop.permute.xlu0 %1529
    %1532 = vst.msk [vmem:[%s8] sm:$0x3] %vm60, %v1530
    %v1533 = vld [vmem:[%s181] sm:$0x3]
    %v1534 = vld [vmem:[%s183] sm:$0x3]
    %v1535 = vld [vmem:[%s2] sm:$0xff]
    %v1536 = vld [vmem:[%s2 + $0x8] sm:$0xff]
    %v1537 = vld [vmem:[%s2 + $0x10] sm:$0xff]
    %v1538 = vld [vmem:[%s2 + $0x18] sm:$0xff]
    %v1539 = vld [vmem:[#allocation4] sm:$0xff]
    %v1540 = vld [vmem:[#allocation4 + $0x8] sm:$0xff]
    %v1541 = vld [vmem:[#allocation4 + $0x10] sm:$0xff]
    %v1542 = vld [vmem:[#allocation4 + $0x18] sm:$0xff]
    %v1543 = vld [vmem:[%s6] sm:$0x1]
    %v1545 = vsel %vm74, %v1533, 0
    %1547 = vmatpush.msra.mxu0 0.0
    %1548 = vmatpush.msra.mxu0 0.0
    %1549 = vmatpush.msra.mxu0 0.0
    %1550 = vmatpush.msra.mxu0 0.0
    %1551 = vmatpush.msra.mxu0 0.0
    %1552 = vmatpush.msra.mxu0 0.0
    %1553 = vmatpush.msra.mxu0 0.0
    %1554 = vmatpush.msra.mxu0 0.0
    %1555 = vmatpush.msra.mxu0 0.0
    %1556 = vmatpush.msra.mxu0 0.0
    %1557 = vmatpush.msra.mxu0 0.0
    %1558 = vmatpush.msra.mxu0 0.0
    %1559 = vmatpush.msra.mxu0 %v1542
    %1560 = vmatpush.msra.mxu0 %v1541
    %1561 = vmatpush.msra.mxu0 %v1540
    %1562 = vmatpush.msra.mxu0 %v1539
    %1563 = vmatmul.f32.gmra.mxu0 %v1545
    %v1564 = vpop.f32.mrf.mxu0
    %v1565 = vadd.f32 0.0, %v1564
    %1566 = vdwg.mxu0
    %v1567 = vsel %vm74, %v1525, 0
    %1569 = vmatpush.msra.mxu0 0.0
    %1570 = vmatpush.msra.mxu0 0.0
    %1571 = vmatpush.msra.mxu0 0.0
    %1572 = vmatpush.msra.mxu0 0.0
    %1573 = vmatpush.msra.mxu0 0.0
    %1574 = vmatpush.msra.mxu0 0.0
    %1575 = vmatpush.msra.mxu0 0.0
    %1576 = vmatpush.msra.mxu0 0.0
    %1577 = vmatpush.msra.mxu0 0.0
    %1578 = vmatpush.msra.mxu0 0.0
    %1579 = vmatpush.msra.mxu0 0.0
    %1580 = vmatpush.msra.mxu0 0.0
    %1581 = vmatpush.msra.mxu0 %v1538
    %1582 = vmatpush.msra.mxu0 %v1537
    %1583 = vmatpush.msra.mxu0 %v1536
    %1584 = vmatpush.msra.mxu0 %v1535
    %1585 = vmatmul.f32.gmra.mxu0 %v1567
    %v1586 = vpop.f32.mrf.mxu0
    %v1587 = vadd.f32 %v1565, %v1586
    %1588 = vdwg.mxu0
    %v1590 = vperm.slane %v1543, 0
    %v1592 = vadd.f32 %v1587, %v1590
    %v1593 = vxor.u32 %v1592, 2147483648
    %v1594 = vmul.f32 %v1593, 1.442695
    %v1595 = vpow.pop %v1594
    %v1596 = vadd.f32 %v1595, 1.0
    %v1597 = vrcp.pop %v1596
    %v1598 = vmul.f32 %v1596, %v1597
    %v1599 = vsub.f32 1.0, %v1598
    %v1600 = vmul.f32 %v1597, %v1599
    %v1601 = vadd.f32 %v1597, %v1600
    %vm1602 = vweird.f32 %v1596
    %vm1603 = vweird.f32 %v1597
    %vm1604 = vmor %vm1602, %vm1603
    %v1605 = vsel %vm1604, %v1597, %v1601
    %v1606 = vand.u32 2147483647, %v1596
    %vm1607 = vcmp.eq.f32.partialorder %v1606, 8.507059e+37
    %v1608 = vand.u32 %v1596, 2147483648
    %v1609 = vor.u32 1.1754944e-38, %v1608
    %v1610 = vsel %vm1607, %v1609, %v1605
    %v1611 = vmul.f32 1.0, %v1610
    %v1612 = vtanh.pop %v1592
    %1614 = vrot.lane.b32.xlu0 %v1534, 32
    %v1615 = vpop.permute.xlu0 %1614
    %v1617 = vmul.f32 %v1611, %v1615
    %1619 = vrot.lane.b32.xlu0 %v1612, 64
    %v1620 = vpop.permute.xlu0 %1619
    %v1622 = vmul.f32 %v1611, %v1620
    %1624 = vrot.lane.b32.xlu0 %v1622, 32
    %v1625 = vpop.permute.xlu0 %1624
    %v1627 = vadd.f32 %v1617, %v1625
    %v1628 = vtanh.pop %v1627
    %1630 = vrot.lane.b32.xlu0 %v1628, 64
    %v1631 = vpop.permute.xlu0 %1630
    %v1633 = vmul.f32 %v1611, %v1631
    %1635 = vrot.lane.b32.xlu0 %v1633, 32
    %v1636 = vpop.permute.xlu0 %1635
    %1638 = vst.msk [vmem:[%s181] sm:$0x3] %vm60, %v1636
    %1640 = vrot.lane.b32.xlu0 %v1627, 96
    %v1641 = vpop.permute.xlu0 %1640
    %1643 = vst.msk [vmem:[%s183] sm:$0x3] %vm60, %v1641
    %s1644 = scalar_lea.vmem %s0, 14
    %v1645 = vld [vmem:[%s1644] sm:$0x3]
    %v1646 = vld [vmem:[%s7] sm:$0x3]
    %v1647 = vld [vmem:[%s8] sm:$0x3]
    %v1648 = vld [vmem:[%s1] sm:$0xf]
    %v1649 = vld [vmem:[#allocation2] sm:$0xff]
    %v1650 = vld [vmem:[#allocation2 + $0x8] sm:$0xff]
    %v1651 = vld [vmem:[#allocation2 + $0x10] sm:$0xff]
    %v1652 = vld [vmem:[#allocation2 + $0x18] sm:$0xff]
    %v1653 = vld [vmem:[%s5] sm:$0x1]
    %v1655 = vsel %vm74, %v1646, 0
    %1657 = vmatpush.msra.mxu0 0.0
    %1658 = vmatpush.msra.mxu0 0.0
    %1659 = vmatpush.msra.mxu0 0.0
    %1660 = vmatpush.msra.mxu0 0.0
    %1661 = vmatpush.msra.mxu0 0.0
    %1662 = vmatpush.msra.mxu0 0.0
    %1663 = vmatpush.msra.mxu0 0.0
    %1664 = vmatpush.msra.mxu0 0.0
    %1665 = vmatpush.msra.mxu0 0.0
    %1666 = vmatpush.msra.mxu0 0.0
    %1667 = vmatpush.msra.mxu0 0.0
    %1668 = vmatpush.msra.mxu0 0.0
    %1669 = vmatpush.msra.mxu0 %v1652
    %1670 = vmatpush.msra.mxu0 %v1651
    %1671 = vmatpush.msra.mxu0 %v1650
    %1672 = vmatpush.msra.mxu0 %v1649
    %1673 = vmatmul.f32.gmra.mxu0 %v1655
    %v1674 = vpop.f32.mrf.mxu0
    %v1675 = vadd.f32 0.0, %v1674
    %1676 = vdwg.mxu0
    %v1678 = vsel %vm98, %v1645, 0
    %v1681 = vsel %vm102, %v1648, 0
    %1683 = vmatpush.msra.mxu0 0.0
    %1684 = vmatpush.msra.mxu0 0.0
    %1685 = vmatpush.msra.mxu0 0.0
    %1686 = vmatpush.msra.mxu0 0.0
    %1687 = vmatpush.msra.mxu0 0.0
    %1688 = vmatpush.msra.mxu0 0.0
    %1689 = vmatpush.msra.mxu0 0.0
    %1690 = vmatpush.msra.mxu0 0.0
    %1691 = vmatpush.msra.mxu0 0.0
    %1692 = vmatpush.msra.mxu0 0.0
    %1693 = vmatpush.msra.mxu0 0.0
    %1694 = vmatpush.msra.mxu0 0.0
    %1695 = vmatpush.msra.mxu0 0.0
    %1696 = vmatpush.msra.mxu0 0.0
    %1697 = vmatpush.msra.mxu0 0.0
    %1698 = vmatpush.msra.mxu0 %v1681
    %1699 = vmatmul.f32.gmra.mxu0 %v1678
    %v1700 = vpop.f32.mrf.mxu0
    %v1701 = vadd.f32 %v1675, %v1700
    %1702 = vdwg.mxu0
    %v1704 = vperm.slane %v1653, 0
    %v1706 = vadd.f32 %v1701, %v1704
    %v1707 = vxor.u32 %v1706, 2147483648
    %v1708 = vmul.f32 %v1707, 1.442695
    %v1709 = vpow.pop %v1708
    %v1710 = vadd.f32 %v1709, 1.0
    %v1711 = vrcp.pop %v1710
    %v1712 = vmul.f32 %v1710, %v1711
    %v1713 = vsub.f32 1.0, %v1712
    %v1714 = vmul.f32 %v1711, %v1713
    %v1715 = vadd.f32 %v1711, %v1714
    %vm1716 = vweird.f32 %v1710
    %vm1717 = vweird.f32 %v1711
    %vm1718 = vmor %vm1716, %vm1717
    %v1719 = vsel %vm1718, %v1711, %v1715
    %v1720 = vand.u32 2147483647, %v1710
    %vm1721 = vcmp.eq.f32.partialorder %v1720, 8.507059e+37
    %v1722 = vand.u32 %v1710, 2147483648
    %v1723 = vor.u32 1.1754944e-38, %v1722
    %v1724 = vsel %vm1721, %v1723, %v1719
    %v1725 = vmul.f32 1.0, %v1724
    %v1726 = vtanh.pop %v1706
    %1728 = vrot.lane.b32.xlu0 %v1647, 32
    %v1729 = vpop.permute.xlu0 %1728
    %v1731 = vmul.f32 %v1725, %v1729
    %1733 = vrot.lane.b32.xlu0 %v1726, 64
    %v1734 = vpop.permute.xlu0 %1733
    %v1736 = vmul.f32 %v1725, %v1734
    %1738 = vrot.lane.b32.xlu0 %v1736, 32
    %v1739 = vpop.permute.xlu0 %1738
    %v1741 = vadd.f32 %v1731, %v1739
    %v1742 = vtanh.pop %v1741
    %1744 = vrot.lane.b32.xlu0 %v1742, 64
    %v1745 = vpop.permute.xlu0 %1744
    %v1747 = vmul.f32 %v1725, %v1745
    %1749 = vrot.lane.b32.xlu0 %v1747, 32
    %v1750 = vpop.permute.xlu0 %1749
    %1752 = vst.msk [vmem:[%s7] sm:$0x3] %vm60, %v1750
    %1754 = vrot.lane.b32.xlu0 %v1741, 96
    %v1755 = vpop.permute.xlu0 %1754
    %1757 = vst.msk [vmem:[%s8] sm:$0x3] %vm60, %v1755
    %v1758 = vld [vmem:[%s181] sm:$0x3]
    %v1759 = vld [vmem:[%s183] sm:$0x3]
    %v1760 = vld [vmem:[%s2] sm:$0xff]
    %v1761 = vld [vmem:[%s2 + $0x8] sm:$0xff]
    %v1762 = vld [vmem:[%s2 + $0x10] sm:$0xff]
    %v1763 = vld [vmem:[%s2 + $0x18] sm:$0xff]
    %v1764 = vld [vmem:[#allocation4] sm:$0xff]
    %v1765 = vld [vmem:[#allocation4 + $0x8] sm:$0xff]
    %v1766 = vld [vmem:[#allocation4 + $0x10] sm:$0xff]
    %v1767 = vld [vmem:[#allocation4 + $0x18] sm:$0xff]
    %v1768 = vld [vmem:[%s6] sm:$0x1]
    %v1770 = vsel %vm74, %v1758, 0
    %1772 = vmatpush.msra.mxu0 0.0
    %1773 = vmatpush.msra.mxu0 0.0
    %1774 = vmatpush.msra.mxu0 0.0
    %1775 = vmatpush.msra.mxu0 0.0
    %1776 = vmatpush.msra.mxu0 0.0
    %1777 = vmatpush.msra.mxu0 0.0
    %1778 = vmatpush.msra.mxu0 0.0
    %1779 = vmatpush.msra.mxu0 0.0
    %1780 = vmatpush.msra.mxu0 0.0
    %1781 = vmatpush.msra.mxu0 0.0
    %1782 = vmatpush.msra.mxu0 0.0
    %1783 = vmatpush.msra.mxu0 0.0
    %1784 = vmatpush.msra.mxu0 %v1767
    %1785 = vmatpush.msra.mxu0 %v1766
    %1786 = vmatpush.msra.mxu0 %v1765
    %1787 = vmatpush.msra.mxu0 %v1764
    %1788 = vmatmul.f32.gmra.mxu0 %v1770
    %v1789 = vpop.f32.mrf.mxu0
    %v1790 = vadd.f32 0.0, %v1789
    %1791 = vdwg.mxu0
    %v1792 = vsel %vm74, %v1750, 0
    %1794 = vmatpush.msra.mxu0 0.0
    %1795 = vmatpush.msra.mxu0 0.0
    %1796 = vmatpush.msra.mxu0 0.0
    %1797 = vmatpush.msra.mxu0 0.0
    %1798 = vmatpush.msra.mxu0 0.0
    %1799 = vmatpush.msra.mxu0 0.0
    %1800 = vmatpush.msra.mxu0 0.0
    %1801 = vmatpush.msra.mxu0 0.0
    %1802 = vmatpush.msra.mxu0 0.0
    %1803 = vmatpush.msra.mxu0 0.0
    %1804 = vmatpush.msra.mxu0 0.0
    %1805 = vmatpush.msra.mxu0 0.0
    %1806 = vmatpush.msra.mxu0 %v1763
    %1807 = vmatpush.msra.mxu0 %v1762
    %1808 = vmatpush.msra.mxu0 %v1761
    %1809 = vmatpush.msra.mxu0 %v1760
    %1810 = vmatmul.f32.gmra.mxu0 %v1792
    %v1811 = vpop.f32.mrf.mxu0
    %v1812 = vadd.f32 %v1790, %v1811
    %1813 = vdwg.mxu0
    %v1815 = vperm.slane %v1768, 0
    %v1817 = vadd.f32 %v1812, %v1815
    %v1818 = vxor.u32 %v1817, 2147483648
    %v1819 = vmul.f32 %v1818, 1.442695
    %v1820 = vpow.pop %v1819
    %v1821 = vadd.f32 %v1820, 1.0
    %v1822 = vrcp.pop %v1821
    %v1823 = vmul.f32 %v1821, %v1822
    %v1824 = vsub.f32 1.0, %v1823
    %v1825 = vmul.f32 %v1822, %v1824
    %v1826 = vadd.f32 %v1822, %v1825
    %vm1827 = vweird.f32 %v1821
    %vm1828 = vweird.f32 %v1822
    %vm1829 = vmor %vm1827, %vm1828
    %v1830 = vsel %vm1829, %v1822, %v1826
    %v1831 = vand.u32 2147483647, %v1821
    %vm1832 = vcmp.eq.f32.partialorder %v1831, 8.507059e+37
    %v1833 = vand.u32 %v1821, 2147483648
    %v1834 = vor.u32 1.1754944e-38, %v1833
    %v1835 = vsel %vm1832, %v1834, %v1830
    %v1836 = vmul.f32 1.0, %v1835
    %v1837 = vtanh.pop %v1817
    %1839 = vrot.lane.b32.xlu0 %v1759, 32
    %v1840 = vpop.permute.xlu0 %1839
    %v1842 = vmul.f32 %v1836, %v1840
    %1844 = vrot.lane.b32.xlu0 %v1837, 64
    %v1845 = vpop.permute.xlu0 %1844
    %v1847 = vmul.f32 %v1836, %v1845
    %1849 = vrot.lane.b32.xlu0 %v1847, 32
    %v1850 = vpop.permute.xlu0 %1849
    %v1852 = vadd.f32 %v1842, %v1850
    %v1853 = vtanh.pop %v1852
    %1855 = vrot.lane.b32.xlu0 %v1853, 64
    %v1856 = vpop.permute.xlu0 %1855
    %v1858 = vmul.f32 %v1836, %v1856
    %1860 = vrot.lane.b32.xlu0 %v1858, 32
    %v1861 = vpop.permute.xlu0 %1860
    %1863 = vst.msk [vmem:[%s181] sm:$0x3] %vm60, %v1861
    %1865 = vrot.lane.b32.xlu0 %v1852, 96
    %v1866 = vpop.permute.xlu0 %1865
    %1868 = vst.msk [vmem:[%s183] sm:$0x3] %vm60, %v1866
    // Predicated region
    $region38: #{desc_seq2seq_forward.2} parent=1 // pred_check
      _
    $region39: #{desc_seq2seq_forward.2} parent=1 // pred_check_branch
      %1870 = sbr.rel (0) target = $region41
    $region40: #{desc_seq2seq_forward.2} parent=1 // pred_region
      _
    $region41: #{desc_seq2seq_forward.2} parent=1 // pred_fallthru
      _
    // Predicated region
    $region42: #{desc_seq2seq_forward.2} parent=1 // pred_check
      _
    $region43: #{desc_seq2seq_forward.2} parent=1 // pred_check_branch
      %1872 = sbr.rel (0) target = $region45
    $region44: #{desc_seq2seq_forward.2} parent=1 // pred_region
      _
    $region45: #{desc_seq2seq_forward.2} parent=1 // pred_fallthru
      _
    // Predicated region
    $region46: #{desc_seq2seq_forward.2} parent=1 // pred_check
      _
    $region47: #{desc_seq2seq_forward.2} parent=1 // pred_check_branch
      %1874 = sbr.rel (0) target = $region49
    $region48: #{desc_seq2seq_forward.2} parent=1 // pred_region
      _
    $region49: #{desc_seq2seq_forward.2} parent=1 // pred_fallthru
      _
    // Predicated region
    $region50: #{desc_seq2seq_forward.2} parent=1 // pred_check
      _
    $region51: #{desc_seq2seq_forward.2} parent=1 // pred_check_branch
      %1876 = sbr.rel (0) target = $region53
    $region52: #{desc_seq2seq_forward.2} parent=1 // pred_region
      _
    $region53: #{desc_seq2seq_forward.2} parent=1 // pred_fallthru
      _
    %1877 = vsyncpa [#allocation3], 1
    %1878 = vsyncpa [#allocation5], 1

</llo_original>
